<compile_context>
chip_gen: v7x
topology: tpu7x:2x2x1
jax: 0.10.0
libtpu: 0.0.40
codegen_flags: <defaults>
</compile_context>

<pallas_src>
import jax
import jax.numpy as jnp
from jax.experimental import pallas as pl
from jax.experimental.pallas import tpu as pltpu


def _mlp_critic_kernel(obs_ref, w1_ref, b1_ref, w2_ref, b2_ref, w3_ref, b3_ref,
                       out_ref):
    x = obs_ref[...]                                          # (bt, obs_dim)
    h1 = jnp.tanh(
        jnp.dot(x, w1_ref[...], preferred_element_type=jnp.float32)
        + b1_ref[...])                                        # (bt, h1)
    h2 = jnp.tanh(
        jnp.dot(h1, w2_ref[...], preferred_element_type=jnp.float32)
        + b2_ref[...])                                        # (bt, h2)
    # Final projection has N=1: an MXU matmul would waste >99% of its columns,
    # so do it on the VPU (multiply) + XLU (lane reduction) instead.
    v = jnp.sum(h2 * w3_ref[...], axis=-1)                    # (bt,)
    # Lane-dense store: output block is (1, bt), bt % 128 == 0 -> unmasked vst.
    # b3 is a scalar read off the SMEM path (free on the scalar slots).
    out_ref[...] = (v[None, :] + b3_ref[0]).astype(out_ref.dtype)


def _tensorcores_per_chip():
    """Best-effort TensorCore-per-device count (megacore detection)."""
    try:
        kind = jax.devices()[0].device_kind.lower()
    except Exception:
        return 1
    # Single-TC per JAX device: v2/v3 (per-core devices), v5e ("v5 lite"), v6e.
    if "lite" in kind or "v5e" in kind or "v6e" in kind:
        return 1
    # Megacore chips (2 TensorCores per JAX device): v4, v5p, v7x.
    for tag in ("v4", "v5p", "v7"):
        if tag in kind:
            return 2
    return 1


def mlp_critic_forward(obs, params, *, batch_tile=2048):
    """obs: [B, obs_dim] float32. Returns value estimates of shape [B]."""
    (w1, b1), (w2, b2), (w3, b3) = params
    B, obs_dim = obs.shape
    d_h1 = w1.shape[1]
    d_h2 = w2.shape[1]

    # ---- Generation-aware tile choice ------------------------------------
    # bt must be a multiple of 128 (lane-dense output blocks).  Single-TC
    # chips get one fat tile (up to the cap); megacore chips get the batch
    # split across >= n_tc balanced tiles.
    n_tc = _tensorcores_per_chip()
    bt_cap = max(128, (int(batch_tile) // 128) * 128)
    bt = min(bt_cap, max(128, 128 * pl.cdiv(pl.cdiv(B, n_tc), 128)))
    grid_b = pl.cdiv(B, bt)
    if n_tc > 1 and grid_b > 1 and grid_b % 2 == 1:
        # Odd grid leaves one TC idle on the tail tile; try one rebalance to
        # an even step count (only if it actually lands even).
        bt_even = max(128, 128 * pl.cdiv(pl.cdiv(B, grid_b + 1), 128))
        if pl.cdiv(B, bt_even) % 2 == 0:
            bt = bt_even
            grid_b = pl.cdiv(B, bt)

    # No jnp.pad: the last obs block may be partial; out-of-bounds rows read
    # unspecified values, which tanh bounds and the final [:B] slice drops.
    w3_row = w3.reshape(1, d_h2)   # [h2, 1] -> [1, h2] for the VPU/XLU layer
    b3_s = b3.reshape(1)           # scalar bias, passed via SMEM

    rep = lambda i: (0, 0)         # weights/biases: constant block -> no re-DMA

    # Advisory cost hint (bytes reflect the 128-lane-padded tiled layout).
    rows = grid_b * bt
    flops = 2 * rows * (obs_dim * d_h1 + d_h1 * d_h2 + d_h2)
    transcendentals = rows * (d_h1 + d_h2)
    bytes_accessed = 4 * (
        rows * 128 * pl.cdiv(obs_dim, 128)     # obs tiles (minor dim lane-padded)
        + rows                                 # lane-dense (grid_b, bt) output
        + obs_dim * d_h1 + d_h1                # w1, b1 (resident)
        + d_h1 * d_h2 + d_h2                   # w2, b2
        + d_h2 + 1)                            # w3 row, b3

    out = pl.pallas_call(
        _mlp_critic_kernel,
        out_shape=jax.ShapeDtypeStruct((grid_b, bt), jnp.float32),
        grid_spec=pltpu.PrefetchScalarGridSpec(
            num_scalar_prefetch=0,
            grid=(grid_b,),
            in_specs=[
                pl.BlockSpec((bt, obs_dim), lambda i: (i, 0)),   # obs tile
                pl.BlockSpec((obs_dim, d_h1), rep),              # w1
                pl.BlockSpec((1, d_h1), rep),                    # b1
                pl.BlockSpec((d_h1, d_h2), rep),                 # w2
                pl.BlockSpec((1, d_h2), rep),                    # b2
                pl.BlockSpec((1, d_h2), rep),                    # w3 (row)
                pl.BlockSpec(memory_space=pltpu.MemorySpace.SMEM),  # b3 scalar
            ],
            out_specs=pl.BlockSpec((1, bt), lambda i: (i, 0)),   # lane-dense
        ),
        compiler_params=pltpu.CompilerParams(
            dimension_semantics=("parallel",)),
        cost_estimate=pl.CostEstimate(
            flops=flops,
            transcendentals=transcendentals,
            bytes_accessed=bytes_accessed),
    )(obs, w1, b1, w2, b2, w3_row, b3_s)

    # (num_tiles, bt) lane-dense tiles -> [B]; drops the tail-tile garbage.
    # Matches torch.squeeze(v_net(obs), -1).
    return out.reshape(-1)[:B]


def init_params(key, obs_dim, hidden_sizes):
    """Deterministic init of Linear layers (stored as [in, out] + [1, out])."""
    sizes = [obs_dim] + list(hidden_sizes) + [1]
    params = []
    for j in range(len(sizes) - 1):
        key, kw, kb = jax.random.split(key, 3)
        fan_in = sizes[j]
        bound = 1.0 / jnp.sqrt(fan_in)  # nn.Linear default uniform init range
        w = jax.random.uniform(kw, (sizes[j], sizes[j + 1]),
                               minval=-bound, maxval=bound, dtype=jnp.float32)
        b = jax.random.uniform(kb, (1, sizes[j + 1]),
                               minval=-bound, maxval=bound, dtype=jnp.float32)
        params.append((w, b))
    return params


def mlp_critic_ref(obs, params):
    """Pure-JAX reference of the PyTorch forward (activation = Tanh)."""
    (w1, b1), (w2, b2), (w3, b3) = params
    h = jnp.tanh(obs @ w1 + b1)
    h = jnp.tanh(h @ w2 + b2)
    v = h @ w3 + b3
    return jnp.squeeze(v, -1)


if __name__ == "__main__":
    key = jax.random.PRNGKey(0)

    # PPO-style shapes: obs_dim=32, hidden_sizes=(64, 64), activation=Tanh
    obs_dim = 32
    hidden_sizes = (64, 64)

    k_obs, k_params = jax.random.split(key)
    params = init_params(k_params, obs_dim, hidden_sizes)

    # Ragged batch, single (or two, on megacore) grid step(s): exercises the
    # partial edge-block path with no wrapper-side padding.
    B = 300
    obs = jax.random.normal(k_obs, (B, obs_dim), dtype=jnp.float32)
    v_kernel = jax.block_until_ready(mlp_critic_forward(obs, params))
    v_ref = mlp_critic_ref(obs, params)
    assert v_kernel.shape == (B,)
    assert jnp.allclose(v_kernel, v_ref, atol=1e-5, rtol=1e-5)

    # Edge case: tiny batch (much smaller than one tile).
    obs_small = obs[:8]
    v_small = jax.block_until_ready(mlp_critic_forward(obs_small, params))
    v_small_ref = mlp_critic_ref(obs_small, params)
    assert v_small.shape == (8,)
    assert jnp.allclose(v_small, v_small_ref, atol=1e-5, rtol=1e-5)

    # Multi-step grid with a partial tail tile (small batch_tile to keep it
    # cheap): exercises grid_b >= 2 plus garbage-row slicing.
    k_obs2, _ = jax.random.split(k_obs)
    B2 = 2500
    obs_big = jax.random.normal(k_obs2, (B2, obs_dim), dtype=jnp.float32)
    v_big = jax.block_until_ready(
        mlp_critic_forward(obs_big, params, batch_tile=1024))
    v_big_ref = mlp_critic_ref(obs_big, params)
    assert v_big.shape == (B2,)
    assert jnp.allclose(v_big, v_big_ref, atol=1e-5, rtol=1e-5)

    print("KERNEL_OK")
</pallas_src>

<mosaic_0001>
module attributes {stable_mosaic.version = 11 : i64} {
  func.func @_mlp_critic_kernel(%arg0: i32, %arg1: memref<384x32xf32, #tpu.memory_space<vmem>>, %arg2: memref<32x64xf32, #tpu.memory_space<vmem>>, %arg3: memref<1x64xf32, #tpu.memory_space<vmem>>, %arg4: memref<64x64xf32, #tpu.memory_space<vmem>>, %arg5: memref<1x64xf32, #tpu.memory_space<vmem>>, %arg6: memref<1x64xf32, #tpu.memory_space<vmem>>, %arg7: memref<1xf32, #tpu.memory_space<smem>>, %arg8: memref<1x384xf32, #tpu.memory_space<vmem>>) attributes {dimension_semantics = [#tpu.dimension_semantics<parallel>], iteration_bounds = array<i64: 1>, scalar_prefetch = 0 : i64, scratch_operands = 0 : i64, tpu.core_type = #tpu.core_type<tc>, window_params = [{transform_indices = @transform_0, window_bounds = array<i64: 384, 32>}, {pipeline_mode = #tpu.pipeline_mode<synchronous>, transform_indices = @transform_1, window_bounds = array<i64: 32, 64>}, {pipeline_mode = #tpu.pipeline_mode<synchronous>, transform_indices = @transform_2, window_bounds = array<i64: 1, 64>}, {pipeline_mode = #tpu.pipeline_mode<synchronous>, transform_indices = @transform_3, window_bounds = array<i64: 64, 64>}, {pipeline_mode = #tpu.pipeline_mode<synchronous>, transform_indices = @transform_4, window_bounds = array<i64: 1, 64>}, {pipeline_mode = #tpu.pipeline_mode<synchronous>, transform_indices = @transform_5, window_bounds = array<i64: 1, 64>}, {transform_indices = @transform_6, window_bounds = array<i64: 1>}, {transform_indices = @transform_7, window_bounds = array<i64: 1, 384>}]} {
    %c0 = arith.constant 0 : index
    %c0_0 = arith.constant 0 : index
    %0 = vector.load %arg1[%c0, %c0_0] : memref<384x32xf32, #tpu.memory_space<vmem>>, vector<384x32xf32>
    %c0_1 = arith.constant 0 : index
    %c0_2 = arith.constant 0 : index
    %1 = vector.load %arg2[%c0_1, %c0_2] : memref<32x64xf32, #tpu.memory_space<vmem>>, vector<32x64xf32>
    %cst = arith.constant dense<0.000000e+00> : vector<384x64xf32>
    %2 = tpu.matmul %0, %1, %cst {dimension_numbers = #tpu.dot_dimension_numbers<[1], [0], [0], [1], [0, 0, 1, 1], [], []>} : vector<384x32xf32>, vector<32x64xf32>, vector<384x64xf32> -> vector<384x64xf32>
    %c0_3 = arith.constant 0 : index
    %c0_4 = arith.constant 0 : index
    %3 = vector.load %arg3[%c0_3, %c0_4] : memref<1x64xf32, #tpu.memory_space<vmem>>, vector<1x64xf32>
    %4 = vector.broadcast %3 : vector<1x64xf32> to vector<384x64xf32>
    %5 = arith.addf %2, %4 : vector<384x64xf32>
    %6 = math.tanh %5 : vector<384x64xf32>
    %c0_5 = arith.constant 0 : index
    %c0_6 = arith.constant 0 : index
    %7 = vector.load %arg4[%c0_5, %c0_6] : memref<64x64xf32, #tpu.memory_space<vmem>>, vector<64x64xf32>
    %cst_7 = arith.constant dense<0.000000e+00> : vector<384x64xf32>
    %8 = tpu.matmul %6, %7, %cst_7 {dimension_numbers = #tpu.dot_dimension_numbers<[1], [0], [0], [1], [0, 0, 1, 1], [], []>} : vector<384x64xf32>, vector<64x64xf32>, vector<384x64xf32> -> vector<384x64xf32>
    %c0_8 = arith.constant 0 : index
    %c0_9 = arith.constant 0 : index
    %9 = vector.load %arg5[%c0_8, %c0_9] : memref<1x64xf32, #tpu.memory_space<vmem>>, vector<1x64xf32>
    %10 = vector.broadcast %9 : vector<1x64xf32> to vector<384x64xf32>
    %11 = arith.addf %8, %10 : vector<384x64xf32>
    %12 = math.tanh %11 : vector<384x64xf32>
    %c0_10 = arith.constant 0 : index
    %c0_11 = arith.constant 0 : index
    %13 = vector.load %arg6[%c0_10, %c0_11] : memref<1x64xf32, #tpu.memory_space<vmem>>, vector<1x64xf32>
    %14 = vector.broadcast %13 : vector<1x64xf32> to vector<384x64xf32>
    %15 = arith.mulf %12, %14 : vector<384x64xf32>
    %cst_12 = arith.constant dense<0.000000e+00> : vector<384xf32>
    %16 = vector.multi_reduction <add>, %15, %cst_12 [1] : vector<384x64xf32> to vector<384xf32>
    %17 = vector.shape_cast %16 : vector<384xf32> to vector<1x384xf32>
    %c0_13 = arith.constant 0 : index
    %18 = memref.load %arg7[%c0_13] : memref<1xf32, #tpu.memory_space<smem>>
    %19 = vector.broadcast %18 : f32 to vector<1x384xf32>
    %20 = arith.addf %17, %19 : vector<1x384xf32>
    %c0_14 = arith.constant 0 : index
    %c0_15 = arith.constant 0 : index
    %21 = vector.load %arg8[%c0_14, %c0_15] : memref<1x384xf32, #tpu.memory_space<vmem>>, vector<1x384xf32>
    tpu.vector_store %arg8[%c0_14, %c0_15], %20 {strides = array<i32>} : memref<1x384xf32, #tpu.memory_space<vmem>>, vector<1x384xf32>,
    return
  }
  func.func @transform_0(%arg0: i32) -> (i32, i32) {
    %c0_i32 = arith.constant 0 : i32
    %c0_i32_0 = arith.constant 0 : i32
    return %arg0, %c0_i32 : i32, i32
  }
  func.func @transform_1(%arg0: i32) -> (i32, i32) {
    %c0_i32 = arith.constant 0 : i32
    %c0_i32_0 = arith.constant 0 : i32
    %c0_i32_1 = arith.constant 0 : i32
    return %c0_i32, %c0_i32_0 : i32, i32
  }
  func.func @transform_2(%arg0: i32) -> (i32, i32) {
    %c0_i32 = arith.constant 0 : i32
    %c0_i32_0 = arith.constant 0 : i32
    %c0_i32_1 = arith.constant 0 : i32
    return %c0_i32, %c0_i32_0 : i32, i32
  }
  func.func @transform_3(%arg0: i32) -> (i32, i32) {
    %c0_i32 = arith.constant 0 : i32
    %c0_i32_0 = arith.constant 0 : i32
    %c0_i32_1 = arith.constant 0 : i32
    return %c0_i32, %c0_i32_0 : i32, i32
  }
  func.func @transform_4(%arg0: i32) -> (i32, i32) {
    %c0_i32 = arith.constant 0 : i32
    %c0_i32_0 = arith.constant 0 : i32
    %c0_i32_1 = arith.constant 0 : i32
    return %c0_i32, %c0_i32_0 : i32, i32
  }
  func.func @transform_5(%arg0: i32) -> (i32, i32) {
    %c0_i32 = arith.constant 0 : i32
    %c0_i32_0 = arith.constant 0 : i32
    %c0_i32_1 = arith.constant 0 : i32
    return %c0_i32, %c0_i32_0 : i32, i32
  }
  func.func @transform_6(%arg0: i32) -> i32 {
    %c0_i32 = arith.constant 0 : i32
    %c0_i32_0 = arith.constant 0 : i32
    return %c0_i32 : i32
  }
  func.func @transform_7(%arg0: i32) -> (i32, i32) {
    %c0_i32 = arith.constant 0 : i32
    %c0_i32_0 = arith.constant 0 : i32
    return %arg0, %c0_i32 : i32, i32
  }
}

</mosaic_0001>

<llo_original>
// kernel: tpu_custom_call.1
$region0: #{tpu_custom_call.1}
  #allocation0 [shape = 'u32[]', space=smem, size = 0x4, offset = 0x4, fixed_abs, tag = 'smem constant byte address 0x4 - core index']
  #allocation1 [shape = 'u32[144,128]{1,0:T(1,128)}', space=vmem, size = 0x12000, scoped, tag = 'internal scratch']
  #allocation2 [shape = 'f32[1]{0:T(128)S(6)}', space=smem, size = 0x200, scoped, tag = 'scoped memory for tpu_custom_call.1']
  %s0 = inlined_call_operand.vmem [shape: f32[300,32], index: 0, kind: input, shape index: {}]
  %s1 = inlined_call_operand.vmem [shape: f32[32,64], index: 1, kind: input, shape index: {}]
  %s2 = inlined_call_operand.vmem [shape: f32[1,64], index: 2, kind: input, shape index: {}]
  %s3 = inlined_call_operand.vmem [shape: f32[64,64], index: 3, kind: input, shape index: {}]
  %s4 = inlined_call_operand.vmem [shape: f32[1,64], index: 4, kind: input, shape index: {}]
  %s5 = inlined_call_operand.vmem [shape: f32[1,64], index: 5, kind: input, shape index: {}]
  %s6 = inlined_call_operand.<no memory space> [shape: f32[1], index: 6, kind: input, shape index: {}]
  %s7 = inlined_call_operand.hbm [shape: f32[1,384], index: 7, kind: output, shape index: {}]
  %s8 = sld [smem:[#allocation0]]
  $region38: #{tpu_custom_call.1} parent=0
    _
  %s10 = ssub.s32 1, %s8
  %s11 = scalar_select 0, %s10, %s8
  %12 = sst [smem:[#allocation2]] %s6
  $region1: #{tpu_custom_call.1} parent=0
    #allocation3 [shape = 'u8[1536]{0}', space=vmem, size = 0x800, scoped, tag = 'output window, operand 0, single buffered']
    #allocation4 [shape = 's32[1]{0}', space=sflag, size = 0x4, scoped, tag = 'scoped memory for tpu_custom_call.1']
    %13 = vsyncpa [#allocation4], 0
    // Predicated region
    $region2: #{tpu_custom_call.1} parent=1 // pred_check
      _
    $region3: #{tpu_custom_call.1} parent=1 // pred_check_branch
      %15 = sbr.rel (0) target = $region5
    $region4: #{tpu_custom_call.1} parent=1 // pred_region
      _
    $region5: #{tpu_custom_call.1} parent=1 // pred_fallthru
      _
    // Predicated region
    $region6: #{tpu_custom_call.1} parent=1 // pred_check
      _
    $region7: #{tpu_custom_call.1} parent=1 // pred_check_branch
      %17 = sbr.rel (0) target = $region9
    $region8: #{tpu_custom_call.1} parent=1 // pred_region
      _
    $region9: #{tpu_custom_call.1} parent=1 // pred_fallthru
      _
    // Predicated region
    $region10: #{tpu_custom_call.1} parent=1 // pred_check
      _
    $region11: #{tpu_custom_call.1} parent=1 // pred_check_branch
      %19 = sbr.rel (0) target = $region13
    $region12: #{tpu_custom_call.1} parent=1 // pred_region
      _
    $region13: #{tpu_custom_call.1} parent=1 // pred_fallthru
      _
    // Predicated region
    $region14: #{tpu_custom_call.1} parent=1 // pred_check
      _
    $region15: #{tpu_custom_call.1} parent=1 // pred_check_branch
      %21 = sbr.rel (0) target = $region17
    $region16: #{tpu_custom_call.1} parent=1 // pred_region
      _
    $region17: #{tpu_custom_call.1} parent=1 // pred_fallthru
      _
    // Predicated region
    $region18: #{tpu_custom_call.1} parent=1 // pred_check
      _
    $region19: #{tpu_custom_call.1} parent=1 // pred_check_branch
      %23 = sbr.rel (0) target = $region21
    $region20: #{tpu_custom_call.1} parent=1 // pred_region
      _
    $region21: #{tpu_custom_call.1} parent=1 // pred_fallthru
      _
    // Predicated region
    $region22: #{tpu_custom_call.1} parent=1 // pred_check
      _
    $region23: #{tpu_custom_call.1} parent=1 // pred_check_branch
      %25 = sbr.rel (0) target = $region25
    $region24: #{tpu_custom_call.1} parent=1 // pred_region
      _
    $region25: #{tpu_custom_call.1} parent=1 // pred_fallthru
      _
    // Predicated region
    $region26: #{tpu_custom_call.1} parent=1 // pred_check
      _
    $region27: #{tpu_custom_call.1} parent=1 // pred_check_branch
      %27 = sbr.rel (0) target = $region29
    $region28: #{tpu_custom_call.1} parent=1 // pred_region
      _
    $region29: #{tpu_custom_call.1} parent=1 // pred_fallthru
      _
    %v28 = vld [vmem:[%s0] sm:$0xff]
    %v29 = vld [vmem:[%s0 + $0x8] sm:$0xff]
    %v30 = vld [vmem:[%s0 + $0x10] sm:$0xff]
    %v31 = vld [vmem:[%s0 + $0x18] sm:$0xff]
    %v32 = vld [vmem:[%s0 + $0x20] sm:$0xff]
    %v33 = vld [vmem:[%s0 + $0x28] sm:$0xff]
    %v34 = vld [vmem:[%s0 + $0x30] sm:$0xff]
    %v35 = vld [vmem:[%s0 + $0x38] sm:$0xff]
    %v36 = vld [vmem:[%s0 + $0x40] sm:$0xff]
    %v37 = vld [vmem:[%s0 + $0x48] sm:$0xff]
    %v38 = vld [vmem:[%s0 + $0x50] sm:$0xff]
    %v39 = vld [vmem:[%s0 + $0x58] sm:$0xff]
    %v40 = vld [vmem:[%s0 + $0x60] sm:$0xff]
    %v41 = vld [vmem:[%s0 + $0x68] sm:$0xff]
    %v42 = vld [vmem:[%s0 + $0x70] sm:$0xff]
    %v43 = vld [vmem:[%s0 + $0x78] sm:$0xff]
    %v44 = vld [vmem:[%s0 + $0x80] sm:$0xff]
    %v45 = vld [vmem:[%s0 + $0x88] sm:$0xff]
    %v46 = vld [vmem:[%s0 + $0x90] sm:$0xff]
    %v47 = vld [vmem:[%s0 + $0x98] sm:$0xff]
    %v48 = vld [vmem:[%s0 + $0xa0] sm:$0xff]
    %v49 = vld [vmem:[%s0 + $0xa8] sm:$0xff]
    %v50 = vld [vmem:[%s0 + $0xb0] sm:$0xff]
    %v51 = vld [vmem:[%s0 + $0xb8] sm:$0xff]
    %v52 = vld [vmem:[%s0 + $0xc0] sm:$0xff]
    %v53 = vld [vmem:[%s0 + $0xc8] sm:$0xff]
    %v54 = vld [vmem:[%s0 + $0xd0] sm:$0xff]
    %v55 = vld [vmem:[%s0 + $0xd8] sm:$0xff]
    %v56 = vld [vmem:[%s0 + $0xe0] sm:$0xff]
    %v57 = vld [vmem:[%s0 + $0xe8] sm:$0xff]
    %v58 = vld [vmem:[%s0 + $0xf0] sm:$0xff]
    %v59 = vld [vmem:[%s0 + $0xf8] sm:$0xff]
    %v60 = vld [vmem:[%s0 + $0x100] sm:$0xff]
    %v61 = vld [vmem:[%s0 + $0x108] sm:$0xff]
    %v62 = vld [vmem:[%s0 + $0x110] sm:$0xff]
    %v63 = vld [vmem:[%s0 + $0x118] sm:$0xff]
    %v64 = vld [vmem:[%s0 + $0x120] sm:$0xff]
    %v65 = vld [vmem:[%s0 + $0x128] sm:$0xff]
    %v66 = vld [vmem:[%s0 + $0x130] sm:$0xff]
    %v67 = vld [vmem:[%s0 + $0x138] sm:$0xff]
    %v68 = vld [vmem:[%s0 + $0x140] sm:$0xff]
    %v69 = vld [vmem:[%s0 + $0x148] sm:$0xff]
    %v70 = vld [vmem:[%s0 + $0x150] sm:$0xff]
    %v71 = vld [vmem:[%s0 + $0x158] sm:$0xff]
    %v72 = vld [vmem:[%s0 + $0x160] sm:$0xff]
    %v73 = vld [vmem:[%s0 + $0x168] sm:$0xff]
    %v74 = vld [vmem:[%s0 + $0x170] sm:$0xff]
    %v75 = vld [vmem:[%s0 + $0x178] sm:$0xff]
    %v76 = vld [vmem:[%s1] sm:$0xff]
    %v77 = vld [vmem:[%s1 + $0x8] sm:$0xff]
    %v78 = vld [vmem:[%s1 + $0x10] sm:$0xff]
    %v79 = vld [vmem:[%s1 + $0x18] sm:$0xff]
    %v80 = vld [vmem:[%s2] sm:$0x1]
    %v82 = vlaneseq
    %v83 = vshrl.u32 %v82, 7
    %v84 = vsub.s32 0, %v83
    %v85 = vrot.slane %v80, %v84
    %vm87 = vcmask 261120
    %v89 = vsel %vm87, %v28, 0
    %v92 = vsel %vm87, %v29, 0
    %v95 = vsel %vm87, %v30, 0
    %v98 = vsel %vm87, %v31, 0
    %v101 = vsel %vm87, %v32, 0
    %v104 = vsel %vm87, %v33, 0
    %v107 = vsel %vm87, %v34, 0
    %v110 = vsel %vm87, %v35, 0
    %v113 = vsel %vm87, %v36, 0
    %v116 = vsel %vm87, %v37, 0
    %v119 = vsel %vm87, %v38, 0
    %v122 = vsel %vm87, %v39, 0
    %v125 = vsel %vm87, %v40, 0
    %v128 = vsel %vm87, %v41, 0
    %v131 = vsel %vm87, %v42, 0
    %v134 = vsel %vm87, %v43, 0
    %v137 = vsel %vm87, %v44, 0
    %v140 = vsel %vm87, %v45, 0
    %v143 = vsel %vm87, %v46, 0
    %v146 = vsel %vm87, %v47, 0
    %v149 = vsel %vm87, %v48, 0
    %v152 = vsel %vm87, %v49, 0
    %v155 = vsel %vm87, %v50, 0
    %v158 = vsel %vm87, %v51, 0
    %v161 = vsel %vm87, %v52, 0
    %v164 = vsel %vm87, %v53, 0
    %v167 = vsel %vm87, %v54, 0
    %v170 = vsel %vm87, %v55, 0
    %v173 = vsel %vm87, %v56, 0
    %v176 = vsel %vm87, %v57, 0
    %v179 = vsel %vm87, %v58, 0
    %v182 = vsel %vm87, %v59, 0
    %v185 = vsel %vm87, %v60, 0
    %v188 = vsel %vm87, %v61, 0
    %v191 = vsel %vm87, %v62, 0
    %v194 = vsel %vm87, %v63, 0
    %v197 = vsel %vm87, %v64, 0
    %v200 = vsel %vm87, %v65, 0
    %v203 = vsel %vm87, %v66, 0
    %v206 = vsel %vm87, %v67, 0
    %v209 = vsel %vm87, %v68, 0
    %v212 = vsel %vm87, %v69, 0
    %v215 = vsel %vm87, %v70, 0
    %v218 = vsel %vm87, %v71, 0
    %v221 = vsel %vm87, %v72, 0
    %v224 = vsel %vm87, %v73, 0
    %v227 = vsel %vm87, %v74, 0
    %v230 = vsel %vm87, %v75, 0
    %232 = vmatprep.subr.mxu0 0.0
    %233 = vmatpush1.msra.mxu0 %v76
    %234 = vmatprep.subr.mxu0 0.0
    %235 = vmatpush1.msra.mxu0 %v77
    %236 = vmatprep.subr.mxu0 0.0
    %237 = vmatpush1.msra.mxu0 %v78
    %238 = vmatprep.subr.mxu0 0.0
    %239 = vmatpush1.msra.mxu0 %v79
    %240 = vmatprep.subr.mxu0 0.0
    %241 = vmatpush1.msra.mxu0 0.0
    %242 = vmatprep.subr.mxu0 0.0
    %243 = vmatpush1.msra.mxu0 0.0
    %244 = vmatprep.subr.mxu0 0.0
    %245 = vmatpush1.msra.mxu0 0.0
    %246 = vmatprep.subr.mxu0 0.0
    %247 = vmatpush1.msra.mxu0 0.0
    %248 = vmatprep.subr.mxu0 0.0
    %249 = vmatpush1.msra.mxu0 0.0
    %250 = vmatprep.subr.mxu0 0.0
    %251 = vmatpush1.msra.mxu0 0.0
    %252 = vmatprep.subr.mxu0 0.0
    %253 = vmatpush1.msra.mxu0 0.0
    %254 = vmatprep.subr.mxu0 0.0
    %255 = vmatpush1.msra.mxu0 0.0
    %256 = vmatprep.subr.mxu0 0.0
    %257 = vmatpush1.msra.mxu0 0.0
    %258 = vmatprep.subr.mxu0 0.0
    %259 = vmatpush1.msra.mxu0 0.0
    %260 = vmatprep.subr.mxu0 0.0
    %261 = vmatpush1.msra.mxu0 0.0
    %262 = vmatprep.subr.mxu0 0.0
    %263 = vmatpush1.msra.mxu0 0.0
    %264 = vmatprep.subr.mxu0 0.0
    %265 = vmatpush1.msra.mxu0 0.0
    %266 = vmatprep.subr.mxu0 0.0
    %267 = vmatpush1.msra.mxu0 0.0
    %268 = vmatprep.subr.mxu0 0.0
    %269 = vmatpush1.msra.mxu0 0.0
    %270 = vmatprep.subr.mxu0 0.0
    %271 = vmatpush1.msra.mxu0 0.0
    %272 = vmatprep.subr.mxu0 0.0
    %273 = vmatpush1.msra.mxu0 0.0
    %274 = vmatprep.subr.mxu0 0.0
    %275 = vmatpush1.msra.mxu0 0.0
    %276 = vmatprep.subr.mxu0 0.0
    %277 = vmatpush1.msra.mxu0 0.0
    %278 = vmatprep.subr.mxu0 0.0
    %279 = vmatpush1.msra.mxu0 0.0
    %280 = vmatprep.subr.mxu0 0.0
    %281 = vmatpush1.msra.mxu0 0.0
    %282 = vmatprep.subr.mxu0 0.0
    %283 = vmatpush1.msra.mxu0 0.0
    %284 = vmatprep.subr.mxu0 0.0
    %285 = vmatpush1.msra.mxu0 0.0
    %286 = vmatprep.subr.mxu0 0.0
    %287 = vmatpush1.msra.mxu0 0.0
    %288 = vmatprep.subr.mxu0 0.0
    %289 = vmatpush1.msra.mxu0 0.0
    %290 = vmatprep.subr.mxu0 0.0
    %291 = vmatpush1.msra.mxu0 0.0
    %292 = vmatprep.subr.mxu0 0.0
    %293 = vmatpush1.msra.mxu0 0.0
    %294 = vmatprep.subr.mxu0 0.0
    %295 = vmatpush1.msra.mxu0 0.0
    %296 = vmatprep.mubr.f32.mxu0 0.0
    %297 = vmatmul.mubr.f32.gmra.mrb[0].mxu0 %v89
    %v298 = vpop.f32.mrb[0].mxu0
    %v299 = vadd.f32 %v85, %v298
    %v300 = vpop.f32.mrb[0].mxu0
    %301 = vmatprep.mubr.f32.mxu0 0.0
    %302 = vmatmul.mubr.f32.gmra.mrb[0].mxu0 %v92
    %v303 = vpop.f32.mrb[0].mxu0
    %v304 = vadd.f32 %v85, %v303
    %v305 = vpop.f32.mrb[0].mxu0
    %306 = vmatprep.mubr.f32.mxu0 0.0
    %307 = vmatmul.mubr.f32.gmra.mrb[0].mxu0 %v95
    %v308 = vpop.f32.mrb[0].mxu0
    %v309 = vadd.f32 %v85, %v308
    %v310 = vpop.f32.mrb[0].mxu0
    %311 = vmatprep.mubr.f32.mxu0 0.0
    %312 = vmatmul.mubr.f32.gmra.mrb[0].mxu0 %v98
    %v313 = vpop.f32.mrb[0].mxu0
    %v314 = vadd.f32 %v85, %v313
    %v315 = vpop.f32.mrb[0].mxu0
    %316 = vmatprep.mubr.f32.mxu0 0.0
    %317 = vmatmul.mubr.f32.gmra.mrb[0].mxu0 %v101
    %v318 = vpop.f32.mrb[0].mxu0
    %v319 = vadd.f32 %v85, %v318
    %v320 = vpop.f32.mrb[0].mxu0
    %321 = vmatprep.mubr.f32.mxu0 0.0
    %322 = vmatmul.mubr.f32.gmra.mrb[0].mxu0 %v104
    %v323 = vpop.f32.mrb[0].mxu0
    %v324 = vadd.f32 %v85, %v323
    %v325 = vpop.f32.mrb[0].mxu0
    %326 = vmatprep.mubr.f32.mxu0 0.0
    %327 = vmatmul.mubr.f32.gmra.mrb[0].mxu0 %v107
    %v328 = vpop.f32.mrb[0].mxu0
    %v329 = vadd.f32 %v85, %v328
    %v330 = vpop.f32.mrb[0].mxu0
    %331 = vmatprep.mubr.f32.mxu0 0.0
    %332 = vmatmul.mubr.f32.gmra.mrb[0].mxu0 %v110
    %v333 = vpop.f32.mrb[0].mxu0
    %v334 = vadd.f32 %v85, %v333
    %v335 = vpop.f32.mrb[0].mxu0
    %336 = vmatprep.mubr.f32.mxu0 0.0
    %337 = vmatmul.mubr.f32.gmra.mrb[0].mxu0 %v113
    %v338 = vpop.f32.mrb[0].mxu0
    %v339 = vadd.f32 %v85, %v338
    %v340 = vpop.f32.mrb[0].mxu0
    %341 = vmatprep.mubr.f32.mxu0 0.0
    %342 = vmatmul.mubr.f32.gmra.mrb[0].mxu0 %v116
    %v343 = vpop.f32.mrb[0].mxu0
    %v344 = vadd.f32 %v85, %v343
    %v345 = vpop.f32.mrb[0].mxu0
    %346 = vmatprep.mubr.f32.mxu0 0.0
    %347 = vmatmul.mubr.f32.gmra.mrb[0].mxu0 %v119
    %v348 = vpop.f32.mrb[0].mxu0
    %v349 = vadd.f32 %v85, %v348
    %v350 = vpop.f32.mrb[0].mxu0
    %351 = vmatprep.mubr.f32.mxu0 0.0
    %352 = vmatmul.mubr.f32.gmra.mrb[0].mxu0 %v122
    %v353 = vpop.f32.mrb[0].mxu0
    %v354 = vadd.f32 %v85, %v353
    %v355 = vpop.f32.mrb[0].mxu0
    %356 = vmatprep.mubr.f32.mxu0 0.0
    %357 = vmatmul.mubr.f32.gmra.mrb[0].mxu0 %v125
    %v358 = vpop.f32.mrb[0].mxu0
    %v359 = vadd.f32 %v85, %v358
    %v360 = vpop.f32.mrb[0].mxu0
    %361 = vmatprep.mubr.f32.mxu0 0.0
    %362 = vmatmul.mubr.f32.gmra.mrb[0].mxu0 %v128
    %v363 = vpop.f32.mrb[0].mxu0
    %v364 = vadd.f32 %v85, %v363
    %v365 = vpop.f32.mrb[0].mxu0
    %366 = vmatprep.mubr.f32.mxu0 0.0
    %367 = vmatmul.mubr.f32.gmra.mrb[0].mxu0 %v131
    %v368 = vpop.f32.mrb[0].mxu0
    %v369 = vadd.f32 %v85, %v368
    %v370 = vpop.f32.mrb[0].mxu0
    %371 = vmatprep.mubr.f32.mxu0 0.0
    %372 = vmatmul.mubr.f32.gmra.mrb[0].mxu0 %v134
    %v373 = vpop.f32.mrb[0].mxu0
    %v374 = vadd.f32 %v85, %v373
    %v375 = vpop.f32.mrb[0].mxu0
    %376 = vmatprep.mubr.f32.mxu0 0.0
    %377 = vmatmul.mubr.f32.gmra.mrb[0].mxu0 %v137
    %v378 = vpop.f32.mrb[0].mxu0
    %v379 = vadd.f32 %v85, %v378
    %v380 = vpop.f32.mrb[0].mxu0
    %381 = vmatprep.mubr.f32.mxu0 0.0
    %382 = vmatmul.mubr.f32.gmra.mrb[0].mxu0 %v140
    %v383 = vpop.f32.mrb[0].mxu0
    %v384 = vadd.f32 %v85, %v383
    %v385 = vpop.f32.mrb[0].mxu0
    %386 = vmatprep.mubr.f32.mxu0 0.0
    %387 = vmatmul.mubr.f32.gmra.mrb[0].mxu0 %v143
    %v388 = vpop.f32.mrb[0].mxu0
    %v389 = vadd.f32 %v85, %v388
    %v390 = vpop.f32.mrb[0].mxu0
    %391 = vmatprep.mubr.f32.mxu0 0.0
    %392 = vmatmul.mubr.f32.gmra.mrb[0].mxu0 %v146
    %v393 = vpop.f32.mrb[0].mxu0
    %v394 = vadd.f32 %v85, %v393
    %v395 = vpop.f32.mrb[0].mxu0
    %396 = vmatprep.mubr.f32.mxu0 0.0
    %397 = vmatmul.mubr.f32.gmra.mrb[0].mxu0 %v149
    %v398 = vpop.f32.mrb[0].mxu0
    %v399 = vadd.f32 %v85, %v398
    %v400 = vpop.f32.mrb[0].mxu0
    %401 = vmatprep.mubr.f32.mxu0 0.0
    %402 = vmatmul.mubr.f32.gmra.mrb[0].mxu0 %v152
    %v403 = vpop.f32.mrb[0].mxu0
    %v404 = vadd.f32 %v85, %v403
    %v405 = vpop.f32.mrb[0].mxu0
    %406 = vmatprep.mubr.f32.mxu0 0.0
    %407 = vmatmul.mubr.f32.gmra.mrb[0].mxu0 %v155
    %v408 = vpop.f32.mrb[0].mxu0
    %v409 = vadd.f32 %v85, %v408
    %v410 = vpop.f32.mrb[0].mxu0
    %411 = vmatprep.mubr.f32.mxu0 0.0
    %412 = vmatmul.mubr.f32.gmra.mrb[0].mxu0 %v158
    %v413 = vpop.f32.mrb[0].mxu0
    %v414 = vadd.f32 %v85, %v413
    %v415 = vpop.f32.mrb[0].mxu0
    %416 = vmatprep.mubr.f32.mxu0 0.0
    %417 = vmatmul.mubr.f32.gmra.mrb[0].mxu0 %v161
    %v418 = vpop.f32.mrb[0].mxu0
    %v419 = vadd.f32 %v85, %v418
    %v420 = vpop.f32.mrb[0].mxu0
    %421 = vmatprep.mubr.f32.mxu0 0.0
    %422 = vmatmul.mubr.f32.gmra.mrb[0].mxu0 %v164
    %v423 = vpop.f32.mrb[0].mxu0
    %v424 = vadd.f32 %v85, %v423
    %v425 = vpop.f32.mrb[0].mxu0
    %426 = vmatprep.mubr.f32.mxu0 0.0
    %427 = vmatmul.mubr.f32.gmra.mrb[0].mxu0 %v167
    %v428 = vpop.f32.mrb[0].mxu0
    %v429 = vadd.f32 %v85, %v428
    %v430 = vpop.f32.mrb[0].mxu0
    %431 = vmatprep.mubr.f32.mxu0 0.0
    %432 = vmatmul.mubr.f32.gmra.mrb[0].mxu0 %v170
    %v433 = vpop.f32.mrb[0].mxu0
    %v434 = vadd.f32 %v85, %v433
    %v435 = vpop.f32.mrb[0].mxu0
    %436 = vmatprep.mubr.f32.mxu0 0.0
    %437 = vmatmul.mubr.f32.gmra.mrb[0].mxu0 %v173
    %v438 = vpop.f32.mrb[0].mxu0
    %v439 = vadd.f32 %v85, %v438
    %v440 = vpop.f32.mrb[0].mxu0
    %441 = vmatprep.mubr.f32.mxu0 0.0
    %442 = vmatmul.mubr.f32.gmra.mrb[0].mxu0 %v176
    %v443 = vpop.f32.mrb[0].mxu0
    %v444 = vadd.f32 %v85, %v443
    %v445 = vpop.f32.mrb[0].mxu0
    %446 = vmatprep.mubr.f32.mxu0 0.0
    %447 = vmatmul.mubr.f32.gmra.mrb[0].mxu0 %v179
    %v448 = vpop.f32.mrb[0].mxu0
    %v449 = vadd.f32 %v85, %v448
    %v450 = vpop.f32.mrb[0].mxu0
    %451 = vmatprep.mubr.f32.mxu0 0.0
    %452 = vmatmul.mubr.f32.gmra.mrb[0].mxu0 %v182
    %v453 = vpop.f32.mrb[0].mxu0
    %v454 = vadd.f32 %v85, %v453
    %v455 = vpop.f32.mrb[0].mxu0
    %456 = vmatprep.mubr.f32.mxu0 0.0
    %457 = vmatmul.mubr.f32.gmra.mrb[0].mxu0 %v185
    %v458 = vpop.f32.mrb[0].mxu0
    %v459 = vadd.f32 %v85, %v458
    %v460 = vpop.f32.mrb[0].mxu0
    %461 = vmatprep.mubr.f32.mxu0 0.0
    %462 = vmatmul.mubr.f32.gmra.mrb[0].mxu0 %v188
    %v463 = vpop.f32.mrb[0].mxu0
    %v464 = vadd.f32 %v85, %v463
    %v465 = vpop.f32.mrb[0].mxu0
    %466 = vmatprep.mubr.f32.mxu0 0.0
    %467 = vmatmul.mubr.f32.gmra.mrb[0].mxu0 %v191
    %v468 = vpop.f32.mrb[0].mxu0
    %v469 = vadd.f32 %v85, %v468
    %v470 = vpop.f32.mrb[0].mxu0
    %471 = vmatprep.mubr.f32.mxu0 0.0
    %472 = vmatmul.mubr.f32.gmra.mrb[0].mxu0 %v194
    %v473 = vpop.f32.mrb[0].mxu0
    %v474 = vadd.f32 %v85, %v473
    %v475 = vpop.f32.mrb[0].mxu0
    %476 = vmatprep.mubr.f32.mxu0 0.0
    %477 = vmatmul.mubr.f32.gmra.mrb[0].mxu0 %v197
    %v478 = vpop.f32.mrb[0].mxu0
    %v479 = vadd.f32 %v85, %v478
    %v480 = vpop.f32.mrb[0].mxu0
    %481 = vmatprep.mubr.f32.mxu0 0.0
    %482 = vmatmul.mubr.f32.gmra.mrb[0].mxu0 %v200
    %v483 = vpop.f32.mrb[0].mxu0
    %v484 = vadd.f32 %v85, %v483
    %v485 = vpop.f32.mrb[0].mxu0
    %486 = vmatprep.mubr.f32.mxu0 0.0
    %487 = vmatmul.mubr.f32.gmra.mrb[0].mxu0 %v203
    %v488 = vpop.f32.mrb[0].mxu0
    %v489 = vadd.f32 %v85, %v488
    %v490 = vpop.f32.mrb[0].mxu0
    %491 = vmatprep.mubr.f32.mxu0 0.0
    %492 = vmatmul.mubr.f32.gmra.mrb[0].mxu0 %v206
    %v493 = vpop.f32.mrb[0].mxu0
    %v494 = vadd.f32 %v85, %v493
    %v495 = vpop.f32.mrb[0].mxu0
    %496 = vmatprep.mubr.f32.mxu0 0.0
    %497 = vmatmul.mubr.f32.gmra.mrb[0].mxu0 %v209
    %v498 = vpop.f32.mrb[0].mxu0
    %v499 = vadd.f32 %v85, %v498
    %v500 = vpop.f32.mrb[0].mxu0
    %501 = vmatprep.mubr.f32.mxu0 0.0
    %502 = vmatmul.mubr.f32.gmra.mrb[0].mxu0 %v212
    %v503 = vpop.f32.mrb[0].mxu0
    %v504 = vadd.f32 %v85, %v503
    %v505 = vpop.f32.mrb[0].mxu0
    %506 = vmatprep.mubr.f32.mxu0 0.0
    %507 = vmatmul.mubr.f32.gmra.mrb[0].mxu0 %v215
    %v508 = vpop.f32.mrb[0].mxu0
    %v509 = vadd.f32 %v85, %v508
    %v510 = vpop.f32.mrb[0].mxu0
    %511 = vmatprep.mubr.f32.mxu0 0.0
    %512 = vmatmul.mubr.f32.gmra.mrb[0].mxu0 %v218
    %v513 = vpop.f32.mrb[0].mxu0
    %v514 = vadd.f32 %v85, %v513
    %v515 = vpop.f32.mrb[0].mxu0
    %516 = vmatprep.mubr.f32.mxu0 0.0
    %517 = vmatmul.mubr.f32.gmra.mrb[0].mxu0 %v221
    %v518 = vpop.f32.mrb[0].mxu0
    %v519 = vadd.f32 %v85, %v518
    %v520 = vpop.f32.mrb[0].mxu0
    %521 = vmatprep.mubr.f32.mxu0 0.0
    %522 = vmatmul.mubr.f32.gmra.mrb[0].mxu0 %v224
    %v523 = vpop.f32.mrb[0].mxu0
    %v524 = vadd.f32 %v85, %v523
    %v525 = vpop.f32.mrb[0].mxu0
    %526 = vmatprep.mubr.f32.mxu0 0.0
    %527 = vmatmul.mubr.f32.gmra.mrb[0].mxu0 %v227
    %v528 = vpop.f32.mrb[0].mxu0
    %v529 = vadd.f32 %v85, %v528
    %v530 = vpop.f32.mrb[0].mxu0
    %531 = vmatprep.mubr.f32.mxu0 0.0
    %532 = vmatmul.mubr.f32.gmra.mrb[0].mxu0 %v230
    %v533 = vpop.f32.mrb[0].mxu0
    %v534 = vadd.f32 %v85, %v533
    %v535 = vpop.f32.mrb[0].mxu0
    %536 = vdwg.mxu0
    %v537 = vtanh.pop %v299
    %v538 = vtanh.pop %v304
    %v539 = vtanh.pop %v309
    %v540 = vtanh.pop %v314
    %v541 = vtanh.pop %v319
    %v542 = vtanh.pop %v324
    %v543 = vtanh.pop %v329
    %v544 = vtanh.pop %v334
    %v545 = vtanh.pop %v339
    %v546 = vtanh.pop %v344
    %v547 = vtanh.pop %v349
    %v548 = vtanh.pop %v354
    %v549 = vtanh.pop %v359
    %v550 = vtanh.pop %v364
    %v551 = vtanh.pop %v369
    %v552 = vtanh.pop %v374
    %v553 = vtanh.pop %v379
    %v554 = vtanh.pop %v384
    %v555 = vtanh.pop %v389
    %v556 = vtanh.pop %v394
    %v557 = vtanh.pop %v399
    %v558 = vtanh.pop %v404
    %v559 = vtanh.pop %v409
    %v560 = vtanh.pop %v414
    %v561 = vtanh.pop %v419
    %v562 = vtanh.pop %v424
    %v563 = vtanh.pop %v429
    %v564 = vtanh.pop %v434
    %v565 = vtanh.pop %v439
    %v566 = vtanh.pop %v444
    %v567 = vtanh.pop %v449
    %v568 = vtanh.pop %v454
    %v569 = vtanh.pop %v459
    %v570 = vtanh.pop %v464
    %v571 = vtanh.pop %v469
    %v572 = vtanh.pop %v474
    %v573 = vtanh.pop %v479
    %v574 = vtanh.pop %v484
    %v575 = vtanh.pop %v489
    %v576 = vtanh.pop %v494
    %v577 = vtanh.pop %v499
    %v578 = vtanh.pop %v504
    %v579 = vtanh.pop %v509
    %v580 = vtanh.pop %v514
    %v581 = vtanh.pop %v519
    %v582 = vtanh.pop %v524
    %v583 = vtanh.pop %v529
    %v584 = vtanh.pop %v534
    %v585 = vld [vmem:[%s3] sm:$0xff]
    %v586 = vld [vmem:[%s3 + $0x8] sm:$0xff]
    %v587 = vld [vmem:[%s3 + $0x10] sm:$0xff]
    %v588 = vld [vmem:[%s3 + $0x18] sm:$0xff]
    %v589 = vld [vmem:[%s3 + $0x20] sm:$0xff]
    %v590 = vld [vmem:[%s3 + $0x28] sm:$0xff]
    %v591 = vld [vmem:[%s3 + $0x30] sm:$0xff]
    %v592 = vld [vmem:[%s3 + $0x38] sm:$0xff]
    %v593 = vld [vmem:[%s4] sm:$0x1]
    %v595 = vlaneseq
    %v596 = vshrl.u32 %v595, 7
    %v597 = vsub.s32 0, %v596
    %v598 = vrot.slane %v593, %v597
    %vm600 = vcmask 523264
    %v602 = vsel %vm600, %v537, 0
    %v605 = vsel %vm600, %v538, 0
    %v608 = vsel %vm600, %v539, 0
    %v611 = vsel %vm600, %v540, 0
    %v614 = vsel %vm600, %v541, 0
    %v617 = vsel %vm600, %v542, 0
    %v620 = vsel %vm600, %v543, 0
    %v623 = vsel %vm600, %v544, 0
    %v626 = vsel %vm600, %v545, 0
    %v629 = vsel %vm600, %v546, 0
    %v632 = vsel %vm600, %v547, 0
    %v635 = vsel %vm600, %v548, 0
    %v638 = vsel %vm600, %v549, 0
    %v641 = vsel %vm600, %v550, 0
    %v644 = vsel %vm600, %v551, 0
    %v647 = vsel %vm600, %v552, 0
    %v650 = vsel %vm600, %v553, 0
    %v653 = vsel %vm600, %v554, 0
    %v656 = vsel %vm600, %v555, 0
    %v659 = vsel %vm600, %v556, 0
    %v662 = vsel %vm600, %v557, 0
    %v665 = vsel %vm600, %v558, 0
    %v668 = vsel %vm600, %v559, 0
    %v671 = vsel %vm600, %v560, 0
    %v674 = vsel %vm600, %v561, 0
    %v677 = vsel %vm600, %v562, 0
    %v680 = vsel %vm600, %v563, 0
    %v683 = vsel %vm600, %v564, 0
    %v686 = vsel %vm600, %v565, 0
    %v689 = vsel %vm600, %v566, 0
    %v692 = vsel %vm600, %v567, 0
    %v695 = vsel %vm600, %v568, 0
    %v698 = vsel %vm600, %v569, 0
    %v701 = vsel %vm600, %v570, 0
    %v704 = vsel %vm600, %v571, 0
    %v707 = vsel %vm600, %v572, 0
    %v710 = vsel %vm600, %v573, 0
    %v713 = vsel %vm600, %v574, 0
    %v716 = vsel %vm600, %v575, 0
    %v719 = vsel %vm600, %v576, 0
    %v722 = vsel %vm600, %v577, 0
    %v725 = vsel %vm600, %v578, 0
    %v728 = vsel %vm600, %v579, 0
    %v731 = vsel %vm600, %v580, 0
    %v734 = vsel %vm600, %v581, 0
    %v737 = vsel %vm600, %v582, 0
    %v740 = vsel %vm600, %v583, 0
    %v743 = vsel %vm600, %v584, 0
    %745 = vmatprep.subr.mxu0 0.0
    %746 = vmatpush1.msra.mxu0 %v585
    %747 = vmatprep.subr.mxu0 0.0
    %748 = vmatpush1.msra.mxu0 %v586
    %749 = vmatprep.subr.mxu0 0.0
    %750 = vmatpush1.msra.mxu0 %v587
    %751 = vmatprep.subr.mxu0 0.0
    %752 = vmatpush1.msra.mxu0 %v588
    %753 = vmatprep.subr.mxu0 0.0
    %754 = vmatpush1.msra.mxu0 %v589
    %755 = vmatprep.subr.mxu0 0.0
    %756 = vmatpush1.msra.mxu0 %v590
    %757 = vmatprep.subr.mxu0 0.0
    %758 = vmatpush1.msra.mxu0 %v591
    %759 = vmatprep.subr.mxu0 0.0
    %760 = vmatpush1.msra.mxu0 %v592
    %761 = vmatprep.subr.mxu0 0.0
    %762 = vmatpush1.msra.mxu0 0.0
    %763 = vmatprep.subr.mxu0 0.0
    %764 = vmatpush1.msra.mxu0 0.0
    %765 = vmatprep.subr.mxu0 0.0
    %766 = vmatpush1.msra.mxu0 0.0
    %767 = vmatprep.subr.mxu0 0.0
    %768 = vmatpush1.msra.mxu0 0.0
    %769 = vmatprep.subr.mxu0 0.0
    %770 = vmatpush1.msra.mxu0 0.0
    %771 = vmatprep.subr.mxu0 0.0
    %772 = vmatpush1.msra.mxu0 0.0
    %773 = vmatprep.subr.mxu0 0.0
    %774 = vmatpush1.msra.mxu0 0.0
    %775 = vmatprep.subr.mxu0 0.0
    %776 = vmatpush1.msra.mxu0 0.0
    %777 = vmatprep.subr.mxu0 0.0
    %778 = vmatpush1.msra.mxu0 0.0
    %779 = vmatprep.subr.mxu0 0.0
    %780 = vmatpush1.msra.mxu0 0.0
    %781 = vmatprep.subr.mxu0 0.0
    %782 = vmatpush1.msra.mxu0 0.0
    %783 = vmatprep.subr.mxu0 0.0
    %784 = vmatpush1.msra.mxu0 0.0
    %785 = vmatprep.subr.mxu0 0.0
    %786 = vmatpush1.msra.mxu0 0.0
    %787 = vmatprep.subr.mxu0 0.0
    %788 = vmatpush1.msra.mxu0 0.0
    %789 = vmatprep.subr.mxu0 0.0
    %790 = vmatpush1.msra.mxu0 0.0
    %791 = vmatprep.subr.mxu0 0.0
    %792 = vmatpush1.msra.mxu0 0.0
    %793 = vmatprep.subr.mxu0 0.0
    %794 = vmatpush1.msra.mxu0 0.0
    %795 = vmatprep.subr.mxu0 0.0
    %796 = vmatpush1.msra.mxu0 0.0
    %797 = vmatprep.subr.mxu0 0.0
    %798 = vmatpush1.msra.mxu0 0.0
    %799 = vmatprep.subr.mxu0 0.0
    %800 = vmatpush1.msra.mxu0 0.0
    %801 = vmatprep.subr.mxu0 0.0
    %802 = vmatpush1.msra.mxu0 0.0
    %803 = vmatprep.subr.mxu0 0.0
    %804 = vmatpush1.msra.mxu0 0.0
    %805 = vmatprep.subr.mxu0 0.0
    %806 = vmatpush1.msra.mxu0 0.0
    %807 = vmatprep.subr.mxu0 0.0
    %808 = vmatpush1.msra.mxu0 0.0
    %809 = vmatprep.mubr.f32.mxu0 0.0
    %810 = vmatmul.mubr.f32.gmra.mrb[0].mxu0 %v602
    %v811 = vpop.f32.mrb[0].mxu0
    %v812 = vadd.f32 %v598, %v811
    %v813 = vpop.f32.mrb[0].mxu0
    %814 = vmatprep.mubr.f32.mxu0 0.0
    %815 = vmatmul.mubr.f32.gmra.mrb[0].mxu0 %v605
    %v816 = vpop.f32.mrb[0].mxu0
    %v817 = vadd.f32 %v598, %v816
    %v818 = vpop.f32.mrb[0].mxu0
    %819 = vmatprep.mubr.f32.mxu0 0.0
    %820 = vmatmul.mubr.f32.gmra.mrb[0].mxu0 %v608
    %v821 = vpop.f32.mrb[0].mxu0
    %v822 = vadd.f32 %v598, %v821
    %v823 = vpop.f32.mrb[0].mxu0
    %824 = vmatprep.mubr.f32.mxu0 0.0
    %825 = vmatmul.mubr.f32.gmra.mrb[0].mxu0 %v611
    %v826 = vpop.f32.mrb[0].mxu0
    %v827 = vadd.f32 %v598, %v826
    %v828 = vpop.f32.mrb[0].mxu0
    %829 = vmatprep.mubr.f32.mxu0 0.0
    %830 = vmatmul.mubr.f32.gmra.mrb[0].mxu0 %v614
    %v831 = vpop.f32.mrb[0].mxu0
    %v832 = vadd.f32 %v598, %v831
    %v833 = vpop.f32.mrb[0].mxu0
    %834 = vmatprep.mubr.f32.mxu0 0.0
    %835 = vmatmul.mubr.f32.gmra.mrb[0].mxu0 %v617
    %v836 = vpop.f32.mrb[0].mxu0
    %v837 = vadd.f32 %v598, %v836
    %v838 = vpop.f32.mrb[0].mxu0
    %839 = vmatprep.mubr.f32.mxu0 0.0
    %840 = vmatmul.mubr.f32.gmra.mrb[0].mxu0 %v620
    %v841 = vpop.f32.mrb[0].mxu0
    %v842 = vadd.f32 %v598, %v841
    %v843 = vpop.f32.mrb[0].mxu0
    %844 = vmatprep.mubr.f32.mxu0 0.0
    %845 = vmatmul.mubr.f32.gmra.mrb[0].mxu0 %v623
    %v846 = vpop.f32.mrb[0].mxu0
    %v847 = vadd.f32 %v598, %v846
    %v848 = vpop.f32.mrb[0].mxu0
    %849 = vmatprep.mubr.f32.mxu0 0.0
    %850 = vmatmul.mubr.f32.gmra.mrb[0].mxu0 %v626
    %v851 = vpop.f32.mrb[0].mxu0
    %v852 = vadd.f32 %v598, %v851
    %v853 = vpop.f32.mrb[0].mxu0
    %854 = vmatprep.mubr.f32.mxu0 0.0
    %855 = vmatmul.mubr.f32.gmra.mrb[0].mxu0 %v629
    %v856 = vpop.f32.mrb[0].mxu0
    %v857 = vadd.f32 %v598, %v856
    %v858 = vpop.f32.mrb[0].mxu0
    %859 = vmatprep.mubr.f32.mxu0 0.0
    %860 = vmatmul.mubr.f32.gmra.mrb[0].mxu0 %v632
    %v861 = vpop.f32.mrb[0].mxu0
    %v862 = vadd.f32 %v598, %v861
    %v863 = vpop.f32.mrb[0].mxu0
    %864 = vmatprep.mubr.f32.mxu0 0.0
    %865 = vmatmul.mubr.f32.gmra.mrb[0].mxu0 %v635
    %v866 = vpop.f32.mrb[0].mxu0
    %v867 = vadd.f32 %v598, %v866
    %v868 = vpop.f32.mrb[0].mxu0
    %869 = vmatprep.mubr.f32.mxu0 0.0
    %870 = vmatmul.mubr.f32.gmra.mrb[0].mxu0 %v638
    %v871 = vpop.f32.mrb[0].mxu0
    %v872 = vadd.f32 %v598, %v871
    %v873 = vpop.f32.mrb[0].mxu0
    %874 = vmatprep.mubr.f32.mxu0 0.0
    %875 = vmatmul.mubr.f32.gmra.mrb[0].mxu0 %v641
    %v876 = vpop.f32.mrb[0].mxu0
    %v877 = vadd.f32 %v598, %v876
    %v878 = vpop.f32.mrb[0].mxu0
    %879 = vmatprep.mubr.f32.mxu0 0.0
    %880 = vmatmul.mubr.f32.gmra.mrb[0].mxu0 %v644
    %v881 = vpop.f32.mrb[0].mxu0
    %v882 = vadd.f32 %v598, %v881
    %v883 = vpop.f32.mrb[0].mxu0
    %884 = vmatprep.mubr.f32.mxu0 0.0
    %885 = vmatmul.mubr.f32.gmra.mrb[0].mxu0 %v647
    %v886 = vpop.f32.mrb[0].mxu0
    %v887 = vadd.f32 %v598, %v886
    %v888 = vpop.f32.mrb[0].mxu0
    %889 = vmatprep.mubr.f32.mxu0 0.0
    %890 = vmatmul.mubr.f32.gmra.mrb[0].mxu0 %v650
    %v891 = vpop.f32.mrb[0].mxu0
    %v892 = vadd.f32 %v598, %v891
    %v893 = vpop.f32.mrb[0].mxu0
    %894 = vmatprep.mubr.f32.mxu0 0.0
    %895 = vmatmul.mubr.f32.gmra.mrb[0].mxu0 %v653
    %v896 = vpop.f32.mrb[0].mxu0
    %v897 = vadd.f32 %v598, %v896
    %v898 = vpop.f32.mrb[0].mxu0
    %899 = vmatprep.mubr.f32.mxu0 0.0
    %900 = vmatmul.mubr.f32.gmra.mrb[0].mxu0 %v656
    %v901 = vpop.f32.mrb[0].mxu0
    %v902 = vadd.f32 %v598, %v901
    %v903 = vpop.f32.mrb[0].mxu0
    %904 = vmatprep.mubr.f32.mxu0 0.0
    %905 = vmatmul.mubr.f32.gmra.mrb[0].mxu0 %v659
    %v906 = vpop.f32.mrb[0].mxu0
    %v907 = vadd.f32 %v598, %v906
    %v908 = vpop.f32.mrb[0].mxu0
    %909 = vmatprep.mubr.f32.mxu0 0.0
    %910 = vmatmul.mubr.f32.gmra.mrb[0].mxu0 %v662
    %v911 = vpop.f32.mrb[0].mxu0
    %v912 = vadd.f32 %v598, %v911
    %v913 = vpop.f32.mrb[0].mxu0
    %914 = vmatprep.mubr.f32.mxu0 0.0
    %915 = vmatmul.mubr.f32.gmra.mrb[0].mxu0 %v665
    %v916 = vpop.f32.mrb[0].mxu0
    %v917 = vadd.f32 %v598, %v916
    %v918 = vpop.f32.mrb[0].mxu0
    %919 = vmatprep.mubr.f32.mxu0 0.0
    %920 = vmatmul.mubr.f32.gmra.mrb[0].mxu0 %v668
    %v921 = vpop.f32.mrb[0].mxu0
    %v922 = vadd.f32 %v598, %v921
    %v923 = vpop.f32.mrb[0].mxu0
    %924 = vmatprep.mubr.f32.mxu0 0.0
    %925 = vmatmul.mubr.f32.gmra.mrb[0].mxu0 %v671
    %v926 = vpop.f32.mrb[0].mxu0
    %v927 = vadd.f32 %v598, %v926
    %v928 = vpop.f32.mrb[0].mxu0
    %929 = vmatprep.mubr.f32.mxu0 0.0
    %930 = vmatmul.mubr.f32.gmra.mrb[0].mxu0 %v674
    %v931 = vpop.f32.mrb[0].mxu0
    %v932 = vadd.f32 %v598, %v931
    %v933 = vpop.f32.mrb[0].mxu0
    %934 = vmatprep.mubr.f32.mxu0 0.0
    %935 = vmatmul.mubr.f32.gmra.mrb[0].mxu0 %v677
    %v936 = vpop.f32.mrb[0].mxu0
    %v937 = vadd.f32 %v598, %v936
    %v938 = vpop.f32.mrb[0].mxu0
    %939 = vmatprep.mubr.f32.mxu0 0.0
    %940 = vmatmul.mubr.f32.gmra.mrb[0].mxu0 %v680
    %v941 = vpop.f32.mrb[0].mxu0
    %v942 = vadd.f32 %v598, %v941
    %v943 = vpop.f32.mrb[0].mxu0
    %944 = vmatprep.mubr.f32.mxu0 0.0
    %945 = vmatmul.mubr.f32.gmra.mrb[0].mxu0 %v683
    %v946 = vpop.f32.mrb[0].mxu0
    %v947 = vadd.f32 %v598, %v946
    %v948 = vpop.f32.mrb[0].mxu0
    %949 = vmatprep.mubr.f32.mxu0 0.0
    %950 = vmatmul.mubr.f32.gmra.mrb[0].mxu0 %v686
    %v951 = vpop.f32.mrb[0].mxu0
    %v952 = vadd.f32 %v598, %v951
    %v953 = vpop.f32.mrb[0].mxu0
    %954 = vmatprep.mubr.f32.mxu0 0.0
    %955 = vmatmul.mubr.f32.gmra.mrb[0].mxu0 %v689
    %v956 = vpop.f32.mrb[0].mxu0
    %v957 = vadd.f32 %v598, %v956
    %v958 = vpop.f32.mrb[0].mxu0
    %959 = vmatprep.mubr.f32.mxu0 0.0
    %960 = vmatmul.mubr.f32.gmra.mrb[0].mxu0 %v692
    %v961 = vpop.f32.mrb[0].mxu0
    %v962 = vadd.f32 %v598, %v961
    %v963 = vpop.f32.mrb[0].mxu0
    %964 = vmatprep.mubr.f32.mxu0 0.0
    %965 = vmatmul.mubr.f32.gmra.mrb[0].mxu0 %v695
    %v966 = vpop.f32.mrb[0].mxu0
    %v967 = vadd.f32 %v598, %v966
    %v968 = vpop.f32.mrb[0].mxu0
    %969 = vmatprep.mubr.f32.mxu0 0.0
    %970 = vmatmul.mubr.f32.gmra.mrb[0].mxu0 %v698
    %v971 = vpop.f32.mrb[0].mxu0
    %v972 = vadd.f32 %v598, %v971
    %v973 = vpop.f32.mrb[0].mxu0
    %974 = vmatprep.mubr.f32.mxu0 0.0
    %975 = vmatmul.mubr.f32.gmra.mrb[0].mxu0 %v701
    %v976 = vpop.f32.mrb[0].mxu0
    %v977 = vadd.f32 %v598, %v976
    %v978 = vpop.f32.mrb[0].mxu0
    %979 = vmatprep.mubr.f32.mxu0 0.0
    %980 = vmatmul.mubr.f32.gmra.mrb[0].mxu0 %v704
    %v981 = vpop.f32.mrb[0].mxu0
    %v982 = vadd.f32 %v598, %v981
    %v983 = vpop.f32.mrb[0].mxu0
    %984 = vmatprep.mubr.f32.mxu0 0.0
    %985 = vmatmul.mubr.f32.gmra.mrb[0].mxu0 %v707
    %v986 = vpop.f32.mrb[0].mxu0
    %v987 = vadd.f32 %v598, %v986
    %v988 = vpop.f32.mrb[0].mxu0
    %989 = vmatprep.mubr.f32.mxu0 0.0
    %990 = vmatmul.mubr.f32.gmra.mrb[0].mxu0 %v710
    %v991 = vpop.f32.mrb[0].mxu0
    %v992 = vadd.f32 %v598, %v991
    %v993 = vpop.f32.mrb[0].mxu0
    %994 = vmatprep.mubr.f32.mxu0 0.0
    %995 = vmatmul.mubr.f32.gmra.mrb[0].mxu0 %v713
    %v996 = vpop.f32.mrb[0].mxu0
    %v997 = vadd.f32 %v598, %v996
    %v998 = vpop.f32.mrb[0].mxu0
    %999 = vmatprep.mubr.f32.mxu0 0.0
    %1000 = vmatmul.mubr.f32.gmra.mrb[0].mxu0 %v716
    %v1001 = vpop.f32.mrb[0].mxu0
    %v1002 = vadd.f32 %v598, %v1001
    %v1003 = vpop.f32.mrb[0].mxu0
    %1004 = vmatprep.mubr.f32.mxu0 0.0
    %1005 = vmatmul.mubr.f32.gmra.mrb[0].mxu0 %v719
    %v1006 = vpop.f32.mrb[0].mxu0
    %v1007 = vadd.f32 %v598, %v1006
    %v1008 = vpop.f32.mrb[0].mxu0
    %1009 = vmatprep.mubr.f32.mxu0 0.0
    %1010 = vmatmul.mubr.f32.gmra.mrb[0].mxu0 %v722
    %v1011 = vpop.f32.mrb[0].mxu0
    %v1012 = vadd.f32 %v598, %v1011
    %v1013 = vpop.f32.mrb[0].mxu0
    %1014 = vmatprep.mubr.f32.mxu0 0.0
    %1015 = vmatmul.mubr.f32.gmra.mrb[0].mxu0 %v725
    %v1016 = vpop.f32.mrb[0].mxu0
    %v1017 = vadd.f32 %v598, %v1016
    %v1018 = vpop.f32.mrb[0].mxu0
    %1019 = vmatprep.mubr.f32.mxu0 0.0
    %1020 = vmatmul.mubr.f32.gmra.mrb[0].mxu0 %v728
    %v1021 = vpop.f32.mrb[0].mxu0
    %v1022 = vadd.f32 %v598, %v1021
    %v1023 = vpop.f32.mrb[0].mxu0
    %1024 = vmatprep.mubr.f32.mxu0 0.0
    %1025 = vmatmul.mubr.f32.gmra.mrb[0].mxu0 %v731
    %v1026 = vpop.f32.mrb[0].mxu0
    %v1027 = vadd.f32 %v598, %v1026
    %v1028 = vpop.f32.mrb[0].mxu0
    %1029 = vmatprep.mubr.f32.mxu0 0.0
    %1030 = vmatmul.mubr.f32.gmra.mrb[0].mxu0 %v734
    %v1031 = vpop.f32.mrb[0].mxu0
    %v1032 = vadd.f32 %v598, %v1031
    %v1033 = vpop.f32.mrb[0].mxu0
    %1034 = vmatprep.mubr.f32.mxu0 0.0
    %1035 = vmatmul.mubr.f32.gmra.mrb[0].mxu0 %v737
    %v1036 = vpop.f32.mrb[0].mxu0
    %v1037 = vadd.f32 %v598, %v1036
    %v1038 = vpop.f32.mrb[0].mxu0
    %1039 = vmatprep.mubr.f32.mxu0 0.0
    %1040 = vmatmul.mubr.f32.gmra.mrb[0].mxu0 %v740
    %v1041 = vpop.f32.mrb[0].mxu0
    %v1042 = vadd.f32 %v598, %v1041
    %v1043 = vpop.f32.mrb[0].mxu0
    %1044 = vmatprep.mubr.f32.mxu0 0.0
    %1045 = vmatmul.mubr.f32.gmra.mrb[0].mxu0 %v743
    %v1046 = vpop.f32.mrb[0].mxu0
    %v1047 = vadd.f32 %v598, %v1046
    %v1048 = vpop.f32.mrb[0].mxu0
    %1049 = vdwg.mxu0
    %v1050 = vtanh.pop %v812
    %v1051 = vtanh.pop %v817
    %v1052 = vtanh.pop %v822
    %v1053 = vtanh.pop %v827
    %v1054 = vtanh.pop %v832
    %v1055 = vtanh.pop %v837
    %v1056 = vtanh.pop %v842
    %v1057 = vtanh.pop %v847
    %v1058 = vtanh.pop %v852
    %v1059 = vtanh.pop %v857
    %v1060 = vtanh.pop %v862
    %v1061 = vtanh.pop %v867
    %v1062 = vtanh.pop %v872
    %v1063 = vtanh.pop %v877
    %v1064 = vtanh.pop %v882
    %v1065 = vtanh.pop %v887
    %v1066 = vtanh.pop %v892
    %v1067 = vtanh.pop %v897
    %v1068 = vtanh.pop %v902
    %v1069 = vtanh.pop %v907
    %v1070 = vtanh.pop %v912
    %v1071 = vtanh.pop %v917
    %v1072 = vtanh.pop %v922
    %v1073 = vtanh.pop %v927
    %v1074 = vtanh.pop %v932
    %v1075 = vtanh.pop %v937
    %v1076 = vtanh.pop %v942
    %v1077 = vtanh.pop %v947
    %v1078 = vtanh.pop %v952
    %v1079 = vtanh.pop %v957
    %v1080 = vtanh.pop %v962
    %v1081 = vtanh.pop %v967
    %v1082 = vtanh.pop %v972
    %v1083 = vtanh.pop %v977
    %v1084 = vtanh.pop %v982
    %v1085 = vtanh.pop %v987
    %v1086 = vtanh.pop %v992
    %v1087 = vtanh.pop %v997
    %v1088 = vtanh.pop %v1002
    %v1089 = vtanh.pop %v1007
    %v1090 = vtanh.pop %v1012
    %v1091 = vtanh.pop %v1017
    %v1092 = vtanh.pop %v1022
    %v1093 = vtanh.pop %v1027
    %v1094 = vtanh.pop %v1032
    %v1095 = vtanh.pop %v1037
    %v1096 = vtanh.pop %v1042
    %v1097 = vtanh.pop %v1047
    %v1098 = vld [vmem:[%s5] sm:$0x1]
    %v1100 = vlaneseq
    %v1101 = vshrl.u32 %v1100, 7
    %v1102 = vsub.s32 0, %v1101
    %v1103 = vrot.slane %v1098, %v1102
    %v1105 = vmul.f32 %v1050, %v1103
    %v1106 = vmul.f32 %v1051, %v1103
    %v1107 = vmul.f32 %v1052, %v1103
    %v1108 = vmul.f32 %v1053, %v1103
    %v1109 = vmul.f32 %v1054, %v1103
    %v1110 = vmul.f32 %v1055, %v1103
    %v1111 = vmul.f32 %v1056, %v1103
    %v1112 = vmul.f32 %v1057, %v1103
    %v1113 = vmul.f32 %v1058, %v1103
    %v1114 = vmul.f32 %v1059, %v1103
    %v1115 = vmul.f32 %v1060, %v1103
    %v1116 = vmul.f32 %v1061, %v1103
    %v1117 = vmul.f32 %v1062, %v1103
    %v1118 = vmul.f32 %v1063, %v1103
    %v1119 = vmul.f32 %v1064, %v1103
    %v1120 = vmul.f32 %v1065, %v1103
    %v1121 = vmul.f32 %v1066, %v1103
    %v1122 = vmul.f32 %v1067, %v1103
    %v1123 = vmul.f32 %v1068, %v1103
    %v1124 = vmul.f32 %v1069, %v1103
    %v1125 = vmul.f32 %v1070, %v1103
    %v1126 = vmul.f32 %v1071, %v1103
    %v1127 = vmul.f32 %v1072, %v1103
    %v1128 = vmul.f32 %v1073, %v1103
    %v1129 = vmul.f32 %v1074, %v1103
    %v1130 = vmul.f32 %v1075, %v1103
    %v1131 = vmul.f32 %v1076, %v1103
    %v1132 = vmul.f32 %v1077, %v1103
    %v1133 = vmul.f32 %v1078, %v1103
    %v1134 = vmul.f32 %v1079, %v1103
    %v1135 = vmul.f32 %v1080, %v1103
    %v1136 = vmul.f32 %v1081, %v1103
    %v1137 = vmul.f32 %v1082, %v1103
    %v1138 = vmul.f32 %v1083, %v1103
    %v1139 = vmul.f32 %v1084, %v1103
    %v1140 = vmul.f32 %v1085, %v1103
    %v1141 = vmul.f32 %v1086, %v1103
    %v1142 = vmul.f32 %v1087, %v1103
    %v1143 = vmul.f32 %v1088, %v1103
    %v1144 = vmul.f32 %v1089, %v1103
    %v1145 = vmul.f32 %v1090, %v1103
    %v1146 = vmul.f32 %v1091, %v1103
    %v1147 = vmul.f32 %v1092, %v1103
    %v1148 = vmul.f32 %v1093, %v1103
    %v1149 = vmul.f32 %v1094, %v1103
    %v1150 = vmul.f32 %v1095, %v1103
    %v1151 = vmul.f32 %v1096, %v1103
    %v1152 = vmul.f32 %v1097, %v1103
    %v1153 = vsel %vm600, %v1105, 0.0
    %1154 = vadd.xlane.f32.xlu0 %v1153
    %v1155 = vpop.xlane.xlu0 %1154
    %v1156 = vsel %vm600, %v1106, 0.0
    %1157 = vadd.xlane.f32.xlu0 %v1156
    %v1158 = vpop.xlane.xlu0 %1157
    %v1159 = vsel %vm600, %v1107, 0.0
    %1160 = vadd.xlane.f32.xlu0 %v1159
    %v1161 = vpop.xlane.xlu0 %1160
    %v1162 = vsel %vm600, %v1108, 0.0
    %1163 = vadd.xlane.f32.xlu0 %v1162
    %v1164 = vpop.xlane.xlu0 %1163
    %v1165 = vsel %vm600, %v1109, 0.0
    %1166 = vadd.xlane.f32.xlu0 %v1165
    %v1167 = vpop.xlane.xlu0 %1166
    %v1168 = vsel %vm600, %v1110, 0.0
    %1169 = vadd.xlane.f32.xlu0 %v1168
    %v1170 = vpop.xlane.xlu0 %1169
    %v1171 = vsel %vm600, %v1111, 0.0
    %1172 = vadd.xlane.f32.xlu0 %v1171
    %v1173 = vpop.xlane.xlu0 %1172
    %v1174 = vsel %vm600, %v1112, 0.0
    %1175 = vadd.xlane.f32.xlu0 %v1174
    %v1176 = vpop.xlane.xlu0 %1175
    %v1177 = vsel %vm600, %v1113, 0.0
    %1178 = vadd.xlane.f32.xlu0 %v1177
    %v1179 = vpop.xlane.xlu0 %1178
    %v1180 = vsel %vm600, %v1114, 0.0
    %1181 = vadd.xlane.f32.xlu0 %v1180
    %v1182 = vpop.xlane.xlu0 %1181
    %v1183 = vsel %vm600, %v1115, 0.0
    %1184 = vadd.xlane.f32.xlu0 %v1183
    %v1185 = vpop.xlane.xlu0 %1184
    %v1186 = vsel %vm600, %v1116, 0.0
    %1187 = vadd.xlane.f32.xlu0 %v1186
    %v1188 = vpop.xlane.xlu0 %1187
    %v1189 = vsel %vm600, %v1117, 0.0
    %1190 = vadd.xlane.f32.xlu0 %v1189
    %v1191 = vpop.xlane.xlu0 %1190
    %v1192 = vsel %vm600, %v1118, 0.0
    %1193 = vadd.xlane.f32.xlu0 %v1192
    %v1194 = vpop.xlane.xlu0 %1193
    %v1195 = vsel %vm600, %v1119, 0.0
    %1196 = vadd.xlane.f32.xlu0 %v1195
    %v1197 = vpop.xlane.xlu0 %1196
    %v1198 = vsel %vm600, %v1120, 0.0
    %1199 = vadd.xlane.f32.xlu0 %v1198
    %v1200 = vpop.xlane.xlu0 %1199
    %v1201 = vsel %vm600, %v1121, 0.0
    %1202 = vadd.xlane.f32.xlu0 %v1201
    %v1203 = vpop.xlane.xlu0 %1202
    %v1204 = vsel %vm600, %v1122, 0.0
    %1205 = vadd.xlane.f32.xlu0 %v1204
    %v1206 = vpop.xlane.xlu0 %1205
    %v1207 = vsel %vm600, %v1123, 0.0
    %1208 = vadd.xlane.f32.xlu0 %v1207
    %v1209 = vpop.xlane.xlu0 %1208
    %v1210 = vsel %vm600, %v1124, 0.0
    %1211 = vadd.xlane.f32.xlu0 %v1210
    %v1212 = vpop.xlane.xlu0 %1211
    %v1213 = vsel %vm600, %v1125, 0.0
    %1214 = vadd.xlane.f32.xlu0 %v1213
    %v1215 = vpop.xlane.xlu0 %1214
    %v1216 = vsel %vm600, %v1126, 0.0
    %1217 = vadd.xlane.f32.xlu0 %v1216
    %v1218 = vpop.xlane.xlu0 %1217
    %v1219 = vsel %vm600, %v1127, 0.0
    %1220 = vadd.xlane.f32.xlu0 %v1219
    %v1221 = vpop.xlane.xlu0 %1220
    %v1222 = vsel %vm600, %v1128, 0.0
    %1223 = vadd.xlane.f32.xlu0 %v1222
    %v1224 = vpop.xlane.xlu0 %1223
    %v1225 = vsel %vm600, %v1129, 0.0
    %1226 = vadd.xlane.f32.xlu0 %v1225
    %v1227 = vpop.xlane.xlu0 %1226
    %v1228 = vsel %vm600, %v1130, 0.0
    %1229 = vadd.xlane.f32.xlu0 %v1228
    %v1230 = vpop.xlane.xlu0 %1229
    %v1231 = vsel %vm600, %v1131, 0.0
    %1232 = vadd.xlane.f32.xlu0 %v1231
    %v1233 = vpop.xlane.xlu0 %1232
    %v1234 = vsel %vm600, %v1132, 0.0
    %1235 = vadd.xlane.f32.xlu0 %v1234
    %v1236 = vpop.xlane.xlu0 %1235
    %v1237 = vsel %vm600, %v1133, 0.0
    %1238 = vadd.xlane.f32.xlu0 %v1237
    %v1239 = vpop.xlane.xlu0 %1238
    %v1240 = vsel %vm600, %v1134, 0.0
    %1241 = vadd.xlane.f32.xlu0 %v1240
    %v1242 = vpop.xlane.xlu0 %1241
    %v1243 = vsel %vm600, %v1135, 0.0
    %1244 = vadd.xlane.f32.xlu0 %v1243
    %v1245 = vpop.xlane.xlu0 %1244
    %v1246 = vsel %vm600, %v1136, 0.0
    %1247 = vadd.xlane.f32.xlu0 %v1246
    %v1248 = vpop.xlane.xlu0 %1247
    %v1249 = vsel %vm600, %v1137, 0.0
    %1250 = vadd.xlane.f32.xlu0 %v1249
    %v1251 = vpop.xlane.xlu0 %1250
    %v1252 = vsel %vm600, %v1138, 0.0
    %1253 = vadd.xlane.f32.xlu0 %v1252
    %v1254 = vpop.xlane.xlu0 %1253
    %v1255 = vsel %vm600, %v1139, 0.0
    %1256 = vadd.xlane.f32.xlu0 %v1255
    %v1257 = vpop.xlane.xlu0 %1256
    %v1258 = vsel %vm600, %v1140, 0.0
    %1259 = vadd.xlane.f32.xlu0 %v1258
    %v1260 = vpop.xlane.xlu0 %1259
    %v1261 = vsel %vm600, %v1141, 0.0
    %1262 = vadd.xlane.f32.xlu0 %v1261
    %v1263 = vpop.xlane.xlu0 %1262
    %v1264 = vsel %vm600, %v1142, 0.0
    %1265 = vadd.xlane.f32.xlu0 %v1264
    %v1266 = vpop.xlane.xlu0 %1265
    %v1267 = vsel %vm600, %v1143, 0.0
    %1268 = vadd.xlane.f32.xlu0 %v1267
    %v1269 = vpop.xlane.xlu0 %1268
    %v1270 = vsel %vm600, %v1144, 0.0
    %1271 = vadd.xlane.f32.xlu0 %v1270
    %v1272 = vpop.xlane.xlu0 %1271
    %v1273 = vsel %vm600, %v1145, 0.0
    %1274 = vadd.xlane.f32.xlu0 %v1273
    %v1275 = vpop.xlane.xlu0 %1274
    %v1276 = vsel %vm600, %v1146, 0.0
    %1277 = vadd.xlane.f32.xlu0 %v1276
    %v1278 = vpop.xlane.xlu0 %1277
    %v1279 = vsel %vm600, %v1147, 0.0
    %1280 = vadd.xlane.f32.xlu0 %v1279
    %v1281 = vpop.xlane.xlu0 %1280
    %v1282 = vsel %vm600, %v1148, 0.0
    %1283 = vadd.xlane.f32.xlu0 %v1282
    %v1284 = vpop.xlane.xlu0 %1283
    %v1285 = vsel %vm600, %v1149, 0.0
    %1286 = vadd.xlane.f32.xlu0 %v1285
    %v1287 = vpop.xlane.xlu0 %1286
    %v1288 = vsel %vm600, %v1150, 0.0
    %1289 = vadd.xlane.f32.xlu0 %v1288
    %v1290 = vpop.xlane.xlu0 %1289
    %v1291 = vsel %vm600, %v1151, 0.0
    %1292 = vadd.xlane.f32.xlu0 %v1291
    %v1293 = vpop.xlane.xlu0 %1292
    %v1294 = vsel %vm600, %v1152, 0.0
    %1295 = vadd.xlane.f32.xlu0 %v1294
    %v1296 = vpop.xlane.xlu0 %1295
    %s1297 = sld [smem:[#allocation2]]
    %v1298 = vstv %s1297
    %v1299 = vadd.f32 %v1155, %v1298
    %v1300 = vadd.f32 %v1158, %v1298
    %v1301 = vadd.f32 %v1161, %v1298
    %v1302 = vadd.f32 %v1164, %v1298
    %v1303 = vadd.f32 %v1167, %v1298
    %v1304 = vadd.f32 %v1170, %v1298
    %v1305 = vadd.f32 %v1173, %v1298
    %v1306 = vadd.f32 %v1176, %v1298
    %v1307 = vadd.f32 %v1179, %v1298
    %v1308 = vadd.f32 %v1182, %v1298
    %v1309 = vadd.f32 %v1185, %v1298
    %v1310 = vadd.f32 %v1188, %v1298
    %v1311 = vadd.f32 %v1191, %v1298
    %v1312 = vadd.f32 %v1194, %v1298
    %v1313 = vadd.f32 %v1197, %v1298
    %v1314 = vadd.f32 %v1200, %v1298
    %v1315 = vadd.f32 %v1203, %v1298
    %v1316 = vadd.f32 %v1206, %v1298
    %v1317 = vadd.f32 %v1209, %v1298
    %v1318 = vadd.f32 %v1212, %v1298
    %v1319 = vadd.f32 %v1215, %v1298
    %v1320 = vadd.f32 %v1218, %v1298
    %v1321 = vadd.f32 %v1221, %v1298
    %v1322 = vadd.f32 %v1224, %v1298
    %v1323 = vadd.f32 %v1227, %v1298
    %v1324 = vadd.f32 %v1230, %v1298
    %v1325 = vadd.f32 %v1233, %v1298
    %v1326 = vadd.f32 %v1236, %v1298
    %v1327 = vadd.f32 %v1239, %v1298
    %v1328 = vadd.f32 %v1242, %v1298
    %v1329 = vadd.f32 %v1245, %v1298
    %v1330 = vadd.f32 %v1248, %v1298
    %v1331 = vadd.f32 %v1251, %v1298
    %v1332 = vadd.f32 %v1254, %v1298
    %v1333 = vadd.f32 %v1257, %v1298
    %v1334 = vadd.f32 %v1260, %v1298
    %v1335 = vadd.f32 %v1263, %v1298
    %v1336 = vadd.f32 %v1266, %v1298
    %v1337 = vadd.f32 %v1269, %v1298
    %v1338 = vadd.f32 %v1272, %v1298
    %v1339 = vadd.f32 %v1275, %v1298
    %v1340 = vadd.f32 %v1278, %v1298
    %v1341 = vadd.f32 %v1281, %v1298
    %v1342 = vadd.f32 %v1284, %v1298
    %v1343 = vadd.f32 %v1287, %v1298
    %v1344 = vadd.f32 %v1290, %v1298
    %v1345 = vadd.f32 %v1293, %v1298
    %v1346 = vadd.f32 %v1296, %v1298
    %v1395 = vlaneseq
    %v1396 = vshrl.u32 %v1395, 7
    %v1397 = vsub.s32 0, %v1396
    %v1398 = vrot.slane %v1299, %v1397
    %v1399 = vlaneseq
    %v1400 = vshrl.u32 %v1399, 7
    %v1401 = vsub.s32 1, %v1400
    %v1402 = vrot.slane %v1299, %v1401
    %v1403 = vlaneseq
    %v1404 = vshrl.u32 %v1403, 7
    %v1405 = vsub.s32 2, %v1404
    %v1406 = vrot.slane %v1299, %v1405
    %v1407 = vlaneseq
    %v1408 = vshrl.u32 %v1407, 7
    %v1409 = vsub.s32 3, %v1408
    %v1410 = vrot.slane %v1299, %v1409
    %v1411 = vlaneseq
    %v1412 = vshrl.u32 %v1411, 7
    %v1413 = vsub.s32 4, %v1412
    %v1414 = vrot.slane %v1299, %v1413
    %v1415 = vlaneseq
    %v1416 = vshrl.u32 %v1415, 7
    %v1417 = vsub.s32 5, %v1416
    %v1418 = vrot.slane %v1299, %v1417
    %v1419 = vlaneseq
    %v1420 = vshrl.u32 %v1419, 7
    %v1421 = vsub.s32 6, %v1420
    %v1422 = vrot.slane %v1299, %v1421
    %v1423 = vlaneseq
    %v1424 = vshrl.u32 %v1423, 7
    %v1425 = vsub.s32 7, %v1424
    %v1426 = vrot.slane %v1299, %v1425
    %v1427 = vlaneseq
    %v1428 = vshrl.u32 %v1427, 7
    %v1429 = vsub.s32 0, %v1428
    %v1430 = vrot.slane %v1300, %v1429
    %v1431 = vlaneseq
    %v1432 = vshrl.u32 %v1431, 7
    %v1433 = vsub.s32 1, %v1432
    %v1434 = vrot.slane %v1300, %v1433
    %v1435 = vlaneseq
    %v1436 = vshrl.u32 %v1435, 7
    %v1437 = vsub.s32 2, %v1436
    %v1438 = vrot.slane %v1300, %v1437
    %v1439 = vlaneseq
    %v1440 = vshrl.u32 %v1439, 7
    %v1441 = vsub.s32 3, %v1440
    %v1442 = vrot.slane %v1300, %v1441
    %v1443 = vlaneseq
    %v1444 = vshrl.u32 %v1443, 7
    %v1445 = vsub.s32 4, %v1444
    %v1446 = vrot.slane %v1300, %v1445
    %v1447 = vlaneseq
    %v1448 = vshrl.u32 %v1447, 7
    %v1449 = vsub.s32 5, %v1448
    %v1450 = vrot.slane %v1300, %v1449
    %v1451 = vlaneseq
    %v1452 = vshrl.u32 %v1451, 7
    %v1453 = vsub.s32 6, %v1452
    %v1454 = vrot.slane %v1300, %v1453
    %v1455 = vlaneseq
    %v1456 = vshrl.u32 %v1455, 7
    %v1457 = vsub.s32 7, %v1456
    %v1458 = vrot.slane %v1300, %v1457
    %v1459 = vlaneseq
    %v1460 = vshrl.u32 %v1459, 7
    %v1461 = vsub.s32 0, %v1460
    %v1462 = vrot.slane %v1301, %v1461
    %v1463 = vlaneseq
    %v1464 = vshrl.u32 %v1463, 7
    %v1465 = vsub.s32 1, %v1464
    %v1466 = vrot.slane %v1301, %v1465
    %v1467 = vlaneseq
    %v1468 = vshrl.u32 %v1467, 7
    %v1469 = vsub.s32 2, %v1468
    %v1470 = vrot.slane %v1301, %v1469
    %v1471 = vlaneseq
    %v1472 = vshrl.u32 %v1471, 7
    %v1473 = vsub.s32 3, %v1472
    %v1474 = vrot.slane %v1301, %v1473
    %v1475 = vlaneseq
    %v1476 = vshrl.u32 %v1475, 7
    %v1477 = vsub.s32 4, %v1476
    %v1478 = vrot.slane %v1301, %v1477
    %v1479 = vlaneseq
    %v1480 = vshrl.u32 %v1479, 7
    %v1481 = vsub.s32 5, %v1480
    %v1482 = vrot.slane %v1301, %v1481
    %v1483 = vlaneseq
    %v1484 = vshrl.u32 %v1483, 7
    %v1485 = vsub.s32 6, %v1484
    %v1486 = vrot.slane %v1301, %v1485
    %v1487 = vlaneseq
    %v1488 = vshrl.u32 %v1487, 7
    %v1489 = vsub.s32 7, %v1488
    %v1490 = vrot.slane %v1301, %v1489
    %v1491 = vlaneseq
    %v1492 = vshrl.u32 %v1491, 7
    %v1493 = vsub.s32 0, %v1492
    %v1494 = vrot.slane %v1302, %v1493
    %v1495 = vlaneseq
    %v1496 = vshrl.u32 %v1495, 7
    %v1497 = vsub.s32 1, %v1496
    %v1498 = vrot.slane %v1302, %v1497
    %v1499 = vlaneseq
    %v1500 = vshrl.u32 %v1499, 7
    %v1501 = vsub.s32 2, %v1500
    %v1502 = vrot.slane %v1302, %v1501
    %v1503 = vlaneseq
    %v1504 = vshrl.u32 %v1503, 7
    %v1505 = vsub.s32 3, %v1504
    %v1506 = vrot.slane %v1302, %v1505
    %v1507 = vlaneseq
    %v1508 = vshrl.u32 %v1507, 7
    %v1509 = vsub.s32 4, %v1508
    %v1510 = vrot.slane %v1302, %v1509
    %v1511 = vlaneseq
    %v1512 = vshrl.u32 %v1511, 7
    %v1513 = vsub.s32 5, %v1512
    %v1514 = vrot.slane %v1302, %v1513
    %v1515 = vlaneseq
    %v1516 = vshrl.u32 %v1515, 7
    %v1517 = vsub.s32 6, %v1516
    %v1518 = vrot.slane %v1302, %v1517
    %v1519 = vlaneseq
    %v1520 = vshrl.u32 %v1519, 7
    %v1521 = vsub.s32 7, %v1520
    %v1522 = vrot.slane %v1302, %v1521
    %v1523 = vlaneseq
    %v1524 = vshrl.u32 %v1523, 7
    %v1525 = vsub.s32 0, %v1524
    %v1526 = vrot.slane %v1303, %v1525
    %v1527 = vlaneseq
    %v1528 = vshrl.u32 %v1527, 7
    %v1529 = vsub.s32 1, %v1528
    %v1530 = vrot.slane %v1303, %v1529
    %v1531 = vlaneseq
    %v1532 = vshrl.u32 %v1531, 7
    %v1533 = vsub.s32 2, %v1532
    %v1534 = vrot.slane %v1303, %v1533
    %v1535 = vlaneseq
    %v1536 = vshrl.u32 %v1535, 7
    %v1537 = vsub.s32 3, %v1536
    %v1538 = vrot.slane %v1303, %v1537
    %v1539 = vlaneseq
    %v1540 = vshrl.u32 %v1539, 7
    %v1541 = vsub.s32 4, %v1540
    %v1542 = vrot.slane %v1303, %v1541
    %v1543 = vlaneseq
    %v1544 = vshrl.u32 %v1543, 7
    %v1545 = vsub.s32 5, %v1544
    %v1546 = vrot.slane %v1303, %v1545
    %v1547 = vlaneseq
    %v1548 = vshrl.u32 %v1547, 7
    %v1549 = vsub.s32 6, %v1548
    %v1550 = vrot.slane %v1303, %v1549
    %v1551 = vlaneseq
    %v1552 = vshrl.u32 %v1551, 7
    %v1553 = vsub.s32 7, %v1552
    %v1554 = vrot.slane %v1303, %v1553
    %v1555 = vlaneseq
    %v1556 = vshrl.u32 %v1555, 7
    %v1557 = vsub.s32 0, %v1556
    %v1558 = vrot.slane %v1304, %v1557
    %v1559 = vlaneseq
    %v1560 = vshrl.u32 %v1559, 7
    %v1561 = vsub.s32 1, %v1560
    %v1562 = vrot.slane %v1304, %v1561
    %v1563 = vlaneseq
    %v1564 = vshrl.u32 %v1563, 7
    %v1565 = vsub.s32 2, %v1564
    %v1566 = vrot.slane %v1304, %v1565
    %v1567 = vlaneseq
    %v1568 = vshrl.u32 %v1567, 7
    %v1569 = vsub.s32 3, %v1568
    %v1570 = vrot.slane %v1304, %v1569
    %v1571 = vlaneseq
    %v1572 = vshrl.u32 %v1571, 7
    %v1573 = vsub.s32 4, %v1572
    %v1574 = vrot.slane %v1304, %v1573
    %v1575 = vlaneseq
    %v1576 = vshrl.u32 %v1575, 7
    %v1577 = vsub.s32 5, %v1576
    %v1578 = vrot.slane %v1304, %v1577
    %v1579 = vlaneseq
    %v1580 = vshrl.u32 %v1579, 7
    %v1581 = vsub.s32 6, %v1580
    %v1582 = vrot.slane %v1304, %v1581
    %v1583 = vlaneseq
    %v1584 = vshrl.u32 %v1583, 7
    %v1585 = vsub.s32 7, %v1584
    %v1586 = vrot.slane %v1304, %v1585
    %v1587 = vlaneseq
    %v1588 = vshrl.u32 %v1587, 7
    %v1589 = vsub.s32 0, %v1588
    %v1590 = vrot.slane %v1305, %v1589
    %v1591 = vlaneseq
    %v1592 = vshrl.u32 %v1591, 7
    %v1593 = vsub.s32 1, %v1592
    %v1594 = vrot.slane %v1305, %v1593
    %v1595 = vlaneseq
    %v1596 = vshrl.u32 %v1595, 7
    %v1597 = vsub.s32 2, %v1596
    %v1598 = vrot.slane %v1305, %v1597
    %v1599 = vlaneseq
    %v1600 = vshrl.u32 %v1599, 7
    %v1601 = vsub.s32 3, %v1600
    %v1602 = vrot.slane %v1305, %v1601
    %v1603 = vlaneseq
    %v1604 = vshrl.u32 %v1603, 7
    %v1605 = vsub.s32 4, %v1604
    %v1606 = vrot.slane %v1305, %v1605
    %v1607 = vlaneseq
    %v1608 = vshrl.u32 %v1607, 7
    %v1609 = vsub.s32 5, %v1608
    %v1610 = vrot.slane %v1305, %v1609
    %v1611 = vlaneseq
    %v1612 = vshrl.u32 %v1611, 7
    %v1613 = vsub.s32 6, %v1612
    %v1614 = vrot.slane %v1305, %v1613
    %v1615 = vlaneseq
    %v1616 = vshrl.u32 %v1615, 7
    %v1617 = vsub.s32 7, %v1616
    %v1618 = vrot.slane %v1305, %v1617
    %v1619 = vlaneseq
    %v1620 = vshrl.u32 %v1619, 7
    %v1621 = vsub.s32 0, %v1620
    %v1622 = vrot.slane %v1306, %v1621
    %v1623 = vlaneseq
    %v1624 = vshrl.u32 %v1623, 7
    %v1625 = vsub.s32 1, %v1624
    %v1626 = vrot.slane %v1306, %v1625
    %v1627 = vlaneseq
    %v1628 = vshrl.u32 %v1627, 7
    %v1629 = vsub.s32 2, %v1628
    %v1630 = vrot.slane %v1306, %v1629
    %v1631 = vlaneseq
    %v1632 = vshrl.u32 %v1631, 7
    %v1633 = vsub.s32 3, %v1632
    %v1634 = vrot.slane %v1306, %v1633
    %v1635 = vlaneseq
    %v1636 = vshrl.u32 %v1635, 7
    %v1637 = vsub.s32 4, %v1636
    %v1638 = vrot.slane %v1306, %v1637
    %v1639 = vlaneseq
    %v1640 = vshrl.u32 %v1639, 7
    %v1641 = vsub.s32 5, %v1640
    %v1642 = vrot.slane %v1306, %v1641
    %v1643 = vlaneseq
    %v1644 = vshrl.u32 %v1643, 7
    %v1645 = vsub.s32 6, %v1644
    %v1646 = vrot.slane %v1306, %v1645
    %v1647 = vlaneseq
    %v1648 = vshrl.u32 %v1647, 7
    %v1649 = vsub.s32 7, %v1648
    %v1650 = vrot.slane %v1306, %v1649
    %v1651 = vlaneseq
    %v1652 = vshrl.u32 %v1651, 7
    %v1653 = vsub.s32 0, %v1652
    %v1654 = vrot.slane %v1307, %v1653
    %v1655 = vlaneseq
    %v1656 = vshrl.u32 %v1655, 7
    %v1657 = vsub.s32 1, %v1656
    %v1658 = vrot.slane %v1307, %v1657
    %v1659 = vlaneseq
    %v1660 = vshrl.u32 %v1659, 7
    %v1661 = vsub.s32 2, %v1660
    %v1662 = vrot.slane %v1307, %v1661
    %v1663 = vlaneseq
    %v1664 = vshrl.u32 %v1663, 7
    %v1665 = vsub.s32 3, %v1664
    %v1666 = vrot.slane %v1307, %v1665
    %v1667 = vlaneseq
    %v1668 = vshrl.u32 %v1667, 7
    %v1669 = vsub.s32 4, %v1668
    %v1670 = vrot.slane %v1307, %v1669
    %v1671 = vlaneseq
    %v1672 = vshrl.u32 %v1671, 7
    %v1673 = vsub.s32 5, %v1672
    %v1674 = vrot.slane %v1307, %v1673
    %v1675 = vlaneseq
    %v1676 = vshrl.u32 %v1675, 7
    %v1677 = vsub.s32 6, %v1676
    %v1678 = vrot.slane %v1307, %v1677
    %v1679 = vlaneseq
    %v1680 = vshrl.u32 %v1679, 7
    %v1681 = vsub.s32 7, %v1680
    %v1682 = vrot.slane %v1307, %v1681
    %v1683 = vlaneseq
    %v1684 = vshrl.u32 %v1683, 7
    %v1685 = vsub.s32 0, %v1684
    %v1686 = vrot.slane %v1308, %v1685
    %v1687 = vlaneseq
    %v1688 = vshrl.u32 %v1687, 7
    %v1689 = vsub.s32 1, %v1688
    %v1690 = vrot.slane %v1308, %v1689
    %v1691 = vlaneseq
    %v1692 = vshrl.u32 %v1691, 7
    %v1693 = vsub.s32 2, %v1692
    %v1694 = vrot.slane %v1308, %v1693
    %v1695 = vlaneseq
    %v1696 = vshrl.u32 %v1695, 7
    %v1697 = vsub.s32 3, %v1696
    %v1698 = vrot.slane %v1308, %v1697
    %v1699 = vlaneseq
    %v1700 = vshrl.u32 %v1699, 7
    %v1701 = vsub.s32 4, %v1700
    %v1702 = vrot.slane %v1308, %v1701
    %v1703 = vlaneseq
    %v1704 = vshrl.u32 %v1703, 7
    %v1705 = vsub.s32 5, %v1704
    %v1706 = vrot.slane %v1308, %v1705
    %v1707 = vlaneseq
    %v1708 = vshrl.u32 %v1707, 7
    %v1709 = vsub.s32 6, %v1708
    %v1710 = vrot.slane %v1308, %v1709
    %v1711 = vlaneseq
    %v1712 = vshrl.u32 %v1711, 7
    %v1713 = vsub.s32 7, %v1712
    %v1714 = vrot.slane %v1308, %v1713
    %v1715 = vlaneseq
    %v1716 = vshrl.u32 %v1715, 7
    %v1717 = vsub.s32 0, %v1716
    %v1718 = vrot.slane %v1309, %v1717
    %v1719 = vlaneseq
    %v1720 = vshrl.u32 %v1719, 7
    %v1721 = vsub.s32 1, %v1720
    %v1722 = vrot.slane %v1309, %v1721
    %v1723 = vlaneseq
    %v1724 = vshrl.u32 %v1723, 7
    %v1725 = vsub.s32 2, %v1724
    %v1726 = vrot.slane %v1309, %v1725
    %v1727 = vlaneseq
    %v1728 = vshrl.u32 %v1727, 7
    %v1729 = vsub.s32 3, %v1728
    %v1730 = vrot.slane %v1309, %v1729
    %v1731 = vlaneseq
    %v1732 = vshrl.u32 %v1731, 7
    %v1733 = vsub.s32 4, %v1732
    %v1734 = vrot.slane %v1309, %v1733
    %v1735 = vlaneseq
    %v1736 = vshrl.u32 %v1735, 7
    %v1737 = vsub.s32 5, %v1736
    %v1738 = vrot.slane %v1309, %v1737
    %v1739 = vlaneseq
    %v1740 = vshrl.u32 %v1739, 7
    %v1741 = vsub.s32 6, %v1740
    %v1742 = vrot.slane %v1309, %v1741
    %v1743 = vlaneseq
    %v1744 = vshrl.u32 %v1743, 7
    %v1745 = vsub.s32 7, %v1744
    %v1746 = vrot.slane %v1309, %v1745
    %v1747 = vlaneseq
    %v1748 = vshrl.u32 %v1747, 7
    %v1749 = vsub.s32 0, %v1748
    %v1750 = vrot.slane %v1310, %v1749
    %v1751 = vlaneseq
    %v1752 = vshrl.u32 %v1751, 7
    %v1753 = vsub.s32 1, %v1752
    %v1754 = vrot.slane %v1310, %v1753
    %v1755 = vlaneseq
    %v1756 = vshrl.u32 %v1755, 7
    %v1757 = vsub.s32 2, %v1756
    %v1758 = vrot.slane %v1310, %v1757
    %v1759 = vlaneseq
    %v1760 = vshrl.u32 %v1759, 7
    %v1761 = vsub.s32 3, %v1760
    %v1762 = vrot.slane %v1310, %v1761
    %v1763 = vlaneseq
    %v1764 = vshrl.u32 %v1763, 7
    %v1765 = vsub.s32 4, %v1764
    %v1766 = vrot.slane %v1310, %v1765
    %v1767 = vlaneseq
    %v1768 = vshrl.u32 %v1767, 7
    %v1769 = vsub.s32 5, %v1768
    %v1770 = vrot.slane %v1310, %v1769
    %v1771 = vlaneseq
    %v1772 = vshrl.u32 %v1771, 7
    %v1773 = vsub.s32 6, %v1772
    %v1774 = vrot.slane %v1310, %v1773
    %v1775 = vlaneseq
    %v1776 = vshrl.u32 %v1775, 7
    %v1777 = vsub.s32 7, %v1776
    %v1778 = vrot.slane %v1310, %v1777
    %v1779 = vlaneseq
    %v1780 = vshrl.u32 %v1779, 7
    %v1781 = vsub.s32 0, %v1780
    %v1782 = vrot.slane %v1311, %v1781
    %v1783 = vlaneseq
    %v1784 = vshrl.u32 %v1783, 7
    %v1785 = vsub.s32 1, %v1784
    %v1786 = vrot.slane %v1311, %v1785
    %v1787 = vlaneseq
    %v1788 = vshrl.u32 %v1787, 7
    %v1789 = vsub.s32 2, %v1788
    %v1790 = vrot.slane %v1311, %v1789
    %v1791 = vlaneseq
    %v1792 = vshrl.u32 %v1791, 7
    %v1793 = vsub.s32 3, %v1792
    %v1794 = vrot.slane %v1311, %v1793
    %v1795 = vlaneseq
    %v1796 = vshrl.u32 %v1795, 7
    %v1797 = vsub.s32 4, %v1796
    %v1798 = vrot.slane %v1311, %v1797
    %v1799 = vlaneseq
    %v1800 = vshrl.u32 %v1799, 7
    %v1801 = vsub.s32 5, %v1800
    %v1802 = vrot.slane %v1311, %v1801
    %v1803 = vlaneseq
    %v1804 = vshrl.u32 %v1803, 7
    %v1805 = vsub.s32 6, %v1804
    %v1806 = vrot.slane %v1311, %v1805
    %v1807 = vlaneseq
    %v1808 = vshrl.u32 %v1807, 7
    %v1809 = vsub.s32 7, %v1808
    %v1810 = vrot.slane %v1311, %v1809
    %v1811 = vlaneseq
    %v1812 = vshrl.u32 %v1811, 7
    %v1813 = vsub.s32 0, %v1812
    %v1814 = vrot.slane %v1312, %v1813
    %v1815 = vlaneseq
    %v1816 = vshrl.u32 %v1815, 7
    %v1817 = vsub.s32 1, %v1816
    %v1818 = vrot.slane %v1312, %v1817
    %v1819 = vlaneseq
    %v1820 = vshrl.u32 %v1819, 7
    %v1821 = vsub.s32 2, %v1820
    %v1822 = vrot.slane %v1312, %v1821
    %v1823 = vlaneseq
    %v1824 = vshrl.u32 %v1823, 7
    %v1825 = vsub.s32 3, %v1824
    %v1826 = vrot.slane %v1312, %v1825
    %v1827 = vlaneseq
    %v1828 = vshrl.u32 %v1827, 7
    %v1829 = vsub.s32 4, %v1828
    %v1830 = vrot.slane %v1312, %v1829
    %v1831 = vlaneseq
    %v1832 = vshrl.u32 %v1831, 7
    %v1833 = vsub.s32 5, %v1832
    %v1834 = vrot.slane %v1312, %v1833
    %v1835 = vlaneseq
    %v1836 = vshrl.u32 %v1835, 7
    %v1837 = vsub.s32 6, %v1836
    %v1838 = vrot.slane %v1312, %v1837
    %v1839 = vlaneseq
    %v1840 = vshrl.u32 %v1839, 7
    %v1841 = vsub.s32 7, %v1840
    %v1842 = vrot.slane %v1312, %v1841
    %v1843 = vlaneseq
    %v1844 = vshrl.u32 %v1843, 7
    %v1845 = vsub.s32 0, %v1844
    %v1846 = vrot.slane %v1313, %v1845
    %v1847 = vlaneseq
    %v1848 = vshrl.u32 %v1847, 7
    %v1849 = vsub.s32 1, %v1848
    %v1850 = vrot.slane %v1313, %v1849
    %v1851 = vlaneseq
    %v1852 = vshrl.u32 %v1851, 7
    %v1853 = vsub.s32 2, %v1852
    %v1854 = vrot.slane %v1313, %v1853
    %v1855 = vlaneseq
    %v1856 = vshrl.u32 %v1855, 7
    %v1857 = vsub.s32 3, %v1856
    %v1858 = vrot.slane %v1313, %v1857
    %v1859 = vlaneseq
    %v1860 = vshrl.u32 %v1859, 7
    %v1861 = vsub.s32 4, %v1860
    %v1862 = vrot.slane %v1313, %v1861
    %v1863 = vlaneseq
    %v1864 = vshrl.u32 %v1863, 7
    %v1865 = vsub.s32 5, %v1864
    %v1866 = vrot.slane %v1313, %v1865
    %v1867 = vlaneseq
    %v1868 = vshrl.u32 %v1867, 7
    %v1869 = vsub.s32 6, %v1868
    %v1870 = vrot.slane %v1313, %v1869
    %v1871 = vlaneseq
    %v1872 = vshrl.u32 %v1871, 7
    %v1873 = vsub.s32 7, %v1872
    %v1874 = vrot.slane %v1313, %v1873
    %v1875 = vlaneseq
    %v1876 = vshrl.u32 %v1875, 7
    %v1877 = vsub.s32 0, %v1876
    %v1878 = vrot.slane %v1314, %v1877
    %v1879 = vlaneseq
    %v1880 = vshrl.u32 %v1879, 7
    %v1881 = vsub.s32 1, %v1880
    %v1882 = vrot.slane %v1314, %v1881
    %v1883 = vlaneseq
    %v1884 = vshrl.u32 %v1883, 7
    %v1885 = vsub.s32 2, %v1884
    %v1886 = vrot.slane %v1314, %v1885
    %v1887 = vlaneseq
    %v1888 = vshrl.u32 %v1887, 7
    %v1889 = vsub.s32 3, %v1888
    %v1890 = vrot.slane %v1314, %v1889
    %v1891 = vlaneseq
    %v1892 = vshrl.u32 %v1891, 7
    %v1893 = vsub.s32 4, %v1892
    %v1894 = vrot.slane %v1314, %v1893
    %v1895 = vlaneseq
    %v1896 = vshrl.u32 %v1895, 7
    %v1897 = vsub.s32 5, %v1896
    %v1898 = vrot.slane %v1314, %v1897
    %v1899 = vlaneseq
    %v1900 = vshrl.u32 %v1899, 7
    %v1901 = vsub.s32 6, %v1900
    %v1902 = vrot.slane %v1314, %v1901
    %v1903 = vlaneseq
    %v1904 = vshrl.u32 %v1903, 7
    %v1905 = vsub.s32 7, %v1904
    %v1906 = vrot.slane %v1314, %v1905
    %v1907 = vlaneseq
    %v1908 = vshrl.u32 %v1907, 7
    %v1909 = vsub.s32 0, %v1908
    %v1910 = vrot.slane %v1315, %v1909
    %v1911 = vlaneseq
    %v1912 = vshrl.u32 %v1911, 7
    %v1913 = vsub.s32 1, %v1912
    %v1914 = vrot.slane %v1315, %v1913
    %v1915 = vlaneseq
    %v1916 = vshrl.u32 %v1915, 7
    %v1917 = vsub.s32 2, %v1916
    %v1918 = vrot.slane %v1315, %v1917
    %v1919 = vlaneseq
    %v1920 = vshrl.u32 %v1919, 7
    %v1921 = vsub.s32 3, %v1920
    %v1922 = vrot.slane %v1315, %v1921
    %v1923 = vlaneseq
    %v1924 = vshrl.u32 %v1923, 7
    %v1925 = vsub.s32 4, %v1924
    %v1926 = vrot.slane %v1315, %v1925
    %v1927 = vlaneseq
    %v1928 = vshrl.u32 %v1927, 7
    %v1929 = vsub.s32 5, %v1928
    %v1930 = vrot.slane %v1315, %v1929
    %v1931 = vlaneseq
    %v1932 = vshrl.u32 %v1931, 7
    %v1933 = vsub.s32 6, %v1932
    %v1934 = vrot.slane %v1315, %v1933
    %v1935 = vlaneseq
    %v1936 = vshrl.u32 %v1935, 7
    %v1937 = vsub.s32 7, %v1936
    %v1938 = vrot.slane %v1315, %v1937
    %v1939 = vlaneseq
    %v1940 = vshrl.u32 %v1939, 7
    %v1941 = vsub.s32 0, %v1940
    %v1942 = vrot.slane %v1316, %v1941
    %v1943 = vlaneseq
    %v1944 = vshrl.u32 %v1943, 7
    %v1945 = vsub.s32 1, %v1944
    %v1946 = vrot.slane %v1316, %v1945
    %v1947 = vlaneseq
    %v1948 = vshrl.u32 %v1947, 7
    %v1949 = vsub.s32 2, %v1948
    %v1950 = vrot.slane %v1316, %v1949
    %v1951 = vlaneseq
    %v1952 = vshrl.u32 %v1951, 7
    %v1953 = vsub.s32 3, %v1952
    %v1954 = vrot.slane %v1316, %v1953
    %v1955 = vlaneseq
    %v1956 = vshrl.u32 %v1955, 7
    %v1957 = vsub.s32 4, %v1956
    %v1958 = vrot.slane %v1316, %v1957
    %v1959 = vlaneseq
    %v1960 = vshrl.u32 %v1959, 7
    %v1961 = vsub.s32 5, %v1960
    %v1962 = vrot.slane %v1316, %v1961
    %v1963 = vlaneseq
    %v1964 = vshrl.u32 %v1963, 7
    %v1965 = vsub.s32 6, %v1964
    %v1966 = vrot.slane %v1316, %v1965
    %v1967 = vlaneseq
    %v1968 = vshrl.u32 %v1967, 7
    %v1969 = vsub.s32 7, %v1968
    %v1970 = vrot.slane %v1316, %v1969
    %v1971 = vlaneseq
    %v1972 = vshrl.u32 %v1971, 7
    %v1973 = vsub.s32 0, %v1972
    %v1974 = vrot.slane %v1317, %v1973
    %v1975 = vlaneseq
    %v1976 = vshrl.u32 %v1975, 7
    %v1977 = vsub.s32 1, %v1976
    %v1978 = vrot.slane %v1317, %v1977
    %v1979 = vlaneseq
    %v1980 = vshrl.u32 %v1979, 7
    %v1981 = vsub.s32 2, %v1980
    %v1982 = vrot.slane %v1317, %v1981
    %v1983 = vlaneseq
    %v1984 = vshrl.u32 %v1983, 7
    %v1985 = vsub.s32 3, %v1984
    %v1986 = vrot.slane %v1317, %v1985
    %v1987 = vlaneseq
    %v1988 = vshrl.u32 %v1987, 7
    %v1989 = vsub.s32 4, %v1988
    %v1990 = vrot.slane %v1317, %v1989
    %v1991 = vlaneseq
    %v1992 = vshrl.u32 %v1991, 7
    %v1993 = vsub.s32 5, %v1992
    %v1994 = vrot.slane %v1317, %v1993
    %v1995 = vlaneseq
    %v1996 = vshrl.u32 %v1995, 7
    %v1997 = vsub.s32 6, %v1996
    %v1998 = vrot.slane %v1317, %v1997
    %v1999 = vlaneseq
    %v2000 = vshrl.u32 %v1999, 7
    %v2001 = vsub.s32 7, %v2000
    %v2002 = vrot.slane %v1317, %v2001
    %v2003 = vlaneseq
    %v2004 = vshrl.u32 %v2003, 7
    %v2005 = vsub.s32 0, %v2004
    %v2006 = vrot.slane %v1318, %v2005
    %v2007 = vlaneseq
    %v2008 = vshrl.u32 %v2007, 7
    %v2009 = vsub.s32 1, %v2008
    %v2010 = vrot.slane %v1318, %v2009
    %v2011 = vlaneseq
    %v2012 = vshrl.u32 %v2011, 7
    %v2013 = vsub.s32 2, %v2012
    %v2014 = vrot.slane %v1318, %v2013
    %v2015 = vlaneseq
    %v2016 = vshrl.u32 %v2015, 7
    %v2017 = vsub.s32 3, %v2016
    %v2018 = vrot.slane %v1318, %v2017
    %v2019 = vlaneseq
    %v2020 = vshrl.u32 %v2019, 7
    %v2021 = vsub.s32 4, %v2020
    %v2022 = vrot.slane %v1318, %v2021
    %v2023 = vlaneseq
    %v2024 = vshrl.u32 %v2023, 7
    %v2025 = vsub.s32 5, %v2024
    %v2026 = vrot.slane %v1318, %v2025
    %v2027 = vlaneseq
    %v2028 = vshrl.u32 %v2027, 7
    %v2029 = vsub.s32 6, %v2028
    %v2030 = vrot.slane %v1318, %v2029
    %v2031 = vlaneseq
    %v2032 = vshrl.u32 %v2031, 7
    %v2033 = vsub.s32 7, %v2032
    %v2034 = vrot.slane %v1318, %v2033
    %v2035 = vlaneseq
    %v2036 = vshrl.u32 %v2035, 7
    %v2037 = vsub.s32 0, %v2036
    %v2038 = vrot.slane %v1319, %v2037
    %v2039 = vlaneseq
    %v2040 = vshrl.u32 %v2039, 7
    %v2041 = vsub.s32 1, %v2040
    %v2042 = vrot.slane %v1319, %v2041
    %v2043 = vlaneseq
    %v2044 = vshrl.u32 %v2043, 7
    %v2045 = vsub.s32 2, %v2044
    %v2046 = vrot.slane %v1319, %v2045
    %v2047 = vlaneseq
    %v2048 = vshrl.u32 %v2047, 7
    %v2049 = vsub.s32 3, %v2048
    %v2050 = vrot.slane %v1319, %v2049
    %v2051 = vlaneseq
    %v2052 = vshrl.u32 %v2051, 7
    %v2053 = vsub.s32 4, %v2052
    %v2054 = vrot.slane %v1319, %v2053
    %v2055 = vlaneseq
    %v2056 = vshrl.u32 %v2055, 7
    %v2057 = vsub.s32 5, %v2056
    %v2058 = vrot.slane %v1319, %v2057
    %v2059 = vlaneseq
    %v2060 = vshrl.u32 %v2059, 7
    %v2061 = vsub.s32 6, %v2060
    %v2062 = vrot.slane %v1319, %v2061
    %v2063 = vlaneseq
    %v2064 = vshrl.u32 %v2063, 7
    %v2065 = vsub.s32 7, %v2064
    %v2066 = vrot.slane %v1319, %v2065
    %v2067 = vlaneseq
    %v2068 = vshrl.u32 %v2067, 7
    %v2069 = vsub.s32 0, %v2068
    %v2070 = vrot.slane %v1320, %v2069
    %v2071 = vlaneseq
    %v2072 = vshrl.u32 %v2071, 7
    %v2073 = vsub.s32 1, %v2072
    %v2074 = vrot.slane %v1320, %v2073
    %v2075 = vlaneseq
    %v2076 = vshrl.u32 %v2075, 7
    %v2077 = vsub.s32 2, %v2076
    %v2078 = vrot.slane %v1320, %v2077
    %v2079 = vlaneseq
    %v2080 = vshrl.u32 %v2079, 7
    %v2081 = vsub.s32 3, %v2080
    %v2082 = vrot.slane %v1320, %v2081
    %v2083 = vlaneseq
    %v2084 = vshrl.u32 %v2083, 7
    %v2085 = vsub.s32 4, %v2084
    %v2086 = vrot.slane %v1320, %v2085
    %v2087 = vlaneseq
    %v2088 = vshrl.u32 %v2087, 7
    %v2089 = vsub.s32 5, %v2088
    %v2090 = vrot.slane %v1320, %v2089
    %v2091 = vlaneseq
    %v2092 = vshrl.u32 %v2091, 7
    %v2093 = vsub.s32 6, %v2092
    %v2094 = vrot.slane %v1320, %v2093
    %v2095 = vlaneseq
    %v2096 = vshrl.u32 %v2095, 7
    %v2097 = vsub.s32 7, %v2096
    %v2098 = vrot.slane %v1320, %v2097
    %v2099 = vlaneseq
    %v2100 = vshrl.u32 %v2099, 7
    %v2101 = vsub.s32 0, %v2100
    %v2102 = vrot.slane %v1321, %v2101
    %v2103 = vlaneseq
    %v2104 = vshrl.u32 %v2103, 7
    %v2105 = vsub.s32 1, %v2104
    %v2106 = vrot.slane %v1321, %v2105
    %v2107 = vlaneseq
    %v2108 = vshrl.u32 %v2107, 7
    %v2109 = vsub.s32 2, %v2108
    %v2110 = vrot.slane %v1321, %v2109
    %v2111 = vlaneseq
    %v2112 = vshrl.u32 %v2111, 7
    %v2113 = vsub.s32 3, %v2112
    %v2114 = vrot.slane %v1321, %v2113
    %v2115 = vlaneseq
    %v2116 = vshrl.u32 %v2115, 7
    %v2117 = vsub.s32 4, %v2116
    %v2118 = vrot.slane %v1321, %v2117
    %v2119 = vlaneseq
    %v2120 = vshrl.u32 %v2119, 7
    %v2121 = vsub.s32 5, %v2120
    %v2122 = vrot.slane %v1321, %v2121
    %v2123 = vlaneseq
    %v2124 = vshrl.u32 %v2123, 7
    %v2125 = vsub.s32 6, %v2124
    %v2126 = vrot.slane %v1321, %v2125
    %v2127 = vlaneseq
    %v2128 = vshrl.u32 %v2127, 7
    %v2129 = vsub.s32 7, %v2128
    %v2130 = vrot.slane %v1321, %v2129
    %v2131 = vlaneseq
    %v2132 = vshrl.u32 %v2131, 7
    %v2133 = vsub.s32 0, %v2132
    %v2134 = vrot.slane %v1322, %v2133
    %v2135 = vlaneseq
    %v2136 = vshrl.u32 %v2135, 7
    %v2137 = vsub.s32 1, %v2136
    %v2138 = vrot.slane %v1322, %v2137
    %v2139 = vlaneseq
    %v2140 = vshrl.u32 %v2139, 7
    %v2141 = vsub.s32 2, %v2140
    %v2142 = vrot.slane %v1322, %v2141
    %v2143 = vlaneseq
    %v2144 = vshrl.u32 %v2143, 7
    %v2145 = vsub.s32 3, %v2144
    %v2146 = vrot.slane %v1322, %v2145
    %v2147 = vlaneseq
    %v2148 = vshrl.u32 %v2147, 7
    %v2149 = vsub.s32 4, %v2148
    %v2150 = vrot.slane %v1322, %v2149
    %v2151 = vlaneseq
    %v2152 = vshrl.u32 %v2151, 7
    %v2153 = vsub.s32 5, %v2152
    %v2154 = vrot.slane %v1322, %v2153
    %v2155 = vlaneseq
    %v2156 = vshrl.u32 %v2155, 7
    %v2157 = vsub.s32 6, %v2156
    %v2158 = vrot.slane %v1322, %v2157
    %v2159 = vlaneseq
    %v2160 = vshrl.u32 %v2159, 7
    %v2161 = vsub.s32 7, %v2160
    %v2162 = vrot.slane %v1322, %v2161
    %v2163 = vlaneseq
    %v2164 = vshrl.u32 %v2163, 7
    %v2165 = vsub.s32 0, %v2164
    %v2166 = vrot.slane %v1323, %v2165
    %v2167 = vlaneseq
    %v2168 = vshrl.u32 %v2167, 7
    %v2169 = vsub.s32 1, %v2168
    %v2170 = vrot.slane %v1323, %v2169
    %v2171 = vlaneseq
    %v2172 = vshrl.u32 %v2171, 7
    %v2173 = vsub.s32 2, %v2172
    %v2174 = vrot.slane %v1323, %v2173
    %v2175 = vlaneseq
    %v2176 = vshrl.u32 %v2175, 7
    %v2177 = vsub.s32 3, %v2176
    %v2178 = vrot.slane %v1323, %v2177
    %v2179 = vlaneseq
    %v2180 = vshrl.u32 %v2179, 7
    %v2181 = vsub.s32 4, %v2180
    %v2182 = vrot.slane %v1323, %v2181
    %v2183 = vlaneseq
    %v2184 = vshrl.u32 %v2183, 7
    %v2185 = vsub.s32 5, %v2184
    %v2186 = vrot.slane %v1323, %v2185
    %v2187 = vlaneseq
    %v2188 = vshrl.u32 %v2187, 7
    %v2189 = vsub.s32 6, %v2188
    %v2190 = vrot.slane %v1323, %v2189
    %v2191 = vlaneseq
    %v2192 = vshrl.u32 %v2191, 7
    %v2193 = vsub.s32 7, %v2192
    %v2194 = vrot.slane %v1323, %v2193
    %v2195 = vlaneseq
    %v2196 = vshrl.u32 %v2195, 7
    %v2197 = vsub.s32 0, %v2196
    %v2198 = vrot.slane %v1324, %v2197
    %v2199 = vlaneseq
    %v2200 = vshrl.u32 %v2199, 7
    %v2201 = vsub.s32 1, %v2200
    %v2202 = vrot.slane %v1324, %v2201
    %v2203 = vlaneseq
    %v2204 = vshrl.u32 %v2203, 7
    %v2205 = vsub.s32 2, %v2204
    %v2206 = vrot.slane %v1324, %v2205
    %v2207 = vlaneseq
    %v2208 = vshrl.u32 %v2207, 7
    %v2209 = vsub.s32 3, %v2208
    %v2210 = vrot.slane %v1324, %v2209
    %v2211 = vlaneseq
    %v2212 = vshrl.u32 %v2211, 7
    %v2213 = vsub.s32 4, %v2212
    %v2214 = vrot.slane %v1324, %v2213
    %v2215 = vlaneseq
    %v2216 = vshrl.u32 %v2215, 7
    %v2217 = vsub.s32 5, %v2216
    %v2218 = vrot.slane %v1324, %v2217
    %v2219 = vlaneseq
    %v2220 = vshrl.u32 %v2219, 7
    %v2221 = vsub.s32 6, %v2220
    %v2222 = vrot.slane %v1324, %v2221
    %v2223 = vlaneseq
    %v2224 = vshrl.u32 %v2223, 7
    %v2225 = vsub.s32 7, %v2224
    %v2226 = vrot.slane %v1324, %v2225
    %v2227 = vlaneseq
    %v2228 = vshrl.u32 %v2227, 7
    %v2229 = vsub.s32 0, %v2228
    %v2230 = vrot.slane %v1325, %v2229
    %v2231 = vlaneseq
    %v2232 = vshrl.u32 %v2231, 7
    %v2233 = vsub.s32 1, %v2232
    %v2234 = vrot.slane %v1325, %v2233
    %v2235 = vlaneseq
    %v2236 = vshrl.u32 %v2235, 7
    %v2237 = vsub.s32 2, %v2236
    %v2238 = vrot.slane %v1325, %v2237
    %v2239 = vlaneseq
    %v2240 = vshrl.u32 %v2239, 7
    %v2241 = vsub.s32 3, %v2240
    %v2242 = vrot.slane %v1325, %v2241
    %v2243 = vlaneseq
    %v2244 = vshrl.u32 %v2243, 7
    %v2245 = vsub.s32 4, %v2244
    %v2246 = vrot.slane %v1325, %v2245
    %v2247 = vlaneseq
    %v2248 = vshrl.u32 %v2247, 7
    %v2249 = vsub.s32 5, %v2248
    %v2250 = vrot.slane %v1325, %v2249
    %v2251 = vlaneseq
    %v2252 = vshrl.u32 %v2251, 7
    %v2253 = vsub.s32 6, %v2252
    %v2254 = vrot.slane %v1325, %v2253
    %v2255 = vlaneseq
    %v2256 = vshrl.u32 %v2255, 7
    %v2257 = vsub.s32 7, %v2256
    %v2258 = vrot.slane %v1325, %v2257
    %v2259 = vlaneseq
    %v2260 = vshrl.u32 %v2259, 7
    %v2261 = vsub.s32 0, %v2260
    %v2262 = vrot.slane %v1326, %v2261
    %v2263 = vlaneseq
    %v2264 = vshrl.u32 %v2263, 7
    %v2265 = vsub.s32 1, %v2264
    %v2266 = vrot.slane %v1326, %v2265
    %v2267 = vlaneseq
    %v2268 = vshrl.u32 %v2267, 7
    %v2269 = vsub.s32 2, %v2268
    %v2270 = vrot.slane %v1326, %v2269
    %v2271 = vlaneseq
    %v2272 = vshrl.u32 %v2271, 7
    %v2273 = vsub.s32 3, %v2272
    %v2274 = vrot.slane %v1326, %v2273
    %v2275 = vlaneseq
    %v2276 = vshrl.u32 %v2275, 7
    %v2277 = vsub.s32 4, %v2276
    %v2278 = vrot.slane %v1326, %v2277
    %v2279 = vlaneseq
    %v2280 = vshrl.u32 %v2279, 7
    %v2281 = vsub.s32 5, %v2280
    %v2282 = vrot.slane %v1326, %v2281
    %v2283 = vlaneseq
    %v2284 = vshrl.u32 %v2283, 7
    %v2285 = vsub.s32 6, %v2284
    %v2286 = vrot.slane %v1326, %v2285
    %v2287 = vlaneseq
    %v2288 = vshrl.u32 %v2287, 7
    %v2289 = vsub.s32 7, %v2288
    %v2290 = vrot.slane %v1326, %v2289
    %v2291 = vlaneseq
    %v2292 = vshrl.u32 %v2291, 7
    %v2293 = vsub.s32 0, %v2292
    %v2294 = vrot.slane %v1327, %v2293
    %v2295 = vlaneseq
    %v2296 = vshrl.u32 %v2295, 7
    %v2297 = vsub.s32 1, %v2296
    %v2298 = vrot.slane %v1327, %v2297
    %v2299 = vlaneseq
    %v2300 = vshrl.u32 %v2299, 7
    %v2301 = vsub.s32 2, %v2300
    %v2302 = vrot.slane %v1327, %v2301
    %v2303 = vlaneseq
    %v2304 = vshrl.u32 %v2303, 7
    %v2305 = vsub.s32 3, %v2304
    %v2306 = vrot.slane %v1327, %v2305
    %v2307 = vlaneseq
    %v2308 = vshrl.u32 %v2307, 7
    %v2309 = vsub.s32 4, %v2308
    %v2310 = vrot.slane %v1327, %v2309
    %v2311 = vlaneseq
    %v2312 = vshrl.u32 %v2311, 7
    %v2313 = vsub.s32 5, %v2312
    %v2314 = vrot.slane %v1327, %v2313
    %v2315 = vlaneseq
    %v2316 = vshrl.u32 %v2315, 7
    %v2317 = vsub.s32 6, %v2316
    %v2318 = vrot.slane %v1327, %v2317
    %v2319 = vlaneseq
    %v2320 = vshrl.u32 %v2319, 7
    %v2321 = vsub.s32 7, %v2320
    %v2322 = vrot.slane %v1327, %v2321
    %v2323 = vlaneseq
    %v2324 = vshrl.u32 %v2323, 7
    %v2325 = vsub.s32 0, %v2324
    %v2326 = vrot.slane %v1328, %v2325
    %v2327 = vlaneseq
    %v2328 = vshrl.u32 %v2327, 7
    %v2329 = vsub.s32 1, %v2328
    %v2330 = vrot.slane %v1328, %v2329
    %v2331 = vlaneseq
    %v2332 = vshrl.u32 %v2331, 7
    %v2333 = vsub.s32 2, %v2332
    %v2334 = vrot.slane %v1328, %v2333
    %v2335 = vlaneseq
    %v2336 = vshrl.u32 %v2335, 7
    %v2337 = vsub.s32 3, %v2336
    %v2338 = vrot.slane %v1328, %v2337
    %v2339 = vlaneseq
    %v2340 = vshrl.u32 %v2339, 7
    %v2341 = vsub.s32 4, %v2340
    %v2342 = vrot.slane %v1328, %v2341
    %v2343 = vlaneseq
    %v2344 = vshrl.u32 %v2343, 7
    %v2345 = vsub.s32 5, %v2344
    %v2346 = vrot.slane %v1328, %v2345
    %v2347 = vlaneseq
    %v2348 = vshrl.u32 %v2347, 7
    %v2349 = vsub.s32 6, %v2348
    %v2350 = vrot.slane %v1328, %v2349
    %v2351 = vlaneseq
    %v2352 = vshrl.u32 %v2351, 7
    %v2353 = vsub.s32 7, %v2352
    %v2354 = vrot.slane %v1328, %v2353
    %v2355 = vlaneseq
    %v2356 = vshrl.u32 %v2355, 7
    %v2357 = vsub.s32 0, %v2356
    %v2358 = vrot.slane %v1329, %v2357
    %v2359 = vlaneseq
    %v2360 = vshrl.u32 %v2359, 7
    %v2361 = vsub.s32 1, %v2360
    %v2362 = vrot.slane %v1329, %v2361
    %v2363 = vlaneseq
    %v2364 = vshrl.u32 %v2363, 7
    %v2365 = vsub.s32 2, %v2364
    %v2366 = vrot.slane %v1329, %v2365
    %v2367 = vlaneseq
    %v2368 = vshrl.u32 %v2367, 7
    %v2369 = vsub.s32 3, %v2368
    %v2370 = vrot.slane %v1329, %v2369
    %v2371 = vlaneseq
    %v2372 = vshrl.u32 %v2371, 7
    %v2373 = vsub.s32 4, %v2372
    %v2374 = vrot.slane %v1329, %v2373
    %v2375 = vlaneseq
    %v2376 = vshrl.u32 %v2375, 7
    %v2377 = vsub.s32 5, %v2376
    %v2378 = vrot.slane %v1329, %v2377
    %v2379 = vlaneseq
    %v2380 = vshrl.u32 %v2379, 7
    %v2381 = vsub.s32 6, %v2380
    %v2382 = vrot.slane %v1329, %v2381
    %v2383 = vlaneseq
    %v2384 = vshrl.u32 %v2383, 7
    %v2385 = vsub.s32 7, %v2384
    %v2386 = vrot.slane %v1329, %v2385
    %v2387 = vlaneseq
    %v2388 = vshrl.u32 %v2387, 7
    %v2389 = vsub.s32 0, %v2388
    %v2390 = vrot.slane %v1330, %v2389
    %v2391 = vlaneseq
    %v2392 = vshrl.u32 %v2391, 7
    %v2393 = vsub.s32 1, %v2392
    %v2394 = vrot.slane %v1330, %v2393
    %v2395 = vlaneseq
    %v2396 = vshrl.u32 %v2395, 7
    %v2397 = vsub.s32 2, %v2396
    %v2398 = vrot.slane %v1330, %v2397
    %v2399 = vlaneseq
    %v2400 = vshrl.u32 %v2399, 7
    %v2401 = vsub.s32 3, %v2400
    %v2402 = vrot.slane %v1330, %v2401
    %v2403 = vlaneseq
    %v2404 = vshrl.u32 %v2403, 7
    %v2405 = vsub.s32 4, %v2404
    %v2406 = vrot.slane %v1330, %v2405
    %v2407 = vlaneseq
    %v2408 = vshrl.u32 %v2407, 7
    %v2409 = vsub.s32 5, %v2408
    %v2410 = vrot.slane %v1330, %v2409
    %v2411 = vlaneseq
    %v2412 = vshrl.u32 %v2411, 7
    %v2413 = vsub.s32 6, %v2412
    %v2414 = vrot.slane %v1330, %v2413
    %v2415 = vlaneseq
    %v2416 = vshrl.u32 %v2415, 7
    %v2417 = vsub.s32 7, %v2416
    %v2418 = vrot.slane %v1330, %v2417
    %v2419 = vlaneseq
    %v2420 = vshrl.u32 %v2419, 7
    %v2421 = vsub.s32 0, %v2420
    %v2422 = vrot.slane %v1331, %v2421
    %v2423 = vlaneseq
    %v2424 = vshrl.u32 %v2423, 7
    %v2425 = vsub.s32 1, %v2424
    %v2426 = vrot.slane %v1331, %v2425
    %v2427 = vlaneseq
    %v2428 = vshrl.u32 %v2427, 7
    %v2429 = vsub.s32 2, %v2428
    %v2430 = vrot.slane %v1331, %v2429
    %v2431 = vlaneseq
    %v2432 = vshrl.u32 %v2431, 7
    %v2433 = vsub.s32 3, %v2432
    %v2434 = vrot.slane %v1331, %v2433
    %v2435 = vlaneseq
    %v2436 = vshrl.u32 %v2435, 7
    %v2437 = vsub.s32 4, %v2436
    %v2438 = vrot.slane %v1331, %v2437
    %v2439 = vlaneseq
    %v2440 = vshrl.u32 %v2439, 7
    %v2441 = vsub.s32 5, %v2440
    %v2442 = vrot.slane %v1331, %v2441
    %v2443 = vlaneseq
    %v2444 = vshrl.u32 %v2443, 7
    %v2445 = vsub.s32 6, %v2444
    %v2446 = vrot.slane %v1331, %v2445
    %v2447 = vlaneseq
    %v2448 = vshrl.u32 %v2447, 7
    %v2449 = vsub.s32 7, %v2448
    %v2450 = vrot.slane %v1331, %v2449
    %v2451 = vlaneseq
    %v2452 = vshrl.u32 %v2451, 7
    %v2453 = vsub.s32 0, %v2452
    %v2454 = vrot.slane %v1332, %v2453
    %v2455 = vlaneseq
    %v2456 = vshrl.u32 %v2455, 7
    %v2457 = vsub.s32 1, %v2456
    %v2458 = vrot.slane %v1332, %v2457
    %v2459 = vlaneseq
    %v2460 = vshrl.u32 %v2459, 7
    %v2461 = vsub.s32 2, %v2460
    %v2462 = vrot.slane %v1332, %v2461
    %v2463 = vlaneseq
    %v2464 = vshrl.u32 %v2463, 7
    %v2465 = vsub.s32 3, %v2464
    %v2466 = vrot.slane %v1332, %v2465
    %v2467 = vlaneseq
    %v2468 = vshrl.u32 %v2467, 7
    %v2469 = vsub.s32 4, %v2468
    %v2470 = vrot.slane %v1332, %v2469
    %v2471 = vlaneseq
    %v2472 = vshrl.u32 %v2471, 7
    %v2473 = vsub.s32 5, %v2472
    %v2474 = vrot.slane %v1332, %v2473
    %v2475 = vlaneseq
    %v2476 = vshrl.u32 %v2475, 7
    %v2477 = vsub.s32 6, %v2476
    %v2478 = vrot.slane %v1332, %v2477
    %v2479 = vlaneseq
    %v2480 = vshrl.u32 %v2479, 7
    %v2481 = vsub.s32 7, %v2480
    %v2482 = vrot.slane %v1332, %v2481
    %v2483 = vlaneseq
    %v2484 = vshrl.u32 %v2483, 7
    %v2485 = vsub.s32 0, %v2484
    %v2486 = vrot.slane %v1333, %v2485
    %v2487 = vlaneseq
    %v2488 = vshrl.u32 %v2487, 7
    %v2489 = vsub.s32 1, %v2488
    %v2490 = vrot.slane %v1333, %v2489
    %v2491 = vlaneseq
    %v2492 = vshrl.u32 %v2491, 7
    %v2493 = vsub.s32 2, %v2492
    %v2494 = vrot.slane %v1333, %v2493
    %v2495 = vlaneseq
    %v2496 = vshrl.u32 %v2495, 7
    %v2497 = vsub.s32 3, %v2496
    %v2498 = vrot.slane %v1333, %v2497
    %v2499 = vlaneseq
    %v2500 = vshrl.u32 %v2499, 7
    %v2501 = vsub.s32 4, %v2500
    %v2502 = vrot.slane %v1333, %v2501
    %v2503 = vlaneseq
    %v2504 = vshrl.u32 %v2503, 7
    %v2505 = vsub.s32 5, %v2504
    %v2506 = vrot.slane %v1333, %v2505
    %v2507 = vlaneseq
    %v2508 = vshrl.u32 %v2507, 7
    %v2509 = vsub.s32 6, %v2508
    %v2510 = vrot.slane %v1333, %v2509
    %v2511 = vlaneseq
    %v2512 = vshrl.u32 %v2511, 7
    %v2513 = vsub.s32 7, %v2512
    %v2514 = vrot.slane %v1333, %v2513
    %v2515 = vlaneseq
    %v2516 = vshrl.u32 %v2515, 7
    %v2517 = vsub.s32 0, %v2516
    %v2518 = vrot.slane %v1334, %v2517
    %v2519 = vlaneseq
    %v2520 = vshrl.u32 %v2519, 7
    %v2521 = vsub.s32 1, %v2520
    %v2522 = vrot.slane %v1334, %v2521
    %v2523 = vlaneseq
    %v2524 = vshrl.u32 %v2523, 7
    %v2525 = vsub.s32 2, %v2524
    %v2526 = vrot.slane %v1334, %v2525
    %v2527 = vlaneseq
    %v2528 = vshrl.u32 %v2527, 7
    %v2529 = vsub.s32 3, %v2528
    %v2530 = vrot.slane %v1334, %v2529
    %v2531 = vlaneseq
    %v2532 = vshrl.u32 %v2531, 7
    %v2533 = vsub.s32 4, %v2532
    %v2534 = vrot.slane %v1334, %v2533
    %v2535 = vlaneseq
    %v2536 = vshrl.u32 %v2535, 7
    %v2537 = vsub.s32 5, %v2536
    %v2538 = vrot.slane %v1334, %v2537
    %v2539 = vlaneseq
    %v2540 = vshrl.u32 %v2539, 7
    %v2541 = vsub.s32 6, %v2540
    %v2542 = vrot.slane %v1334, %v2541
    %v2543 = vlaneseq
    %v2544 = vshrl.u32 %v2543, 7
    %v2545 = vsub.s32 7, %v2544
    %v2546 = vrot.slane %v1334, %v2545
    %v2547 = vlaneseq
    %v2548 = vshrl.u32 %v2547, 7
    %v2549 = vsub.s32 0, %v2548
    %v2550 = vrot.slane %v1335, %v2549
    %v2551 = vlaneseq
    %v2552 = vshrl.u32 %v2551, 7
    %v2553 = vsub.s32 1, %v2552
    %v2554 = vrot.slane %v1335, %v2553
    %v2555 = vlaneseq
    %v2556 = vshrl.u32 %v2555, 7
    %v2557 = vsub.s32 2, %v2556
    %v2558 = vrot.slane %v1335, %v2557
    %v2559 = vlaneseq
    %v2560 = vshrl.u32 %v2559, 7
    %v2561 = vsub.s32 3, %v2560
    %v2562 = vrot.slane %v1335, %v2561
    %v2563 = vlaneseq
    %v2564 = vshrl.u32 %v2563, 7
    %v2565 = vsub.s32 4, %v2564
    %v2566 = vrot.slane %v1335, %v2565
    %v2567 = vlaneseq
    %v2568 = vshrl.u32 %v2567, 7
    %v2569 = vsub.s32 5, %v2568
    %v2570 = vrot.slane %v1335, %v2569
    %v2571 = vlaneseq
    %v2572 = vshrl.u32 %v2571, 7
    %v2573 = vsub.s32 6, %v2572
    %v2574 = vrot.slane %v1335, %v2573
    %v2575 = vlaneseq
    %v2576 = vshrl.u32 %v2575, 7
    %v2577 = vsub.s32 7, %v2576
    %v2578 = vrot.slane %v1335, %v2577
    %v2579 = vlaneseq
    %v2580 = vshrl.u32 %v2579, 7
    %v2581 = vsub.s32 0, %v2580
    %v2582 = vrot.slane %v1336, %v2581
    %v2583 = vlaneseq
    %v2584 = vshrl.u32 %v2583, 7
    %v2585 = vsub.s32 1, %v2584
    %v2586 = vrot.slane %v1336, %v2585
    %v2587 = vlaneseq
    %v2588 = vshrl.u32 %v2587, 7
    %v2589 = vsub.s32 2, %v2588
    %v2590 = vrot.slane %v1336, %v2589
    %v2591 = vlaneseq
    %v2592 = vshrl.u32 %v2591, 7
    %v2593 = vsub.s32 3, %v2592
    %v2594 = vrot.slane %v1336, %v2593
    %v2595 = vlaneseq
    %v2596 = vshrl.u32 %v2595, 7
    %v2597 = vsub.s32 4, %v2596
    %v2598 = vrot.slane %v1336, %v2597
    %v2599 = vlaneseq
    %v2600 = vshrl.u32 %v2599, 7
    %v2601 = vsub.s32 5, %v2600
    %v2602 = vrot.slane %v1336, %v2601
    %v2603 = vlaneseq
    %v2604 = vshrl.u32 %v2603, 7
    %v2605 = vsub.s32 6, %v2604
    %v2606 = vrot.slane %v1336, %v2605
    %v2607 = vlaneseq
    %v2608 = vshrl.u32 %v2607, 7
    %v2609 = vsub.s32 7, %v2608
    %v2610 = vrot.slane %v1336, %v2609
    %v2611 = vlaneseq
    %v2612 = vshrl.u32 %v2611, 7
    %v2613 = vsub.s32 0, %v2612
    %v2614 = vrot.slane %v1337, %v2613
    %v2615 = vlaneseq
    %v2616 = vshrl.u32 %v2615, 7
    %v2617 = vsub.s32 1, %v2616
    %v2618 = vrot.slane %v1337, %v2617
    %v2619 = vlaneseq
    %v2620 = vshrl.u32 %v2619, 7
    %v2621 = vsub.s32 2, %v2620
    %v2622 = vrot.slane %v1337, %v2621
    %v2623 = vlaneseq
    %v2624 = vshrl.u32 %v2623, 7
    %v2625 = vsub.s32 3, %v2624
    %v2626 = vrot.slane %v1337, %v2625
    %v2627 = vlaneseq
    %v2628 = vshrl.u32 %v2627, 7
    %v2629 = vsub.s32 4, %v2628
    %v2630 = vrot.slane %v1337, %v2629
    %v2631 = vlaneseq
    %v2632 = vshrl.u32 %v2631, 7
    %v2633 = vsub.s32 5, %v2632
    %v2634 = vrot.slane %v1337, %v2633
    %v2635 = vlaneseq
    %v2636 = vshrl.u32 %v2635, 7
    %v2637 = vsub.s32 6, %v2636
    %v2638 = vrot.slane %v1337, %v2637
    %v2639 = vlaneseq
    %v2640 = vshrl.u32 %v2639, 7
    %v2641 = vsub.s32 7, %v2640
    %v2642 = vrot.slane %v1337, %v2641
    %v2643 = vlaneseq
    %v2644 = vshrl.u32 %v2643, 7
    %v2645 = vsub.s32 0, %v2644
    %v2646 = vrot.slane %v1338, %v2645
    %v2647 = vlaneseq
    %v2648 = vshrl.u32 %v2647, 7
    %v2649 = vsub.s32 1, %v2648
    %v2650 = vrot.slane %v1338, %v2649
    %v2651 = vlaneseq
    %v2652 = vshrl.u32 %v2651, 7
    %v2653 = vsub.s32 2, %v2652
    %v2654 = vrot.slane %v1338, %v2653
    %v2655 = vlaneseq
    %v2656 = vshrl.u32 %v2655, 7
    %v2657 = vsub.s32 3, %v2656
    %v2658 = vrot.slane %v1338, %v2657
    %v2659 = vlaneseq
    %v2660 = vshrl.u32 %v2659, 7
    %v2661 = vsub.s32 4, %v2660
    %v2662 = vrot.slane %v1338, %v2661
    %v2663 = vlaneseq
    %v2664 = vshrl.u32 %v2663, 7
    %v2665 = vsub.s32 5, %v2664
    %v2666 = vrot.slane %v1338, %v2665
    %v2667 = vlaneseq
    %v2668 = vshrl.u32 %v2667, 7
    %v2669 = vsub.s32 6, %v2668
    %v2670 = vrot.slane %v1338, %v2669
    %v2671 = vlaneseq
    %v2672 = vshrl.u32 %v2671, 7
    %v2673 = vsub.s32 7, %v2672
    %v2674 = vrot.slane %v1338, %v2673
    %v2675 = vlaneseq
    %v2676 = vshrl.u32 %v2675, 7
    %v2677 = vsub.s32 0, %v2676
    %v2678 = vrot.slane %v1339, %v2677
    %v2679 = vlaneseq
    %v2680 = vshrl.u32 %v2679, 7
    %v2681 = vsub.s32 1, %v2680
    %v2682 = vrot.slane %v1339, %v2681
    %v2683 = vlaneseq
    %v2684 = vshrl.u32 %v2683, 7
    %v2685 = vsub.s32 2, %v2684
    %v2686 = vrot.slane %v1339, %v2685
    %v2687 = vlaneseq
    %v2688 = vshrl.u32 %v2687, 7
    %v2689 = vsub.s32 3, %v2688
    %v2690 = vrot.slane %v1339, %v2689
    %v2691 = vlaneseq
    %v2692 = vshrl.u32 %v2691, 7
    %v2693 = vsub.s32 4, %v2692
    %v2694 = vrot.slane %v1339, %v2693
    %v2695 = vlaneseq
    %v2696 = vshrl.u32 %v2695, 7
    %v2697 = vsub.s32 5, %v2696
    %v2698 = vrot.slane %v1339, %v2697
    %v2699 = vlaneseq
    %v2700 = vshrl.u32 %v2699, 7
    %v2701 = vsub.s32 6, %v2700
    %v2702 = vrot.slane %v1339, %v2701
    %v2703 = vlaneseq
    %v2704 = vshrl.u32 %v2703, 7
    %v2705 = vsub.s32 7, %v2704
    %v2706 = vrot.slane %v1339, %v2705
    %v2707 = vlaneseq
    %v2708 = vshrl.u32 %v2707, 7
    %v2709 = vsub.s32 0, %v2708
    %v2710 = vrot.slane %v1340, %v2709
    %v2711 = vlaneseq
    %v2712 = vshrl.u32 %v2711, 7
    %v2713 = vsub.s32 1, %v2712
    %v2714 = vrot.slane %v1340, %v2713
    %v2715 = vlaneseq
    %v2716 = vshrl.u32 %v2715, 7
    %v2717 = vsub.s32 2, %v2716
    %v2718 = vrot.slane %v1340, %v2717
    %v2719 = vlaneseq
    %v2720 = vshrl.u32 %v2719, 7
    %v2721 = vsub.s32 3, %v2720
    %v2722 = vrot.slane %v1340, %v2721
    %v2723 = vlaneseq
    %v2724 = vshrl.u32 %v2723, 7
    %v2725 = vsub.s32 4, %v2724
    %v2726 = vrot.slane %v1340, %v2725
    %v2727 = vlaneseq
    %v2728 = vshrl.u32 %v2727, 7
    %v2729 = vsub.s32 5, %v2728
    %v2730 = vrot.slane %v1340, %v2729
    %v2731 = vlaneseq
    %v2732 = vshrl.u32 %v2731, 7
    %v2733 = vsub.s32 6, %v2732
    %v2734 = vrot.slane %v1340, %v2733
    %v2735 = vlaneseq
    %v2736 = vshrl.u32 %v2735, 7
    %v2737 = vsub.s32 7, %v2736
    %v2738 = vrot.slane %v1340, %v2737
    %v2739 = vlaneseq
    %v2740 = vshrl.u32 %v2739, 7
    %v2741 = vsub.s32 0, %v2740
    %v2742 = vrot.slane %v1341, %v2741
    %v2743 = vlaneseq
    %v2744 = vshrl.u32 %v2743, 7
    %v2745 = vsub.s32 1, %v2744
    %v2746 = vrot.slane %v1341, %v2745
    %v2747 = vlaneseq
    %v2748 = vshrl.u32 %v2747, 7
    %v2749 = vsub.s32 2, %v2748
    %v2750 = vrot.slane %v1341, %v2749
    %v2751 = vlaneseq
    %v2752 = vshrl.u32 %v2751, 7
    %v2753 = vsub.s32 3, %v2752
    %v2754 = vrot.slane %v1341, %v2753
    %v2755 = vlaneseq
    %v2756 = vshrl.u32 %v2755, 7
    %v2757 = vsub.s32 4, %v2756
    %v2758 = vrot.slane %v1341, %v2757
    %v2759 = vlaneseq
    %v2760 = vshrl.u32 %v2759, 7
    %v2761 = vsub.s32 5, %v2760
    %v2762 = vrot.slane %v1341, %v2761
    %v2763 = vlaneseq
    %v2764 = vshrl.u32 %v2763, 7
    %v2765 = vsub.s32 6, %v2764
    %v2766 = vrot.slane %v1341, %v2765
    %v2767 = vlaneseq
    %v2768 = vshrl.u32 %v2767, 7
    %v2769 = vsub.s32 7, %v2768
    %v2770 = vrot.slane %v1341, %v2769
    %v2771 = vlaneseq
    %v2772 = vshrl.u32 %v2771, 7
    %v2773 = vsub.s32 0, %v2772
    %v2774 = vrot.slane %v1342, %v2773
    %v2775 = vlaneseq
    %v2776 = vshrl.u32 %v2775, 7
    %v2777 = vsub.s32 1, %v2776
    %v2778 = vrot.slane %v1342, %v2777
    %v2779 = vlaneseq
    %v2780 = vshrl.u32 %v2779, 7
    %v2781 = vsub.s32 2, %v2780
    %v2782 = vrot.slane %v1342, %v2781
    %v2783 = vlaneseq
    %v2784 = vshrl.u32 %v2783, 7
    %v2785 = vsub.s32 3, %v2784
    %v2786 = vrot.slane %v1342, %v2785
    %v2787 = vlaneseq
    %v2788 = vshrl.u32 %v2787, 7
    %v2789 = vsub.s32 4, %v2788
    %v2790 = vrot.slane %v1342, %v2789
    %v2791 = vlaneseq
    %v2792 = vshrl.u32 %v2791, 7
    %v2793 = vsub.s32 5, %v2792
    %v2794 = vrot.slane %v1342, %v2793
    %v2795 = vlaneseq
    %v2796 = vshrl.u32 %v2795, 7
    %v2797 = vsub.s32 6, %v2796
    %v2798 = vrot.slane %v1342, %v2797
    %v2799 = vlaneseq
    %v2800 = vshrl.u32 %v2799, 7
    %v2801 = vsub.s32 7, %v2800
    %v2802 = vrot.slane %v1342, %v2801
    %v2803 = vlaneseq
    %v2804 = vshrl.u32 %v2803, 7
    %v2805 = vsub.s32 0, %v2804
    %v2806 = vrot.slane %v1343, %v2805
    %v2807 = vlaneseq
    %v2808 = vshrl.u32 %v2807, 7
    %v2809 = vsub.s32 1, %v2808
    %v2810 = vrot.slane %v1343, %v2809
    %v2811 = vlaneseq
    %v2812 = vshrl.u32 %v2811, 7
    %v2813 = vsub.s32 2, %v2812
    %v2814 = vrot.slane %v1343, %v2813
    %v2815 = vlaneseq
    %v2816 = vshrl.u32 %v2815, 7
    %v2817 = vsub.s32 3, %v2816
    %v2818 = vrot.slane %v1343, %v2817
    %v2819 = vlaneseq
    %v2820 = vshrl.u32 %v2819, 7
    %v2821 = vsub.s32 4, %v2820
    %v2822 = vrot.slane %v1343, %v2821
    %v2823 = vlaneseq
    %v2824 = vshrl.u32 %v2823, 7
    %v2825 = vsub.s32 5, %v2824
    %v2826 = vrot.slane %v1343, %v2825
    %v2827 = vlaneseq
    %v2828 = vshrl.u32 %v2827, 7
    %v2829 = vsub.s32 6, %v2828
    %v2830 = vrot.slane %v1343, %v2829
    %v2831 = vlaneseq
    %v2832 = vshrl.u32 %v2831, 7
    %v2833 = vsub.s32 7, %v2832
    %v2834 = vrot.slane %v1343, %v2833
    %v2835 = vlaneseq
    %v2836 = vshrl.u32 %v2835, 7
    %v2837 = vsub.s32 0, %v2836
    %v2838 = vrot.slane %v1344, %v2837
    %v2839 = vlaneseq
    %v2840 = vshrl.u32 %v2839, 7
    %v2841 = vsub.s32 1, %v2840
    %v2842 = vrot.slane %v1344, %v2841
    %v2843 = vlaneseq
    %v2844 = vshrl.u32 %v2843, 7
    %v2845 = vsub.s32 2, %v2844
    %v2846 = vrot.slane %v1344, %v2845
    %v2847 = vlaneseq
    %v2848 = vshrl.u32 %v2847, 7
    %v2849 = vsub.s32 3, %v2848
    %v2850 = vrot.slane %v1344, %v2849
    %v2851 = vlaneseq
    %v2852 = vshrl.u32 %v2851, 7
    %v2853 = vsub.s32 4, %v2852
    %v2854 = vrot.slane %v1344, %v2853
    %v2855 = vlaneseq
    %v2856 = vshrl.u32 %v2855, 7
    %v2857 = vsub.s32 5, %v2856
    %v2858 = vrot.slane %v1344, %v2857
    %v2859 = vlaneseq
    %v2860 = vshrl.u32 %v2859, 7
    %v2861 = vsub.s32 6, %v2860
    %v2862 = vrot.slane %v1344, %v2861
    %v2863 = vlaneseq
    %v2864 = vshrl.u32 %v2863, 7
    %v2865 = vsub.s32 7, %v2864
    %v2866 = vrot.slane %v1344, %v2865
    %v2867 = vlaneseq
    %v2868 = vshrl.u32 %v2867, 7
    %v2869 = vsub.s32 0, %v2868
    %v2870 = vrot.slane %v1345, %v2869
    %v2871 = vlaneseq
    %v2872 = vshrl.u32 %v2871, 7
    %v2873 = vsub.s32 1, %v2872
    %v2874 = vrot.slane %v1345, %v2873
    %v2875 = vlaneseq
    %v2876 = vshrl.u32 %v2875, 7
    %v2877 = vsub.s32 2, %v2876
    %v2878 = vrot.slane %v1345, %v2877
    %v2879 = vlaneseq
    %v2880 = vshrl.u32 %v2879, 7
    %v2881 = vsub.s32 3, %v2880
    %v2882 = vrot.slane %v1345, %v2881
    %v2883 = vlaneseq
    %v2884 = vshrl.u32 %v2883, 7
    %v2885 = vsub.s32 4, %v2884
    %v2886 = vrot.slane %v1345, %v2885
    %v2887 = vlaneseq
    %v2888 = vshrl.u32 %v2887, 7
    %v2889 = vsub.s32 5, %v2888
    %v2890 = vrot.slane %v1345, %v2889
    %v2891 = vlaneseq
    %v2892 = vshrl.u32 %v2891, 7
    %v2893 = vsub.s32 6, %v2892
    %v2894 = vrot.slane %v1345, %v2893
    %v2895 = vlaneseq
    %v2896 = vshrl.u32 %v2895, 7
    %v2897 = vsub.s32 7, %v2896
    %v2898 = vrot.slane %v1345, %v2897
    %v2899 = vlaneseq
    %v2900 = vshrl.u32 %v2899, 7
    %v2901 = vsub.s32 0, %v2900
    %v2902 = vrot.slane %v1346, %v2901
    %v2903 = vlaneseq
    %v2904 = vshrl.u32 %v2903, 7
    %v2905 = vsub.s32 1, %v2904
    %v2906 = vrot.slane %v1346, %v2905
    %v2907 = vlaneseq
    %v2908 = vshrl.u32 %v2907, 7
    %v2909 = vsub.s32 2, %v2908
    %v2910 = vrot.slane %v1346, %v2909
    %v2911 = vlaneseq
    %v2912 = vshrl.u32 %v2911, 7
    %v2913 = vsub.s32 3, %v2912
    %v2914 = vrot.slane %v1346, %v2913
    %v2915 = vlaneseq
    %v2916 = vshrl.u32 %v2915, 7
    %v2917 = vsub.s32 4, %v2916
    %v2918 = vrot.slane %v1346, %v2917
    %v2919 = vlaneseq
    %v2920 = vshrl.u32 %v2919, 7
    %v2921 = vsub.s32 5, %v2920
    %v2922 = vrot.slane %v1346, %v2921
    %v2923 = vlaneseq
    %v2924 = vshrl.u32 %v2923, 7
    %v2925 = vsub.s32 6, %v2924
    %v2926 = vrot.slane %v1346, %v2925
    %v2927 = vlaneseq
    %v2928 = vshrl.u32 %v2927, 7
    %v2929 = vsub.s32 7, %v2928
    %v2930 = vrot.slane %v1346, %v2929
    %v2931 = vcombine.low %v1398, %v1402
    %v2932 = vcombine.low %v1406, %v1410
    %v2933 = vcombine.low %v1414, %v1418
    %v2934 = vcombine.low %v1422, %v1426
    %v2936 = vunpack.c.l.s4 1966171168
    %v2937 = vunpack.c.0.s8 %v2936
    %v2938 = vlaneseq
    %v2939 = vshrl.u32 %v2938, 7
    %v2940 = vsub.s32 %v2937, %v2939
    %v2941 = vrot.slane %v2931, %v2940
    %v2943 = vunpack.c.l.s4 1966171168
    %v2944 = vunpack.c.0.s8 %v2943
    %v2945 = vlaneseq
    %v2946 = vshrl.u32 %v2945, 7
    %v2947 = vsub.s32 %v2944, %v2946
    %v2948 = vrot.slane %v2932, %v2947
    %v2950 = vunpack.c.l.s4 1966171168
    %v2951 = vunpack.c.0.s8 %v2950
    %v2952 = vlaneseq
    %v2953 = vshrl.u32 %v2952, 7
    %v2954 = vsub.s32 %v2951, %v2953
    %v2955 = vrot.slane %v2933, %v2954
    %v2957 = vunpack.c.l.s4 1966171168
    %v2958 = vunpack.c.0.s8 %v2957
    %v2959 = vlaneseq
    %v2960 = vshrl.u32 %v2959, 7
    %v2961 = vsub.s32 %v2958, %v2960
    %v2962 = vrot.slane %v2934, %v2961
    %v2963 = vcombine.low %v2941, %v2948
    %v2964 = vcombine.low %v2955, %v2962
    %v2966 = vunpack.c.l.s4 1966171168
    %v2967 = vunpack.c.0.s8 %v2966
    %v2968 = vlaneseq
    %v2969 = vshrl.u32 %v2968, 7
    %v2970 = vsub.s32 %v2967, %v2969
    %v2971 = vrot.slane %v2963, %v2970
    %v2973 = vunpack.c.l.s4 1966171168
    %v2974 = vunpack.c.0.s8 %v2973
    %v2975 = vlaneseq
    %v2976 = vshrl.u32 %v2975, 7
    %v2977 = vsub.s32 %v2974, %v2976
    %v2978 = vrot.slane %v2964, %v2977
    %v2979 = vcombine.low %v2971, %v2978
    %v2980 = vcombine.low %v1430, %v1434
    %v2981 = vcombine.low %v1438, %v1442
    %v2982 = vcombine.low %v1446, %v1450
    %v2983 = vcombine.low %v1454, %v1458
    %v2985 = vunpack.c.l.s4 1966171168
    %v2986 = vunpack.c.0.s8 %v2985
    %v2987 = vlaneseq
    %v2988 = vshrl.u32 %v2987, 7
    %v2989 = vsub.s32 %v2986, %v2988
    %v2990 = vrot.slane %v2980, %v2989
    %v2992 = vunpack.c.l.s4 1966171168
    %v2993 = vunpack.c.0.s8 %v2992
    %v2994 = vlaneseq
    %v2995 = vshrl.u32 %v2994, 7
    %v2996 = vsub.s32 %v2993, %v2995
    %v2997 = vrot.slane %v2981, %v2996
    %v2999 = vunpack.c.l.s4 1966171168
    %v3000 = vunpack.c.0.s8 %v2999
    %v3001 = vlaneseq
    %v3002 = vshrl.u32 %v3001, 7
    %v3003 = vsub.s32 %v3000, %v3002
    %v3004 = vrot.slane %v2982, %v3003
    %v3006 = vunpack.c.l.s4 1966171168
    %v3007 = vunpack.c.0.s8 %v3006
    %v3008 = vlaneseq
    %v3009 = vshrl.u32 %v3008, 7
    %v3010 = vsub.s32 %v3007, %v3009
    %v3011 = vrot.slane %v2983, %v3010
    %v3012 = vcombine.low %v2990, %v2997
    %v3013 = vcombine.low %v3004, %v3011
    %v3015 = vunpack.c.l.s4 1966171168
    %v3016 = vunpack.c.0.s8 %v3015
    %v3017 = vlaneseq
    %v3018 = vshrl.u32 %v3017, 7
    %v3019 = vsub.s32 %v3016, %v3018
    %v3020 = vrot.slane %v3012, %v3019
    %v3022 = vunpack.c.l.s4 1966171168
    %v3023 = vunpack.c.0.s8 %v3022
    %v3024 = vlaneseq
    %v3025 = vshrl.u32 %v3024, 7
    %v3026 = vsub.s32 %v3023, %v3025
    %v3027 = vrot.slane %v3013, %v3026
    %v3028 = vcombine.low %v3020, %v3027
    %v3029 = vcombine.low %v1462, %v1466
    %v3030 = vcombine.low %v1470, %v1474
    %v3031 = vcombine.low %v1478, %v1482
    %v3032 = vcombine.low %v1486, %v1490
    %v3034 = vunpack.c.l.s4 1966171168
    %v3035 = vunpack.c.0.s8 %v3034
    %v3036 = vlaneseq
    %v3037 = vshrl.u32 %v3036, 7
    %v3038 = vsub.s32 %v3035, %v3037
    %v3039 = vrot.slane %v3029, %v3038
    %v3041 = vunpack.c.l.s4 1966171168
    %v3042 = vunpack.c.0.s8 %v3041
    %v3043 = vlaneseq
    %v3044 = vshrl.u32 %v3043, 7
    %v3045 = vsub.s32 %v3042, %v3044
    %v3046 = vrot.slane %v3030, %v3045
    %v3048 = vunpack.c.l.s4 1966171168
    %v3049 = vunpack.c.0.s8 %v3048
    %v3050 = vlaneseq
    %v3051 = vshrl.u32 %v3050, 7
    %v3052 = vsub.s32 %v3049, %v3051
    %v3053 = vrot.slane %v3031, %v3052
    %v3055 = vunpack.c.l.s4 1966171168
    %v3056 = vunpack.c.0.s8 %v3055
    %v3057 = vlaneseq
    %v3058 = vshrl.u32 %v3057, 7
    %v3059 = vsub.s32 %v3056, %v3058
    %v3060 = vrot.slane %v3032, %v3059
    %v3061 = vcombine.low %v3039, %v3046
    %v3062 = vcombine.low %v3053, %v3060
    %v3064 = vunpack.c.l.s4 1966171168
    %v3065 = vunpack.c.0.s8 %v3064
    %v3066 = vlaneseq
    %v3067 = vshrl.u32 %v3066, 7
    %v3068 = vsub.s32 %v3065, %v3067
    %v3069 = vrot.slane %v3061, %v3068
    %v3071 = vunpack.c.l.s4 1966171168
    %v3072 = vunpack.c.0.s8 %v3071
    %v3073 = vlaneseq
    %v3074 = vshrl.u32 %v3073, 7
    %v3075 = vsub.s32 %v3072, %v3074
    %v3076 = vrot.slane %v3062, %v3075
    %v3077 = vcombine.low %v3069, %v3076
    %v3078 = vcombine.low %v1494, %v1498
    %v3079 = vcombine.low %v1502, %v1506
    %v3080 = vcombine.low %v1510, %v1514
    %v3081 = vcombine.low %v1518, %v1522
    %v3083 = vunpack.c.l.s4 1966171168
    %v3084 = vunpack.c.0.s8 %v3083
    %v3085 = vlaneseq
    %v3086 = vshrl.u32 %v3085, 7
    %v3087 = vsub.s32 %v3084, %v3086
    %v3088 = vrot.slane %v3078, %v3087
    %v3090 = vunpack.c.l.s4 1966171168
    %v3091 = vunpack.c.0.s8 %v3090
    %v3092 = vlaneseq
    %v3093 = vshrl.u32 %v3092, 7
    %v3094 = vsub.s32 %v3091, %v3093
    %v3095 = vrot.slane %v3079, %v3094
    %v3097 = vunpack.c.l.s4 1966171168
    %v3098 = vunpack.c.0.s8 %v3097
    %v3099 = vlaneseq
    %v3100 = vshrl.u32 %v3099, 7
    %v3101 = vsub.s32 %v3098, %v3100
    %v3102 = vrot.slane %v3080, %v3101
    %v3104 = vunpack.c.l.s4 1966171168
    %v3105 = vunpack.c.0.s8 %v3104
    %v3106 = vlaneseq
    %v3107 = vshrl.u32 %v3106, 7
    %v3108 = vsub.s32 %v3105, %v3107
    %v3109 = vrot.slane %v3081, %v3108
    %v3110 = vcombine.low %v3088, %v3095
    %v3111 = vcombine.low %v3102, %v3109
    %v3113 = vunpack.c.l.s4 1966171168
    %v3114 = vunpack.c.0.s8 %v3113
    %v3115 = vlaneseq
    %v3116 = vshrl.u32 %v3115, 7
    %v3117 = vsub.s32 %v3114, %v3116
    %v3118 = vrot.slane %v3110, %v3117
    %v3120 = vunpack.c.l.s4 1966171168
    %v3121 = vunpack.c.0.s8 %v3120
    %v3122 = vlaneseq
    %v3123 = vshrl.u32 %v3122, 7
    %v3124 = vsub.s32 %v3121, %v3123
    %v3125 = vrot.slane %v3111, %v3124
    %v3126 = vcombine.low %v3118, %v3125
    %v3127 = vcombine.low %v1526, %v1530
    %v3128 = vcombine.low %v1534, %v1538
    %v3129 = vcombine.low %v1542, %v1546
    %v3130 = vcombine.low %v1550, %v1554
    %v3132 = vunpack.c.l.s4 1966171168
    %v3133 = vunpack.c.0.s8 %v3132
    %v3134 = vlaneseq
    %v3135 = vshrl.u32 %v3134, 7
    %v3136 = vsub.s32 %v3133, %v3135
    %v3137 = vrot.slane %v3127, %v3136
    %v3139 = vunpack.c.l.s4 1966171168
    %v3140 = vunpack.c.0.s8 %v3139
    %v3141 = vlaneseq
    %v3142 = vshrl.u32 %v3141, 7
    %v3143 = vsub.s32 %v3140, %v3142
    %v3144 = vrot.slane %v3128, %v3143
    %v3146 = vunpack.c.l.s4 1966171168
    %v3147 = vunpack.c.0.s8 %v3146
    %v3148 = vlaneseq
    %v3149 = vshrl.u32 %v3148, 7
    %v3150 = vsub.s32 %v3147, %v3149
    %v3151 = vrot.slane %v3129, %v3150
    %v3153 = vunpack.c.l.s4 1966171168
    %v3154 = vunpack.c.0.s8 %v3153
    %v3155 = vlaneseq
    %v3156 = vshrl.u32 %v3155, 7
    %v3157 = vsub.s32 %v3154, %v3156
    %v3158 = vrot.slane %v3130, %v3157
    %v3159 = vcombine.low %v3137, %v3144
    %v3160 = vcombine.low %v3151, %v3158
    %v3162 = vunpack.c.l.s4 1966171168
    %v3163 = vunpack.c.0.s8 %v3162
    %v3164 = vlaneseq
    %v3165 = vshrl.u32 %v3164, 7
    %v3166 = vsub.s32 %v3163, %v3165
    %v3167 = vrot.slane %v3159, %v3166
    %v3169 = vunpack.c.l.s4 1966171168
    %v3170 = vunpack.c.0.s8 %v3169
    %v3171 = vlaneseq
    %v3172 = vshrl.u32 %v3171, 7
    %v3173 = vsub.s32 %v3170, %v3172
    %v3174 = vrot.slane %v3160, %v3173
    %v3175 = vcombine.low %v3167, %v3174
    %v3176 = vcombine.low %v1558, %v1562
    %v3177 = vcombine.low %v1566, %v1570
    %v3178 = vcombine.low %v1574, %v1578
    %v3179 = vcombine.low %v1582, %v1586
    %v3181 = vunpack.c.l.s4 1966171168
    %v3182 = vunpack.c.0.s8 %v3181
    %v3183 = vlaneseq
    %v3184 = vshrl.u32 %v3183, 7
    %v3185 = vsub.s32 %v3182, %v3184
    %v3186 = vrot.slane %v3176, %v3185
    %v3188 = vunpack.c.l.s4 1966171168
    %v3189 = vunpack.c.0.s8 %v3188
    %v3190 = vlaneseq
    %v3191 = vshrl.u32 %v3190, 7
    %v3192 = vsub.s32 %v3189, %v3191
    %v3193 = vrot.slane %v3177, %v3192
    %v3195 = vunpack.c.l.s4 1966171168
    %v3196 = vunpack.c.0.s8 %v3195
    %v3197 = vlaneseq
    %v3198 = vshrl.u32 %v3197, 7
    %v3199 = vsub.s32 %v3196, %v3198
    %v3200 = vrot.slane %v3178, %v3199
    %v3202 = vunpack.c.l.s4 1966171168
    %v3203 = vunpack.c.0.s8 %v3202
    %v3204 = vlaneseq
    %v3205 = vshrl.u32 %v3204, 7
    %v3206 = vsub.s32 %v3203, %v3205
    %v3207 = vrot.slane %v3179, %v3206
    %v3208 = vcombine.low %v3186, %v3193
    %v3209 = vcombine.low %v3200, %v3207
    %v3211 = vunpack.c.l.s4 1966171168
    %v3212 = vunpack.c.0.s8 %v3211
    %v3213 = vlaneseq
    %v3214 = vshrl.u32 %v3213, 7
    %v3215 = vsub.s32 %v3212, %v3214
    %v3216 = vrot.slane %v3208, %v3215
    %v3218 = vunpack.c.l.s4 1966171168
    %v3219 = vunpack.c.0.s8 %v3218
    %v3220 = vlaneseq
    %v3221 = vshrl.u32 %v3220, 7
    %v3222 = vsub.s32 %v3219, %v3221
    %v3223 = vrot.slane %v3209, %v3222
    %v3224 = vcombine.low %v3216, %v3223
    %v3225 = vcombine.low %v1590, %v1594
    %v3226 = vcombine.low %v1598, %v1602
    %v3227 = vcombine.low %v1606, %v1610
    %v3228 = vcombine.low %v1614, %v1618
    %v3230 = vunpack.c.l.s4 1966171168
    %v3231 = vunpack.c.0.s8 %v3230
    %v3232 = vlaneseq
    %v3233 = vshrl.u32 %v3232, 7
    %v3234 = vsub.s32 %v3231, %v3233
    %v3235 = vrot.slane %v3225, %v3234
    %v3237 = vunpack.c.l.s4 1966171168
    %v3238 = vunpack.c.0.s8 %v3237
    %v3239 = vlaneseq
    %v3240 = vshrl.u32 %v3239, 7
    %v3241 = vsub.s32 %v3238, %v3240
    %v3242 = vrot.slane %v3226, %v3241
    %v3244 = vunpack.c.l.s4 1966171168
    %v3245 = vunpack.c.0.s8 %v3244
    %v3246 = vlaneseq
    %v3247 = vshrl.u32 %v3246, 7
    %v3248 = vsub.s32 %v3245, %v3247
    %v3249 = vrot.slane %v3227, %v3248
    %v3251 = vunpack.c.l.s4 1966171168
    %v3252 = vunpack.c.0.s8 %v3251
    %v3253 = vlaneseq
    %v3254 = vshrl.u32 %v3253, 7
    %v3255 = vsub.s32 %v3252, %v3254
    %v3256 = vrot.slane %v3228, %v3255
    %v3257 = vcombine.low %v3235, %v3242
    %v3258 = vcombine.low %v3249, %v3256
    %v3260 = vunpack.c.l.s4 1966171168
    %v3261 = vunpack.c.0.s8 %v3260
    %v3262 = vlaneseq
    %v3263 = vshrl.u32 %v3262, 7
    %v3264 = vsub.s32 %v3261, %v3263
    %v3265 = vrot.slane %v3257, %v3264
    %v3267 = vunpack.c.l.s4 1966171168
    %v3268 = vunpack.c.0.s8 %v3267
    %v3269 = vlaneseq
    %v3270 = vshrl.u32 %v3269, 7
    %v3271 = vsub.s32 %v3268, %v3270
    %v3272 = vrot.slane %v3258, %v3271
    %v3273 = vcombine.low %v3265, %v3272
    %v3274 = vcombine.low %v1622, %v1626
    %v3275 = vcombine.low %v1630, %v1634
    %v3276 = vcombine.low %v1638, %v1642
    %v3277 = vcombine.low %v1646, %v1650
    %v3279 = vunpack.c.l.s4 1966171168
    %v3280 = vunpack.c.0.s8 %v3279
    %v3281 = vlaneseq
    %v3282 = vshrl.u32 %v3281, 7
    %v3283 = vsub.s32 %v3280, %v3282
    %v3284 = vrot.slane %v3274, %v3283
    %v3286 = vunpack.c.l.s4 1966171168
    %v3287 = vunpack.c.0.s8 %v3286
    %v3288 = vlaneseq
    %v3289 = vshrl.u32 %v3288, 7
    %v3290 = vsub.s32 %v3287, %v3289
    %v3291 = vrot.slane %v3275, %v3290
    %v3293 = vunpack.c.l.s4 1966171168
    %v3294 = vunpack.c.0.s8 %v3293
    %v3295 = vlaneseq
    %v3296 = vshrl.u32 %v3295, 7
    %v3297 = vsub.s32 %v3294, %v3296
    %v3298 = vrot.slane %v3276, %v3297
    %v3300 = vunpack.c.l.s4 1966171168
    %v3301 = vunpack.c.0.s8 %v3300
    %v3302 = vlaneseq
    %v3303 = vshrl.u32 %v3302, 7
    %v3304 = vsub.s32 %v3301, %v3303
    %v3305 = vrot.slane %v3277, %v3304
    %v3306 = vcombine.low %v3284, %v3291
    %v3307 = vcombine.low %v3298, %v3305
    %v3309 = vunpack.c.l.s4 1966171168
    %v3310 = vunpack.c.0.s8 %v3309
    %v3311 = vlaneseq
    %v3312 = vshrl.u32 %v3311, 7
    %v3313 = vsub.s32 %v3310, %v3312
    %v3314 = vrot.slane %v3306, %v3313
    %v3316 = vunpack.c.l.s4 1966171168
    %v3317 = vunpack.c.0.s8 %v3316
    %v3318 = vlaneseq
    %v3319 = vshrl.u32 %v3318, 7
    %v3320 = vsub.s32 %v3317, %v3319
    %v3321 = vrot.slane %v3307, %v3320
    %v3322 = vcombine.low %v3314, %v3321
    %v3323 = vcombine.low %v1654, %v1658
    %v3324 = vcombine.low %v1662, %v1666
    %v3325 = vcombine.low %v1670, %v1674
    %v3326 = vcombine.low %v1678, %v1682
    %v3328 = vunpack.c.l.s4 1966171168
    %v3329 = vunpack.c.0.s8 %v3328
    %v3330 = vlaneseq
    %v3331 = vshrl.u32 %v3330, 7
    %v3332 = vsub.s32 %v3329, %v3331
    %v3333 = vrot.slane %v3323, %v3332
    %v3335 = vunpack.c.l.s4 1966171168
    %v3336 = vunpack.c.0.s8 %v3335
    %v3337 = vlaneseq
    %v3338 = vshrl.u32 %v3337, 7
    %v3339 = vsub.s32 %v3336, %v3338
    %v3340 = vrot.slane %v3324, %v3339
    %v3342 = vunpack.c.l.s4 1966171168
    %v3343 = vunpack.c.0.s8 %v3342
    %v3344 = vlaneseq
    %v3345 = vshrl.u32 %v3344, 7
    %v3346 = vsub.s32 %v3343, %v3345
    %v3347 = vrot.slane %v3325, %v3346
    %v3349 = vunpack.c.l.s4 1966171168
    %v3350 = vunpack.c.0.s8 %v3349
    %v3351 = vlaneseq
    %v3352 = vshrl.u32 %v3351, 7
    %v3353 = vsub.s32 %v3350, %v3352
    %v3354 = vrot.slane %v3326, %v3353
    %v3355 = vcombine.low %v3333, %v3340
    %v3356 = vcombine.low %v3347, %v3354
    %v3358 = vunpack.c.l.s4 1966171168
    %v3359 = vunpack.c.0.s8 %v3358
    %v3360 = vlaneseq
    %v3361 = vshrl.u32 %v3360, 7
    %v3362 = vsub.s32 %v3359, %v3361
    %v3363 = vrot.slane %v3355, %v3362
    %v3365 = vunpack.c.l.s4 1966171168
    %v3366 = vunpack.c.0.s8 %v3365
    %v3367 = vlaneseq
    %v3368 = vshrl.u32 %v3367, 7
    %v3369 = vsub.s32 %v3366, %v3368
    %v3370 = vrot.slane %v3356, %v3369
    %v3371 = vcombine.low %v3363, %v3370
    %v3372 = vcombine.low %v1686, %v1690
    %v3373 = vcombine.low %v1694, %v1698
    %v3374 = vcombine.low %v1702, %v1706
    %v3375 = vcombine.low %v1710, %v1714
    %v3377 = vunpack.c.l.s4 1966171168
    %v3378 = vunpack.c.0.s8 %v3377
    %v3379 = vlaneseq
    %v3380 = vshrl.u32 %v3379, 7
    %v3381 = vsub.s32 %v3378, %v3380
    %v3382 = vrot.slane %v3372, %v3381
    %v3384 = vunpack.c.l.s4 1966171168
    %v3385 = vunpack.c.0.s8 %v3384
    %v3386 = vlaneseq
    %v3387 = vshrl.u32 %v3386, 7
    %v3388 = vsub.s32 %v3385, %v3387
    %v3389 = vrot.slane %v3373, %v3388
    %v3391 = vunpack.c.l.s4 1966171168
    %v3392 = vunpack.c.0.s8 %v3391
    %v3393 = vlaneseq
    %v3394 = vshrl.u32 %v3393, 7
    %v3395 = vsub.s32 %v3392, %v3394
    %v3396 = vrot.slane %v3374, %v3395
    %v3398 = vunpack.c.l.s4 1966171168
    %v3399 = vunpack.c.0.s8 %v3398
    %v3400 = vlaneseq
    %v3401 = vshrl.u32 %v3400, 7
    %v3402 = vsub.s32 %v3399, %v3401
    %v3403 = vrot.slane %v3375, %v3402
    %v3404 = vcombine.low %v3382, %v3389
    %v3405 = vcombine.low %v3396, %v3403
    %v3407 = vunpack.c.l.s4 1966171168
    %v3408 = vunpack.c.0.s8 %v3407
    %v3409 = vlaneseq
    %v3410 = vshrl.u32 %v3409, 7
    %v3411 = vsub.s32 %v3408, %v3410
    %v3412 = vrot.slane %v3404, %v3411
    %v3414 = vunpack.c.l.s4 1966171168
    %v3415 = vunpack.c.0.s8 %v3414
    %v3416 = vlaneseq
    %v3417 = vshrl.u32 %v3416, 7
    %v3418 = vsub.s32 %v3415, %v3417
    %v3419 = vrot.slane %v3405, %v3418
    %v3420 = vcombine.low %v3412, %v3419
    %v3421 = vcombine.low %v1718, %v1722
    %v3422 = vcombine.low %v1726, %v1730
    %v3423 = vcombine.low %v1734, %v1738
    %v3424 = vcombine.low %v1742, %v1746
    %v3426 = vunpack.c.l.s4 1966171168
    %v3427 = vunpack.c.0.s8 %v3426
    %v3428 = vlaneseq
    %v3429 = vshrl.u32 %v3428, 7
    %v3430 = vsub.s32 %v3427, %v3429
    %v3431 = vrot.slane %v3421, %v3430
    %v3433 = vunpack.c.l.s4 1966171168
    %v3434 = vunpack.c.0.s8 %v3433
    %v3435 = vlaneseq
    %v3436 = vshrl.u32 %v3435, 7
    %v3437 = vsub.s32 %v3434, %v3436
    %v3438 = vrot.slane %v3422, %v3437
    %v3440 = vunpack.c.l.s4 1966171168
    %v3441 = vunpack.c.0.s8 %v3440
    %v3442 = vlaneseq
    %v3443 = vshrl.u32 %v3442, 7
    %v3444 = vsub.s32 %v3441, %v3443
    %v3445 = vrot.slane %v3423, %v3444
    %v3447 = vunpack.c.l.s4 1966171168
    %v3448 = vunpack.c.0.s8 %v3447
    %v3449 = vlaneseq
    %v3450 = vshrl.u32 %v3449, 7
    %v3451 = vsub.s32 %v3448, %v3450
    %v3452 = vrot.slane %v3424, %v3451
    %v3453 = vcombine.low %v3431, %v3438
    %v3454 = vcombine.low %v3445, %v3452
    %v3456 = vunpack.c.l.s4 1966171168
    %v3457 = vunpack.c.0.s8 %v3456
    %v3458 = vlaneseq
    %v3459 = vshrl.u32 %v3458, 7
    %v3460 = vsub.s32 %v3457, %v3459
    %v3461 = vrot.slane %v3453, %v3460
    %v3463 = vunpack.c.l.s4 1966171168
    %v3464 = vunpack.c.0.s8 %v3463
    %v3465 = vlaneseq
    %v3466 = vshrl.u32 %v3465, 7
    %v3467 = vsub.s32 %v3464, %v3466
    %v3468 = vrot.slane %v3454, %v3467
    %v3469 = vcombine.low %v3461, %v3468
    %v3470 = vcombine.low %v1750, %v1754
    %v3471 = vcombine.low %v1758, %v1762
    %v3472 = vcombine.low %v1766, %v1770
    %v3473 = vcombine.low %v1774, %v1778
    %v3475 = vunpack.c.l.s4 1966171168
    %v3476 = vunpack.c.0.s8 %v3475
    %v3477 = vlaneseq
    %v3478 = vshrl.u32 %v3477, 7
    %v3479 = vsub.s32 %v3476, %v3478
    %v3480 = vrot.slane %v3470, %v3479
    %v3482 = vunpack.c.l.s4 1966171168
    %v3483 = vunpack.c.0.s8 %v3482
    %v3484 = vlaneseq
    %v3485 = vshrl.u32 %v3484, 7
    %v3486 = vsub.s32 %v3483, %v3485
    %v3487 = vrot.slane %v3471, %v3486
    %v3489 = vunpack.c.l.s4 1966171168
    %v3490 = vunpack.c.0.s8 %v3489
    %v3491 = vlaneseq
    %v3492 = vshrl.u32 %v3491, 7
    %v3493 = vsub.s32 %v3490, %v3492
    %v3494 = vrot.slane %v3472, %v3493
    %v3496 = vunpack.c.l.s4 1966171168
    %v3497 = vunpack.c.0.s8 %v3496
    %v3498 = vlaneseq
    %v3499 = vshrl.u32 %v3498, 7
    %v3500 = vsub.s32 %v3497, %v3499
    %v3501 = vrot.slane %v3473, %v3500
    %v3502 = vcombine.low %v3480, %v3487
    %v3503 = vcombine.low %v3494, %v3501
    %v3505 = vunpack.c.l.s4 1966171168
    %v3506 = vunpack.c.0.s8 %v3505
    %v3507 = vlaneseq
    %v3508 = vshrl.u32 %v3507, 7
    %v3509 = vsub.s32 %v3506, %v3508
    %v3510 = vrot.slane %v3502, %v3509
    %v3512 = vunpack.c.l.s4 1966171168
    %v3513 = vunpack.c.0.s8 %v3512
    %v3514 = vlaneseq
    %v3515 = vshrl.u32 %v3514, 7
    %v3516 = vsub.s32 %v3513, %v3515
    %v3517 = vrot.slane %v3503, %v3516
    %v3518 = vcombine.low %v3510, %v3517
    %v3519 = vcombine.low %v1782, %v1786
    %v3520 = vcombine.low %v1790, %v1794
    %v3521 = vcombine.low %v1798, %v1802
    %v3522 = vcombine.low %v1806, %v1810
    %v3524 = vunpack.c.l.s4 1966171168
    %v3525 = vunpack.c.0.s8 %v3524
    %v3526 = vlaneseq
    %v3527 = vshrl.u32 %v3526, 7
    %v3528 = vsub.s32 %v3525, %v3527
    %v3529 = vrot.slane %v3519, %v3528
    %v3531 = vunpack.c.l.s4 1966171168
    %v3532 = vunpack.c.0.s8 %v3531
    %v3533 = vlaneseq
    %v3534 = vshrl.u32 %v3533, 7
    %v3535 = vsub.s32 %v3532, %v3534
    %v3536 = vrot.slane %v3520, %v3535
    %v3538 = vunpack.c.l.s4 1966171168
    %v3539 = vunpack.c.0.s8 %v3538
    %v3540 = vlaneseq
    %v3541 = vshrl.u32 %v3540, 7
    %v3542 = vsub.s32 %v3539, %v3541
    %v3543 = vrot.slane %v3521, %v3542
    %v3545 = vunpack.c.l.s4 1966171168
    %v3546 = vunpack.c.0.s8 %v3545
    %v3547 = vlaneseq
    %v3548 = vshrl.u32 %v3547, 7
    %v3549 = vsub.s32 %v3546, %v3548
    %v3550 = vrot.slane %v3522, %v3549
    %v3551 = vcombine.low %v3529, %v3536
    %v3552 = vcombine.low %v3543, %v3550
    %v3554 = vunpack.c.l.s4 1966171168
    %v3555 = vunpack.c.0.s8 %v3554
    %v3556 = vlaneseq
    %v3557 = vshrl.u32 %v3556, 7
    %v3558 = vsub.s32 %v3555, %v3557
    %v3559 = vrot.slane %v3551, %v3558
    %v3561 = vunpack.c.l.s4 1966171168
    %v3562 = vunpack.c.0.s8 %v3561
    %v3563 = vlaneseq
    %v3564 = vshrl.u32 %v3563, 7
    %v3565 = vsub.s32 %v3562, %v3564
    %v3566 = vrot.slane %v3552, %v3565
    %v3567 = vcombine.low %v3559, %v3566
    %v3568 = vcombine.low %v1814, %v1818
    %v3569 = vcombine.low %v1822, %v1826
    %v3570 = vcombine.low %v1830, %v1834
    %v3571 = vcombine.low %v1838, %v1842
    %v3573 = vunpack.c.l.s4 1966171168
    %v3574 = vunpack.c.0.s8 %v3573
    %v3575 = vlaneseq
    %v3576 = vshrl.u32 %v3575, 7
    %v3577 = vsub.s32 %v3574, %v3576
    %v3578 = vrot.slane %v3568, %v3577
    %v3580 = vunpack.c.l.s4 1966171168
    %v3581 = vunpack.c.0.s8 %v3580
    %v3582 = vlaneseq
    %v3583 = vshrl.u32 %v3582, 7
    %v3584 = vsub.s32 %v3581, %v3583
    %v3585 = vrot.slane %v3569, %v3584
    %v3587 = vunpack.c.l.s4 1966171168
    %v3588 = vunpack.c.0.s8 %v3587
    %v3589 = vlaneseq
    %v3590 = vshrl.u32 %v3589, 7
    %v3591 = vsub.s32 %v3588, %v3590
    %v3592 = vrot.slane %v3570, %v3591
    %v3594 = vunpack.c.l.s4 1966171168
    %v3595 = vunpack.c.0.s8 %v3594
    %v3596 = vlaneseq
    %v3597 = vshrl.u32 %v3596, 7
    %v3598 = vsub.s32 %v3595, %v3597
    %v3599 = vrot.slane %v3571, %v3598
    %v3600 = vcombine.low %v3578, %v3585
    %v3601 = vcombine.low %v3592, %v3599
    %v3603 = vunpack.c.l.s4 1966171168
    %v3604 = vunpack.c.0.s8 %v3603
    %v3605 = vlaneseq
    %v3606 = vshrl.u32 %v3605, 7
    %v3607 = vsub.s32 %v3604, %v3606
    %v3608 = vrot.slane %v3600, %v3607
    %v3610 = vunpack.c.l.s4 1966171168
    %v3611 = vunpack.c.0.s8 %v3610
    %v3612 = vlaneseq
    %v3613 = vshrl.u32 %v3612, 7
    %v3614 = vsub.s32 %v3611, %v3613
    %v3615 = vrot.slane %v3601, %v3614
    %v3616 = vcombine.low %v3608, %v3615
    %v3617 = vcombine.low %v1846, %v1850
    %v3618 = vcombine.low %v1854, %v1858
    %v3619 = vcombine.low %v1862, %v1866
    %v3620 = vcombine.low %v1870, %v1874
    %v3622 = vunpack.c.l.s4 1966171168
    %v3623 = vunpack.c.0.s8 %v3622
    %v3624 = vlaneseq
    %v3625 = vshrl.u32 %v3624, 7
    %v3626 = vsub.s32 %v3623, %v3625
    %v3627 = vrot.slane %v3617, %v3626
    %v3629 = vunpack.c.l.s4 1966171168
    %v3630 = vunpack.c.0.s8 %v3629
    %v3631 = vlaneseq
    %v3632 = vshrl.u32 %v3631, 7
    %v3633 = vsub.s32 %v3630, %v3632
    %v3634 = vrot.slane %v3618, %v3633
    %v3636 = vunpack.c.l.s4 1966171168
    %v3637 = vunpack.c.0.s8 %v3636
    %v3638 = vlaneseq
    %v3639 = vshrl.u32 %v3638, 7
    %v3640 = vsub.s32 %v3637, %v3639
    %v3641 = vrot.slane %v3619, %v3640
    %v3643 = vunpack.c.l.s4 1966171168
    %v3644 = vunpack.c.0.s8 %v3643
    %v3645 = vlaneseq
    %v3646 = vshrl.u32 %v3645, 7
    %v3647 = vsub.s32 %v3644, %v3646
    %v3648 = vrot.slane %v3620, %v3647
    %v3649 = vcombine.low %v3627, %v3634
    %v3650 = vcombine.low %v3641, %v3648
    %v3652 = vunpack.c.l.s4 1966171168
    %v3653 = vunpack.c.0.s8 %v3652
    %v3654 = vlaneseq
    %v3655 = vshrl.u32 %v3654, 7
    %v3656 = vsub.s32 %v3653, %v3655
    %v3657 = vrot.slane %v3649, %v3656
    %v3659 = vunpack.c.l.s4 1966171168
    %v3660 = vunpack.c.0.s8 %v3659
    %v3661 = vlaneseq
    %v3662 = vshrl.u32 %v3661, 7
    %v3663 = vsub.s32 %v3660, %v3662
    %v3664 = vrot.slane %v3650, %v3663
    %v3665 = vcombine.low %v3657, %v3664
    %v3666 = vcombine.low %v1878, %v1882
    %v3667 = vcombine.low %v1886, %v1890
    %v3668 = vcombine.low %v1894, %v1898
    %v3669 = vcombine.low %v1902, %v1906
    %v3671 = vunpack.c.l.s4 1966171168
    %v3672 = vunpack.c.0.s8 %v3671
    %v3673 = vlaneseq
    %v3674 = vshrl.u32 %v3673, 7
    %v3675 = vsub.s32 %v3672, %v3674
    %v3676 = vrot.slane %v3666, %v3675
    %v3678 = vunpack.c.l.s4 1966171168
    %v3679 = vunpack.c.0.s8 %v3678
    %v3680 = vlaneseq
    %v3681 = vshrl.u32 %v3680, 7
    %v3682 = vsub.s32 %v3679, %v3681
    %v3683 = vrot.slane %v3667, %v3682
    %v3685 = vunpack.c.l.s4 1966171168
    %v3686 = vunpack.c.0.s8 %v3685
    %v3687 = vlaneseq
    %v3688 = vshrl.u32 %v3687, 7
    %v3689 = vsub.s32 %v3686, %v3688
    %v3690 = vrot.slane %v3668, %v3689
    %v3692 = vunpack.c.l.s4 1966171168
    %v3693 = vunpack.c.0.s8 %v3692
    %v3694 = vlaneseq
    %v3695 = vshrl.u32 %v3694, 7
    %v3696 = vsub.s32 %v3693, %v3695
    %v3697 = vrot.slane %v3669, %v3696
    %v3698 = vcombine.low %v3676, %v3683
    %v3699 = vcombine.low %v3690, %v3697
    %v3701 = vunpack.c.l.s4 1966171168
    %v3702 = vunpack.c.0.s8 %v3701
    %v3703 = vlaneseq
    %v3704 = vshrl.u32 %v3703, 7
    %v3705 = vsub.s32 %v3702, %v3704
    %v3706 = vrot.slane %v3698, %v3705
    %v3708 = vunpack.c.l.s4 1966171168
    %v3709 = vunpack.c.0.s8 %v3708
    %v3710 = vlaneseq
    %v3711 = vshrl.u32 %v3710, 7
    %v3712 = vsub.s32 %v3709, %v3711
    %v3713 = vrot.slane %v3699, %v3712
    %v3714 = vcombine.low %v3706, %v3713
    %v3715 = vcombine.low %v1910, %v1914
    %v3716 = vcombine.low %v1918, %v1922
    %v3717 = vcombine.low %v1926, %v1930
    %v3718 = vcombine.low %v1934, %v1938
    %v3720 = vunpack.c.l.s4 1966171168
    %v3721 = vunpack.c.0.s8 %v3720
    %v3722 = vlaneseq
    %v3723 = vshrl.u32 %v3722, 7
    %v3724 = vsub.s32 %v3721, %v3723
    %v3725 = vrot.slane %v3715, %v3724
    %v3727 = vunpack.c.l.s4 1966171168
    %v3728 = vunpack.c.0.s8 %v3727
    %v3729 = vlaneseq
    %v3730 = vshrl.u32 %v3729, 7
    %v3731 = vsub.s32 %v3728, %v3730
    %v3732 = vrot.slane %v3716, %v3731
    %v3734 = vunpack.c.l.s4 1966171168
    %v3735 = vunpack.c.0.s8 %v3734
    %v3736 = vlaneseq
    %v3737 = vshrl.u32 %v3736, 7
    %v3738 = vsub.s32 %v3735, %v3737
    %v3739 = vrot.slane %v3717, %v3738
    %v3741 = vunpack.c.l.s4 1966171168
    %v3742 = vunpack.c.0.s8 %v3741
    %v3743 = vlaneseq
    %v3744 = vshrl.u32 %v3743, 7
    %v3745 = vsub.s32 %v3742, %v3744
    %v3746 = vrot.slane %v3718, %v3745
    %v3747 = vcombine.low %v3725, %v3732
    %v3748 = vcombine.low %v3739, %v3746
    %v3750 = vunpack.c.l.s4 1966171168
    %v3751 = vunpack.c.0.s8 %v3750
    %v3752 = vlaneseq
    %v3753 = vshrl.u32 %v3752, 7
    %v3754 = vsub.s32 %v3751, %v3753
    %v3755 = vrot.slane %v3747, %v3754
    %v3757 = vunpack.c.l.s4 1966171168
    %v3758 = vunpack.c.0.s8 %v3757
    %v3759 = vlaneseq
    %v3760 = vshrl.u32 %v3759, 7
    %v3761 = vsub.s32 %v3758, %v3760
    %v3762 = vrot.slane %v3748, %v3761
    %v3763 = vcombine.low %v3755, %v3762
    %v3764 = vcombine.low %v1942, %v1946
    %v3765 = vcombine.low %v1950, %v1954
    %v3766 = vcombine.low %v1958, %v1962
    %v3767 = vcombine.low %v1966, %v1970
    %v3769 = vunpack.c.l.s4 1966171168
    %v3770 = vunpack.c.0.s8 %v3769
    %v3771 = vlaneseq
    %v3772 = vshrl.u32 %v3771, 7
    %v3773 = vsub.s32 %v3770, %v3772
    %v3774 = vrot.slane %v3764, %v3773
    %v3776 = vunpack.c.l.s4 1966171168
    %v3777 = vunpack.c.0.s8 %v3776
    %v3778 = vlaneseq
    %v3779 = vshrl.u32 %v3778, 7
    %v3780 = vsub.s32 %v3777, %v3779
    %v3781 = vrot.slane %v3765, %v3780
    %v3783 = vunpack.c.l.s4 1966171168
    %v3784 = vunpack.c.0.s8 %v3783
    %v3785 = vlaneseq
    %v3786 = vshrl.u32 %v3785, 7
    %v3787 = vsub.s32 %v3784, %v3786
    %v3788 = vrot.slane %v3766, %v3787
    %v3790 = vunpack.c.l.s4 1966171168
    %v3791 = vunpack.c.0.s8 %v3790
    %v3792 = vlaneseq
    %v3793 = vshrl.u32 %v3792, 7
    %v3794 = vsub.s32 %v3791, %v3793
    %v3795 = vrot.slane %v3767, %v3794
    %v3796 = vcombine.low %v3774, %v3781
    %v3797 = vcombine.low %v3788, %v3795
    %v3799 = vunpack.c.l.s4 1966171168
    %v3800 = vunpack.c.0.s8 %v3799
    %v3801 = vlaneseq
    %v3802 = vshrl.u32 %v3801, 7
    %v3803 = vsub.s32 %v3800, %v3802
    %v3804 = vrot.slane %v3796, %v3803
    %v3806 = vunpack.c.l.s4 1966171168
    %v3807 = vunpack.c.0.s8 %v3806
    %v3808 = vlaneseq
    %v3809 = vshrl.u32 %v3808, 7
    %v3810 = vsub.s32 %v3807, %v3809
    %v3811 = vrot.slane %v3797, %v3810
    %v3812 = vcombine.low %v3804, %v3811
    %v3813 = vcombine.low %v1974, %v1978
    %v3814 = vcombine.low %v1982, %v1986
    %v3815 = vcombine.low %v1990, %v1994
    %v3816 = vcombine.low %v1998, %v2002
    %v3818 = vunpack.c.l.s4 1966171168
    %v3819 = vunpack.c.0.s8 %v3818
    %v3820 = vlaneseq
    %v3821 = vshrl.u32 %v3820, 7
    %v3822 = vsub.s32 %v3819, %v3821
    %v3823 = vrot.slane %v3813, %v3822
    %v3825 = vunpack.c.l.s4 1966171168
    %v3826 = vunpack.c.0.s8 %v3825
    %v3827 = vlaneseq
    %v3828 = vshrl.u32 %v3827, 7
    %v3829 = vsub.s32 %v3826, %v3828
    %v3830 = vrot.slane %v3814, %v3829
    %v3832 = vunpack.c.l.s4 1966171168
    %v3833 = vunpack.c.0.s8 %v3832
    %v3834 = vlaneseq
    %v3835 = vshrl.u32 %v3834, 7
    %v3836 = vsub.s32 %v3833, %v3835
    %v3837 = vrot.slane %v3815, %v3836
    %v3839 = vunpack.c.l.s4 1966171168
    %v3840 = vunpack.c.0.s8 %v3839
    %v3841 = vlaneseq
    %v3842 = vshrl.u32 %v3841, 7
    %v3843 = vsub.s32 %v3840, %v3842
    %v3844 = vrot.slane %v3816, %v3843
    %v3845 = vcombine.low %v3823, %v3830
    %v3846 = vcombine.low %v3837, %v3844
    %v3848 = vunpack.c.l.s4 1966171168
    %v3849 = vunpack.c.0.s8 %v3848
    %v3850 = vlaneseq
    %v3851 = vshrl.u32 %v3850, 7
    %v3852 = vsub.s32 %v3849, %v3851
    %v3853 = vrot.slane %v3845, %v3852
    %v3855 = vunpack.c.l.s4 1966171168
    %v3856 = vunpack.c.0.s8 %v3855
    %v3857 = vlaneseq
    %v3858 = vshrl.u32 %v3857, 7
    %v3859 = vsub.s32 %v3856, %v3858
    %v3860 = vrot.slane %v3846, %v3859
    %v3861 = vcombine.low %v3853, %v3860
    %v3862 = vcombine.low %v2006, %v2010
    %v3863 = vcombine.low %v2014, %v2018
    %v3864 = vcombine.low %v2022, %v2026
    %v3865 = vcombine.low %v2030, %v2034
    %v3867 = vunpack.c.l.s4 1966171168
    %v3868 = vunpack.c.0.s8 %v3867
    %v3869 = vlaneseq
    %v3870 = vshrl.u32 %v3869, 7
    %v3871 = vsub.s32 %v3868, %v3870
    %v3872 = vrot.slane %v3862, %v3871
    %v3874 = vunpack.c.l.s4 1966171168
    %v3875 = vunpack.c.0.s8 %v3874
    %v3876 = vlaneseq
    %v3877 = vshrl.u32 %v3876, 7
    %v3878 = vsub.s32 %v3875, %v3877
    %v3879 = vrot.slane %v3863, %v3878
    %v3881 = vunpack.c.l.s4 1966171168
    %v3882 = vunpack.c.0.s8 %v3881
    %v3883 = vlaneseq
    %v3884 = vshrl.u32 %v3883, 7
    %v3885 = vsub.s32 %v3882, %v3884
    %v3886 = vrot.slane %v3864, %v3885
    %v3888 = vunpack.c.l.s4 1966171168
    %v3889 = vunpack.c.0.s8 %v3888
    %v3890 = vlaneseq
    %v3891 = vshrl.u32 %v3890, 7
    %v3892 = vsub.s32 %v3889, %v3891
    %v3893 = vrot.slane %v3865, %v3892
    %v3894 = vcombine.low %v3872, %v3879
    %v3895 = vcombine.low %v3886, %v3893
    %v3897 = vunpack.c.l.s4 1966171168
    %v3898 = vunpack.c.0.s8 %v3897
    %v3899 = vlaneseq
    %v3900 = vshrl.u32 %v3899, 7
    %v3901 = vsub.s32 %v3898, %v3900
    %v3902 = vrot.slane %v3894, %v3901
    %v3904 = vunpack.c.l.s4 1966171168
    %v3905 = vunpack.c.0.s8 %v3904
    %v3906 = vlaneseq
    %v3907 = vshrl.u32 %v3906, 7
    %v3908 = vsub.s32 %v3905, %v3907
    %v3909 = vrot.slane %v3895, %v3908
    %v3910 = vcombine.low %v3902, %v3909
    %v3911 = vcombine.low %v2038, %v2042
    %v3912 = vcombine.low %v2046, %v2050
    %v3913 = vcombine.low %v2054, %v2058
    %v3914 = vcombine.low %v2062, %v2066
    %v3916 = vunpack.c.l.s4 1966171168
    %v3917 = vunpack.c.0.s8 %v3916
    %v3918 = vlaneseq
    %v3919 = vshrl.u32 %v3918, 7
    %v3920 = vsub.s32 %v3917, %v3919
    %v3921 = vrot.slane %v3911, %v3920
    %v3923 = vunpack.c.l.s4 1966171168
    %v3924 = vunpack.c.0.s8 %v3923
    %v3925 = vlaneseq
    %v3926 = vshrl.u32 %v3925, 7
    %v3927 = vsub.s32 %v3924, %v3926
    %v3928 = vrot.slane %v3912, %v3927
    %v3930 = vunpack.c.l.s4 1966171168
    %v3931 = vunpack.c.0.s8 %v3930
    %v3932 = vlaneseq
    %v3933 = vshrl.u32 %v3932, 7
    %v3934 = vsub.s32 %v3931, %v3933
    %v3935 = vrot.slane %v3913, %v3934
    %v3937 = vunpack.c.l.s4 1966171168
    %v3938 = vunpack.c.0.s8 %v3937
    %v3939 = vlaneseq
    %v3940 = vshrl.u32 %v3939, 7
    %v3941 = vsub.s32 %v3938, %v3940
    %v3942 = vrot.slane %v3914, %v3941
    %v3943 = vcombine.low %v3921, %v3928
    %v3944 = vcombine.low %v3935, %v3942
    %v3946 = vunpack.c.l.s4 1966171168
    %v3947 = vunpack.c.0.s8 %v3946
    %v3948 = vlaneseq
    %v3949 = vshrl.u32 %v3948, 7
    %v3950 = vsub.s32 %v3947, %v3949
    %v3951 = vrot.slane %v3943, %v3950
    %v3953 = vunpack.c.l.s4 1966171168
    %v3954 = vunpack.c.0.s8 %v3953
    %v3955 = vlaneseq
    %v3956 = vshrl.u32 %v3955, 7
    %v3957 = vsub.s32 %v3954, %v3956
    %v3958 = vrot.slane %v3944, %v3957
    %v3959 = vcombine.low %v3951, %v3958
    %v3960 = vcombine.low %v2070, %v2074
    %v3961 = vcombine.low %v2078, %v2082
    %v3962 = vcombine.low %v2086, %v2090
    %v3963 = vcombine.low %v2094, %v2098
    %v3965 = vunpack.c.l.s4 1966171168
    %v3966 = vunpack.c.0.s8 %v3965
    %v3967 = vlaneseq
    %v3968 = vshrl.u32 %v3967, 7
    %v3969 = vsub.s32 %v3966, %v3968
    %v3970 = vrot.slane %v3960, %v3969
    %v3972 = vunpack.c.l.s4 1966171168
    %v3973 = vunpack.c.0.s8 %v3972
    %v3974 = vlaneseq
    %v3975 = vshrl.u32 %v3974, 7
    %v3976 = vsub.s32 %v3973, %v3975
    %v3977 = vrot.slane %v3961, %v3976
    %v3979 = vunpack.c.l.s4 1966171168
    %v3980 = vunpack.c.0.s8 %v3979
    %v3981 = vlaneseq
    %v3982 = vshrl.u32 %v3981, 7
    %v3983 = vsub.s32 %v3980, %v3982
    %v3984 = vrot.slane %v3962, %v3983
    %v3986 = vunpack.c.l.s4 1966171168
    %v3987 = vunpack.c.0.s8 %v3986
    %v3988 = vlaneseq
    %v3989 = vshrl.u32 %v3988, 7
    %v3990 = vsub.s32 %v3987, %v3989
    %v3991 = vrot.slane %v3963, %v3990
    %v3992 = vcombine.low %v3970, %v3977
    %v3993 = vcombine.low %v3984, %v3991
    %v3995 = vunpack.c.l.s4 1966171168
    %v3996 = vunpack.c.0.s8 %v3995
    %v3997 = vlaneseq
    %v3998 = vshrl.u32 %v3997, 7
    %v3999 = vsub.s32 %v3996, %v3998
    %v4000 = vrot.slane %v3992, %v3999
    %v4002 = vunpack.c.l.s4 1966171168
    %v4003 = vunpack.c.0.s8 %v4002
    %v4004 = vlaneseq
    %v4005 = vshrl.u32 %v4004, 7
    %v4006 = vsub.s32 %v4003, %v4005
    %v4007 = vrot.slane %v3993, %v4006
    %v4008 = vcombine.low %v4000, %v4007
    %v4009 = vcombine.low %v2102, %v2106
    %v4010 = vcombine.low %v2110, %v2114
    %v4011 = vcombine.low %v2118, %v2122
    %v4012 = vcombine.low %v2126, %v2130
    %v4014 = vunpack.c.l.s4 1966171168
    %v4015 = vunpack.c.0.s8 %v4014
    %v4016 = vlaneseq
    %v4017 = vshrl.u32 %v4016, 7
    %v4018 = vsub.s32 %v4015, %v4017
    %v4019 = vrot.slane %v4009, %v4018
    %v4021 = vunpack.c.l.s4 1966171168
    %v4022 = vunpack.c.0.s8 %v4021
    %v4023 = vlaneseq
    %v4024 = vshrl.u32 %v4023, 7
    %v4025 = vsub.s32 %v4022, %v4024
    %v4026 = vrot.slane %v4010, %v4025
    %v4028 = vunpack.c.l.s4 1966171168
    %v4029 = vunpack.c.0.s8 %v4028
    %v4030 = vlaneseq
    %v4031 = vshrl.u32 %v4030, 7
    %v4032 = vsub.s32 %v4029, %v4031
    %v4033 = vrot.slane %v4011, %v4032
    %v4035 = vunpack.c.l.s4 1966171168
    %v4036 = vunpack.c.0.s8 %v4035
    %v4037 = vlaneseq
    %v4038 = vshrl.u32 %v4037, 7
    %v4039 = vsub.s32 %v4036, %v4038
    %v4040 = vrot.slane %v4012, %v4039
    %v4041 = vcombine.low %v4019, %v4026
    %v4042 = vcombine.low %v4033, %v4040
    %v4044 = vunpack.c.l.s4 1966171168
    %v4045 = vunpack.c.0.s8 %v4044
    %v4046 = vlaneseq
    %v4047 = vshrl.u32 %v4046, 7
    %v4048 = vsub.s32 %v4045, %v4047
    %v4049 = vrot.slane %v4041, %v4048
    %v4051 = vunpack.c.l.s4 1966171168
    %v4052 = vunpack.c.0.s8 %v4051
    %v4053 = vlaneseq
    %v4054 = vshrl.u32 %v4053, 7
    %v4055 = vsub.s32 %v4052, %v4054
    %v4056 = vrot.slane %v4042, %v4055
    %v4057 = vcombine.low %v4049, %v4056
    %v4058 = vcombine.low %v2134, %v2138
    %v4059 = vcombine.low %v2142, %v2146
    %v4060 = vcombine.low %v2150, %v2154
    %v4061 = vcombine.low %v2158, %v2162
    %v4063 = vunpack.c.l.s4 1966171168
    %v4064 = vunpack.c.0.s8 %v4063
    %v4065 = vlaneseq
    %v4066 = vshrl.u32 %v4065, 7
    %v4067 = vsub.s32 %v4064, %v4066
    %v4068 = vrot.slane %v4058, %v4067
    %v4070 = vunpack.c.l.s4 1966171168
    %v4071 = vunpack.c.0.s8 %v4070
    %v4072 = vlaneseq
    %v4073 = vshrl.u32 %v4072, 7
    %v4074 = vsub.s32 %v4071, %v4073
    %v4075 = vrot.slane %v4059, %v4074
    %v4077 = vunpack.c.l.s4 1966171168
    %v4078 = vunpack.c.0.s8 %v4077
    %v4079 = vlaneseq
    %v4080 = vshrl.u32 %v4079, 7
    %v4081 = vsub.s32 %v4078, %v4080
    %v4082 = vrot.slane %v4060, %v4081
    %v4084 = vunpack.c.l.s4 1966171168
    %v4085 = vunpack.c.0.s8 %v4084
    %v4086 = vlaneseq
    %v4087 = vshrl.u32 %v4086, 7
    %v4088 = vsub.s32 %v4085, %v4087
    %v4089 = vrot.slane %v4061, %v4088
    %v4090 = vcombine.low %v4068, %v4075
    %v4091 = vcombine.low %v4082, %v4089
    %v4093 = vunpack.c.l.s4 1966171168
    %v4094 = vunpack.c.0.s8 %v4093
    %v4095 = vlaneseq
    %v4096 = vshrl.u32 %v4095, 7
    %v4097 = vsub.s32 %v4094, %v4096
    %v4098 = vrot.slane %v4090, %v4097
    %v4100 = vunpack.c.l.s4 1966171168
    %v4101 = vunpack.c.0.s8 %v4100
    %v4102 = vlaneseq
    %v4103 = vshrl.u32 %v4102, 7
    %v4104 = vsub.s32 %v4101, %v4103
    %v4105 = vrot.slane %v4091, %v4104
    %v4106 = vcombine.low %v4098, %v4105
    %v4107 = vcombine.low %v2166, %v2170
    %v4108 = vcombine.low %v2174, %v2178
    %v4109 = vcombine.low %v2182, %v2186
    %v4110 = vcombine.low %v2190, %v2194
    %v4112 = vunpack.c.l.s4 1966171168
    %v4113 = vunpack.c.0.s8 %v4112
    %v4114 = vlaneseq
    %v4115 = vshrl.u32 %v4114, 7
    %v4116 = vsub.s32 %v4113, %v4115
    %v4117 = vrot.slane %v4107, %v4116
    %v4119 = vunpack.c.l.s4 1966171168
    %v4120 = vunpack.c.0.s8 %v4119
    %v4121 = vlaneseq
    %v4122 = vshrl.u32 %v4121, 7
    %v4123 = vsub.s32 %v4120, %v4122
    %v4124 = vrot.slane %v4108, %v4123
    %v4126 = vunpack.c.l.s4 1966171168
    %v4127 = vunpack.c.0.s8 %v4126
    %v4128 = vlaneseq
    %v4129 = vshrl.u32 %v4128, 7
    %v4130 = vsub.s32 %v4127, %v4129
    %v4131 = vrot.slane %v4109, %v4130
    %v4133 = vunpack.c.l.s4 1966171168
    %v4134 = vunpack.c.0.s8 %v4133
    %v4135 = vlaneseq
    %v4136 = vshrl.u32 %v4135, 7
    %v4137 = vsub.s32 %v4134, %v4136
    %v4138 = vrot.slane %v4110, %v4137
    %v4139 = vcombine.low %v4117, %v4124
    %v4140 = vcombine.low %v4131, %v4138
    %v4142 = vunpack.c.l.s4 1966171168
    %v4143 = vunpack.c.0.s8 %v4142
    %v4144 = vlaneseq
    %v4145 = vshrl.u32 %v4144, 7
    %v4146 = vsub.s32 %v4143, %v4145
    %v4147 = vrot.slane %v4139, %v4146
    %v4149 = vunpack.c.l.s4 1966171168
    %v4150 = vunpack.c.0.s8 %v4149
    %v4151 = vlaneseq
    %v4152 = vshrl.u32 %v4151, 7
    %v4153 = vsub.s32 %v4150, %v4152
    %v4154 = vrot.slane %v4140, %v4153
    %v4155 = vcombine.low %v4147, %v4154
    %v4156 = vcombine.low %v2198, %v2202
    %v4157 = vcombine.low %v2206, %v2210
    %v4158 = vcombine.low %v2214, %v2218
    %v4159 = vcombine.low %v2222, %v2226
    %v4161 = vunpack.c.l.s4 1966171168
    %v4162 = vunpack.c.0.s8 %v4161
    %v4163 = vlaneseq
    %v4164 = vshrl.u32 %v4163, 7
    %v4165 = vsub.s32 %v4162, %v4164
    %v4166 = vrot.slane %v4156, %v4165
    %v4168 = vunpack.c.l.s4 1966171168
    %v4169 = vunpack.c.0.s8 %v4168
    %v4170 = vlaneseq
    %v4171 = vshrl.u32 %v4170, 7
    %v4172 = vsub.s32 %v4169, %v4171
    %v4173 = vrot.slane %v4157, %v4172
    %v4175 = vunpack.c.l.s4 1966171168
    %v4176 = vunpack.c.0.s8 %v4175
    %v4177 = vlaneseq
    %v4178 = vshrl.u32 %v4177, 7
    %v4179 = vsub.s32 %v4176, %v4178
    %v4180 = vrot.slane %v4158, %v4179
    %v4182 = vunpack.c.l.s4 1966171168
    %v4183 = vunpack.c.0.s8 %v4182
    %v4184 = vlaneseq
    %v4185 = vshrl.u32 %v4184, 7
    %v4186 = vsub.s32 %v4183, %v4185
    %v4187 = vrot.slane %v4159, %v4186
    %v4188 = vcombine.low %v4166, %v4173
    %v4189 = vcombine.low %v4180, %v4187
    %v4191 = vunpack.c.l.s4 1966171168
    %v4192 = vunpack.c.0.s8 %v4191
    %v4193 = vlaneseq
    %v4194 = vshrl.u32 %v4193, 7
    %v4195 = vsub.s32 %v4192, %v4194
    %v4196 = vrot.slane %v4188, %v4195
    %v4198 = vunpack.c.l.s4 1966171168
    %v4199 = vunpack.c.0.s8 %v4198
    %v4200 = vlaneseq
    %v4201 = vshrl.u32 %v4200, 7
    %v4202 = vsub.s32 %v4199, %v4201
    %v4203 = vrot.slane %v4189, %v4202
    %v4204 = vcombine.low %v4196, %v4203
    %v4205 = vcombine.low %v2230, %v2234
    %v4206 = vcombine.low %v2238, %v2242
    %v4207 = vcombine.low %v2246, %v2250
    %v4208 = vcombine.low %v2254, %v2258
    %v4210 = vunpack.c.l.s4 1966171168
    %v4211 = vunpack.c.0.s8 %v4210
    %v4212 = vlaneseq
    %v4213 = vshrl.u32 %v4212, 7
    %v4214 = vsub.s32 %v4211, %v4213
    %v4215 = vrot.slane %v4205, %v4214
    %v4217 = vunpack.c.l.s4 1966171168
    %v4218 = vunpack.c.0.s8 %v4217
    %v4219 = vlaneseq
    %v4220 = vshrl.u32 %v4219, 7
    %v4221 = vsub.s32 %v4218, %v4220
    %v4222 = vrot.slane %v4206, %v4221
    %v4224 = vunpack.c.l.s4 1966171168
    %v4225 = vunpack.c.0.s8 %v4224
    %v4226 = vlaneseq
    %v4227 = vshrl.u32 %v4226, 7
    %v4228 = vsub.s32 %v4225, %v4227
    %v4229 = vrot.slane %v4207, %v4228
    %v4231 = vunpack.c.l.s4 1966171168
    %v4232 = vunpack.c.0.s8 %v4231
    %v4233 = vlaneseq
    %v4234 = vshrl.u32 %v4233, 7
    %v4235 = vsub.s32 %v4232, %v4234
    %v4236 = vrot.slane %v4208, %v4235
    %v4237 = vcombine.low %v4215, %v4222
    %v4238 = vcombine.low %v4229, %v4236
    %v4240 = vunpack.c.l.s4 1966171168
    %v4241 = vunpack.c.0.s8 %v4240
    %v4242 = vlaneseq
    %v4243 = vshrl.u32 %v4242, 7
    %v4244 = vsub.s32 %v4241, %v4243
    %v4245 = vrot.slane %v4237, %v4244
    %v4247 = vunpack.c.l.s4 1966171168
    %v4248 = vunpack.c.0.s8 %v4247
    %v4249 = vlaneseq
    %v4250 = vshrl.u32 %v4249, 7
    %v4251 = vsub.s32 %v4248, %v4250
    %v4252 = vrot.slane %v4238, %v4251
    %v4253 = vcombine.low %v4245, %v4252
    %v4254 = vcombine.low %v2262, %v2266
    %v4255 = vcombine.low %v2270, %v2274
    %v4256 = vcombine.low %v2278, %v2282
    %v4257 = vcombine.low %v2286, %v2290
    %v4259 = vunpack.c.l.s4 1966171168
    %v4260 = vunpack.c.0.s8 %v4259
    %v4261 = vlaneseq
    %v4262 = vshrl.u32 %v4261, 7
    %v4263 = vsub.s32 %v4260, %v4262
    %v4264 = vrot.slane %v4254, %v4263
    %v4266 = vunpack.c.l.s4 1966171168
    %v4267 = vunpack.c.0.s8 %v4266
    %v4268 = vlaneseq
    %v4269 = vshrl.u32 %v4268, 7
    %v4270 = vsub.s32 %v4267, %v4269
    %v4271 = vrot.slane %v4255, %v4270
    %v4273 = vunpack.c.l.s4 1966171168
    %v4274 = vunpack.c.0.s8 %v4273
    %v4275 = vlaneseq
    %v4276 = vshrl.u32 %v4275, 7
    %v4277 = vsub.s32 %v4274, %v4276
    %v4278 = vrot.slane %v4256, %v4277
    %v4280 = vunpack.c.l.s4 1966171168
    %v4281 = vunpack.c.0.s8 %v4280
    %v4282 = vlaneseq
    %v4283 = vshrl.u32 %v4282, 7
    %v4284 = vsub.s32 %v4281, %v4283
    %v4285 = vrot.slane %v4257, %v4284
    %v4286 = vcombine.low %v4264, %v4271
    %v4287 = vcombine.low %v4278, %v4285
    %v4289 = vunpack.c.l.s4 1966171168
    %v4290 = vunpack.c.0.s8 %v4289
    %v4291 = vlaneseq
    %v4292 = vshrl.u32 %v4291, 7
    %v4293 = vsub.s32 %v4290, %v4292
    %v4294 = vrot.slane %v4286, %v4293
    %v4296 = vunpack.c.l.s4 1966171168
    %v4297 = vunpack.c.0.s8 %v4296
    %v4298 = vlaneseq
    %v4299 = vshrl.u32 %v4298, 7
    %v4300 = vsub.s32 %v4297, %v4299
    %v4301 = vrot.slane %v4287, %v4300
    %v4302 = vcombine.low %v4294, %v4301
    %v4303 = vcombine.low %v2294, %v2298
    %v4304 = vcombine.low %v2302, %v2306
    %v4305 = vcombine.low %v2310, %v2314
    %v4306 = vcombine.low %v2318, %v2322
    %v4308 = vunpack.c.l.s4 1966171168
    %v4309 = vunpack.c.0.s8 %v4308
    %v4310 = vlaneseq
    %v4311 = vshrl.u32 %v4310, 7
    %v4312 = vsub.s32 %v4309, %v4311
    %v4313 = vrot.slane %v4303, %v4312
    %v4315 = vunpack.c.l.s4 1966171168
    %v4316 = vunpack.c.0.s8 %v4315
    %v4317 = vlaneseq
    %v4318 = vshrl.u32 %v4317, 7
    %v4319 = vsub.s32 %v4316, %v4318
    %v4320 = vrot.slane %v4304, %v4319
    %v4322 = vunpack.c.l.s4 1966171168
    %v4323 = vunpack.c.0.s8 %v4322
    %v4324 = vlaneseq
    %v4325 = vshrl.u32 %v4324, 7
    %v4326 = vsub.s32 %v4323, %v4325
    %v4327 = vrot.slane %v4305, %v4326
    %v4329 = vunpack.c.l.s4 1966171168
    %v4330 = vunpack.c.0.s8 %v4329
    %v4331 = vlaneseq
    %v4332 = vshrl.u32 %v4331, 7
    %v4333 = vsub.s32 %v4330, %v4332
    %v4334 = vrot.slane %v4306, %v4333
    %v4335 = vcombine.low %v4313, %v4320
    %v4336 = vcombine.low %v4327, %v4334
    %v4338 = vunpack.c.l.s4 1966171168
    %v4339 = vunpack.c.0.s8 %v4338
    %v4340 = vlaneseq
    %v4341 = vshrl.u32 %v4340, 7
    %v4342 = vsub.s32 %v4339, %v4341
    %v4343 = vrot.slane %v4335, %v4342
    %v4345 = vunpack.c.l.s4 1966171168
    %v4346 = vunpack.c.0.s8 %v4345
    %v4347 = vlaneseq
    %v4348 = vshrl.u32 %v4347, 7
    %v4349 = vsub.s32 %v4346, %v4348
    %v4350 = vrot.slane %v4336, %v4349
    %v4351 = vcombine.low %v4343, %v4350
    %v4352 = vcombine.low %v2326, %v2330
    %v4353 = vcombine.low %v2334, %v2338
    %v4354 = vcombine.low %v2342, %v2346
    %v4355 = vcombine.low %v2350, %v2354
    %v4357 = vunpack.c.l.s4 1966171168
    %v4358 = vunpack.c.0.s8 %v4357
    %v4359 = vlaneseq
    %v4360 = vshrl.u32 %v4359, 7
    %v4361 = vsub.s32 %v4358, %v4360
    %v4362 = vrot.slane %v4352, %v4361
    %v4364 = vunpack.c.l.s4 1966171168
    %v4365 = vunpack.c.0.s8 %v4364
    %v4366 = vlaneseq
    %v4367 = vshrl.u32 %v4366, 7
    %v4368 = vsub.s32 %v4365, %v4367
    %v4369 = vrot.slane %v4353, %v4368
    %v4371 = vunpack.c.l.s4 1966171168
    %v4372 = vunpack.c.0.s8 %v4371
    %v4373 = vlaneseq
    %v4374 = vshrl.u32 %v4373, 7
    %v4375 = vsub.s32 %v4372, %v4374
    %v4376 = vrot.slane %v4354, %v4375
    %v4378 = vunpack.c.l.s4 1966171168
    %v4379 = vunpack.c.0.s8 %v4378
    %v4380 = vlaneseq
    %v4381 = vshrl.u32 %v4380, 7
    %v4382 = vsub.s32 %v4379, %v4381
    %v4383 = vrot.slane %v4355, %v4382
    %v4384 = vcombine.low %v4362, %v4369
    %v4385 = vcombine.low %v4376, %v4383
    %v4387 = vunpack.c.l.s4 1966171168
    %v4388 = vunpack.c.0.s8 %v4387
    %v4389 = vlaneseq
    %v4390 = vshrl.u32 %v4389, 7
    %v4391 = vsub.s32 %v4388, %v4390
    %v4392 = vrot.slane %v4384, %v4391
    %v4394 = vunpack.c.l.s4 1966171168
    %v4395 = vunpack.c.0.s8 %v4394
    %v4396 = vlaneseq
    %v4397 = vshrl.u32 %v4396, 7
    %v4398 = vsub.s32 %v4395, %v4397
    %v4399 = vrot.slane %v4385, %v4398
    %v4400 = vcombine.low %v4392, %v4399
    %v4401 = vcombine.low %v2358, %v2362
    %v4402 = vcombine.low %v2366, %v2370
    %v4403 = vcombine.low %v2374, %v2378
    %v4404 = vcombine.low %v2382, %v2386
    %v4406 = vunpack.c.l.s4 1966171168
    %v4407 = vunpack.c.0.s8 %v4406
    %v4408 = vlaneseq
    %v4409 = vshrl.u32 %v4408, 7
    %v4410 = vsub.s32 %v4407, %v4409
    %v4411 = vrot.slane %v4401, %v4410
    %v4413 = vunpack.c.l.s4 1966171168
    %v4414 = vunpack.c.0.s8 %v4413
    %v4415 = vlaneseq
    %v4416 = vshrl.u32 %v4415, 7
    %v4417 = vsub.s32 %v4414, %v4416
    %v4418 = vrot.slane %v4402, %v4417
    %v4420 = vunpack.c.l.s4 1966171168
    %v4421 = vunpack.c.0.s8 %v4420
    %v4422 = vlaneseq
    %v4423 = vshrl.u32 %v4422, 7
    %v4424 = vsub.s32 %v4421, %v4423
    %v4425 = vrot.slane %v4403, %v4424
    %v4427 = vunpack.c.l.s4 1966171168
    %v4428 = vunpack.c.0.s8 %v4427
    %v4429 = vlaneseq
    %v4430 = vshrl.u32 %v4429, 7
    %v4431 = vsub.s32 %v4428, %v4430
    %v4432 = vrot.slane %v4404, %v4431
    %v4433 = vcombine.low %v4411, %v4418
    %v4434 = vcombine.low %v4425, %v4432
    %v4436 = vunpack.c.l.s4 1966171168
    %v4437 = vunpack.c.0.s8 %v4436
    %v4438 = vlaneseq
    %v4439 = vshrl.u32 %v4438, 7
    %v4440 = vsub.s32 %v4437, %v4439
    %v4441 = vrot.slane %v4433, %v4440
    %v4443 = vunpack.c.l.s4 1966171168
    %v4444 = vunpack.c.0.s8 %v4443
    %v4445 = vlaneseq
    %v4446 = vshrl.u32 %v4445, 7
    %v4447 = vsub.s32 %v4444, %v4446
    %v4448 = vrot.slane %v4434, %v4447
    %v4449 = vcombine.low %v4441, %v4448
    %v4450 = vcombine.low %v2390, %v2394
    %v4451 = vcombine.low %v2398, %v2402
    %v4452 = vcombine.low %v2406, %v2410
    %v4453 = vcombine.low %v2414, %v2418
    %v4455 = vunpack.c.l.s4 1966171168
    %v4456 = vunpack.c.0.s8 %v4455
    %v4457 = vlaneseq
    %v4458 = vshrl.u32 %v4457, 7
    %v4459 = vsub.s32 %v4456, %v4458
    %v4460 = vrot.slane %v4450, %v4459
    %v4462 = vunpack.c.l.s4 1966171168
    %v4463 = vunpack.c.0.s8 %v4462
    %v4464 = vlaneseq
    %v4465 = vshrl.u32 %v4464, 7
    %v4466 = vsub.s32 %v4463, %v4465
    %v4467 = vrot.slane %v4451, %v4466
    %v4469 = vunpack.c.l.s4 1966171168
    %v4470 = vunpack.c.0.s8 %v4469
    %v4471 = vlaneseq
    %v4472 = vshrl.u32 %v4471, 7
    %v4473 = vsub.s32 %v4470, %v4472
    %v4474 = vrot.slane %v4452, %v4473
    %v4476 = vunpack.c.l.s4 1966171168
    %v4477 = vunpack.c.0.s8 %v4476
    %v4478 = vlaneseq
    %v4479 = vshrl.u32 %v4478, 7
    %v4480 = vsub.s32 %v4477, %v4479
    %v4481 = vrot.slane %v4453, %v4480
    %v4482 = vcombine.low %v4460, %v4467
    %v4483 = vcombine.low %v4474, %v4481
    %v4485 = vunpack.c.l.s4 1966171168
    %v4486 = vunpack.c.0.s8 %v4485
    %v4487 = vlaneseq
    %v4488 = vshrl.u32 %v4487, 7
    %v4489 = vsub.s32 %v4486, %v4488
    %v4490 = vrot.slane %v4482, %v4489
    %v4492 = vunpack.c.l.s4 1966171168
    %v4493 = vunpack.c.0.s8 %v4492
    %v4494 = vlaneseq
    %v4495 = vshrl.u32 %v4494, 7
    %v4496 = vsub.s32 %v4493, %v4495
    %v4497 = vrot.slane %v4483, %v4496
    %v4498 = vcombine.low %v4490, %v4497
    %v4499 = vcombine.low %v2422, %v2426
    %v4500 = vcombine.low %v2430, %v2434
    %v4501 = vcombine.low %v2438, %v2442
    %v4502 = vcombine.low %v2446, %v2450
    %v4504 = vunpack.c.l.s4 1966171168
    %v4505 = vunpack.c.0.s8 %v4504
    %v4506 = vlaneseq
    %v4507 = vshrl.u32 %v4506, 7
    %v4508 = vsub.s32 %v4505, %v4507
    %v4509 = vrot.slane %v4499, %v4508
    %v4511 = vunpack.c.l.s4 1966171168
    %v4512 = vunpack.c.0.s8 %v4511
    %v4513 = vlaneseq
    %v4514 = vshrl.u32 %v4513, 7
    %v4515 = vsub.s32 %v4512, %v4514
    %v4516 = vrot.slane %v4500, %v4515
    %v4518 = vunpack.c.l.s4 1966171168
    %v4519 = vunpack.c.0.s8 %v4518
    %v4520 = vlaneseq
    %v4521 = vshrl.u32 %v4520, 7
    %v4522 = vsub.s32 %v4519, %v4521
    %v4523 = vrot.slane %v4501, %v4522
    %v4525 = vunpack.c.l.s4 1966171168
    %v4526 = vunpack.c.0.s8 %v4525
    %v4527 = vlaneseq
    %v4528 = vshrl.u32 %v4527, 7
    %v4529 = vsub.s32 %v4526, %v4528
    %v4530 = vrot.slane %v4502, %v4529
    %v4531 = vcombine.low %v4509, %v4516
    %v4532 = vcombine.low %v4523, %v4530
    %v4534 = vunpack.c.l.s4 1966171168
    %v4535 = vunpack.c.0.s8 %v4534
    %v4536 = vlaneseq
    %v4537 = vshrl.u32 %v4536, 7
    %v4538 = vsub.s32 %v4535, %v4537
    %v4539 = vrot.slane %v4531, %v4538
    %v4541 = vunpack.c.l.s4 1966171168
    %v4542 = vunpack.c.0.s8 %v4541
    %v4543 = vlaneseq
    %v4544 = vshrl.u32 %v4543, 7
    %v4545 = vsub.s32 %v4542, %v4544
    %v4546 = vrot.slane %v4532, %v4545
    %v4547 = vcombine.low %v4539, %v4546
    %v4548 = vcombine.low %v2454, %v2458
    %v4549 = vcombine.low %v2462, %v2466
    %v4550 = vcombine.low %v2470, %v2474
    %v4551 = vcombine.low %v2478, %v2482
    %v4553 = vunpack.c.l.s4 1966171168
    %v4554 = vunpack.c.0.s8 %v4553
    %v4555 = vlaneseq
    %v4556 = vshrl.u32 %v4555, 7
    %v4557 = vsub.s32 %v4554, %v4556
    %v4558 = vrot.slane %v4548, %v4557
    %v4560 = vunpack.c.l.s4 1966171168
    %v4561 = vunpack.c.0.s8 %v4560
    %v4562 = vlaneseq
    %v4563 = vshrl.u32 %v4562, 7
    %v4564 = vsub.s32 %v4561, %v4563
    %v4565 = vrot.slane %v4549, %v4564
    %v4567 = vunpack.c.l.s4 1966171168
    %v4568 = vunpack.c.0.s8 %v4567
    %v4569 = vlaneseq
    %v4570 = vshrl.u32 %v4569, 7
    %v4571 = vsub.s32 %v4568, %v4570
    %v4572 = vrot.slane %v4550, %v4571
    %v4574 = vunpack.c.l.s4 1966171168
    %v4575 = vunpack.c.0.s8 %v4574
    %v4576 = vlaneseq
    %v4577 = vshrl.u32 %v4576, 7
    %v4578 = vsub.s32 %v4575, %v4577
    %v4579 = vrot.slane %v4551, %v4578
    %v4580 = vcombine.low %v4558, %v4565
    %v4581 = vcombine.low %v4572, %v4579
    %v4583 = vunpack.c.l.s4 1966171168
    %v4584 = vunpack.c.0.s8 %v4583
    %v4585 = vlaneseq
    %v4586 = vshrl.u32 %v4585, 7
    %v4587 = vsub.s32 %v4584, %v4586
    %v4588 = vrot.slane %v4580, %v4587
    %v4590 = vunpack.c.l.s4 1966171168
    %v4591 = vunpack.c.0.s8 %v4590
    %v4592 = vlaneseq
    %v4593 = vshrl.u32 %v4592, 7
    %v4594 = vsub.s32 %v4591, %v4593
    %v4595 = vrot.slane %v4581, %v4594
    %v4596 = vcombine.low %v4588, %v4595
    %v4597 = vcombine.low %v2486, %v2490
    %v4598 = vcombine.low %v2494, %v2498
    %v4599 = vcombine.low %v2502, %v2506
    %v4600 = vcombine.low %v2510, %v2514
    %v4602 = vunpack.c.l.s4 1966171168
    %v4603 = vunpack.c.0.s8 %v4602
    %v4604 = vlaneseq
    %v4605 = vshrl.u32 %v4604, 7
    %v4606 = vsub.s32 %v4603, %v4605
    %v4607 = vrot.slane %v4597, %v4606
    %v4609 = vunpack.c.l.s4 1966171168
    %v4610 = vunpack.c.0.s8 %v4609
    %v4611 = vlaneseq
    %v4612 = vshrl.u32 %v4611, 7
    %v4613 = vsub.s32 %v4610, %v4612
    %v4614 = vrot.slane %v4598, %v4613
    %v4616 = vunpack.c.l.s4 1966171168
    %v4617 = vunpack.c.0.s8 %v4616
    %v4618 = vlaneseq
    %v4619 = vshrl.u32 %v4618, 7
    %v4620 = vsub.s32 %v4617, %v4619
    %v4621 = vrot.slane %v4599, %v4620
    %v4623 = vunpack.c.l.s4 1966171168
    %v4624 = vunpack.c.0.s8 %v4623
    %v4625 = vlaneseq
    %v4626 = vshrl.u32 %v4625, 7
    %v4627 = vsub.s32 %v4624, %v4626
    %v4628 = vrot.slane %v4600, %v4627
    %v4629 = vcombine.low %v4607, %v4614
    %v4630 = vcombine.low %v4621, %v4628
    %v4632 = vunpack.c.l.s4 1966171168
    %v4633 = vunpack.c.0.s8 %v4632
    %v4634 = vlaneseq
    %v4635 = vshrl.u32 %v4634, 7
    %v4636 = vsub.s32 %v4633, %v4635
    %v4637 = vrot.slane %v4629, %v4636
    %v4639 = vunpack.c.l.s4 1966171168
    %v4640 = vunpack.c.0.s8 %v4639
    %v4641 = vlaneseq
    %v4642 = vshrl.u32 %v4641, 7
    %v4643 = vsub.s32 %v4640, %v4642
    %v4644 = vrot.slane %v4630, %v4643
    %v4645 = vcombine.low %v4637, %v4644
    %v4646 = vcombine.low %v2518, %v2522
    %v4647 = vcombine.low %v2526, %v2530
    %v4648 = vcombine.low %v2534, %v2538
    %v4649 = vcombine.low %v2542, %v2546
    %v4651 = vunpack.c.l.s4 1966171168
    %v4652 = vunpack.c.0.s8 %v4651
    %v4653 = vlaneseq
    %v4654 = vshrl.u32 %v4653, 7
    %v4655 = vsub.s32 %v4652, %v4654
    %v4656 = vrot.slane %v4646, %v4655
    %v4658 = vunpack.c.l.s4 1966171168
    %v4659 = vunpack.c.0.s8 %v4658
    %v4660 = vlaneseq
    %v4661 = vshrl.u32 %v4660, 7
    %v4662 = vsub.s32 %v4659, %v4661
    %v4663 = vrot.slane %v4647, %v4662
    %v4665 = vunpack.c.l.s4 1966171168
    %v4666 = vunpack.c.0.s8 %v4665
    %v4667 = vlaneseq
    %v4668 = vshrl.u32 %v4667, 7
    %v4669 = vsub.s32 %v4666, %v4668
    %v4670 = vrot.slane %v4648, %v4669
    %v4672 = vunpack.c.l.s4 1966171168
    %v4673 = vunpack.c.0.s8 %v4672
    %v4674 = vlaneseq
    %v4675 = vshrl.u32 %v4674, 7
    %v4676 = vsub.s32 %v4673, %v4675
    %v4677 = vrot.slane %v4649, %v4676
    %v4678 = vcombine.low %v4656, %v4663
    %v4679 = vcombine.low %v4670, %v4677
    %v4681 = vunpack.c.l.s4 1966171168
    %v4682 = vunpack.c.0.s8 %v4681
    %v4683 = vlaneseq
    %v4684 = vshrl.u32 %v4683, 7
    %v4685 = vsub.s32 %v4682, %v4684
    %v4686 = vrot.slane %v4678, %v4685
    %v4688 = vunpack.c.l.s4 1966171168
    %v4689 = vunpack.c.0.s8 %v4688
    %v4690 = vlaneseq
    %v4691 = vshrl.u32 %v4690, 7
    %v4692 = vsub.s32 %v4689, %v4691
    %v4693 = vrot.slane %v4679, %v4692
    %v4694 = vcombine.low %v4686, %v4693
    %v4695 = vcombine.low %v2550, %v2554
    %v4696 = vcombine.low %v2558, %v2562
    %v4697 = vcombine.low %v2566, %v2570
    %v4698 = vcombine.low %v2574, %v2578
    %v4700 = vunpack.c.l.s4 1966171168
    %v4701 = vunpack.c.0.s8 %v4700
    %v4702 = vlaneseq
    %v4703 = vshrl.u32 %v4702, 7
    %v4704 = vsub.s32 %v4701, %v4703
    %v4705 = vrot.slane %v4695, %v4704
    %v4707 = vunpack.c.l.s4 1966171168
    %v4708 = vunpack.c.0.s8 %v4707
    %v4709 = vlaneseq
    %v4710 = vshrl.u32 %v4709, 7
    %v4711 = vsub.s32 %v4708, %v4710
    %v4712 = vrot.slane %v4696, %v4711
    %v4714 = vunpack.c.l.s4 1966171168
    %v4715 = vunpack.c.0.s8 %v4714
    %v4716 = vlaneseq
    %v4717 = vshrl.u32 %v4716, 7
    %v4718 = vsub.s32 %v4715, %v4717
    %v4719 = vrot.slane %v4697, %v4718
    %v4721 = vunpack.c.l.s4 1966171168
    %v4722 = vunpack.c.0.s8 %v4721
    %v4723 = vlaneseq
    %v4724 = vshrl.u32 %v4723, 7
    %v4725 = vsub.s32 %v4722, %v4724
    %v4726 = vrot.slane %v4698, %v4725
    %v4727 = vcombine.low %v4705, %v4712
    %v4728 = vcombine.low %v4719, %v4726
    %v4730 = vunpack.c.l.s4 1966171168
    %v4731 = vunpack.c.0.s8 %v4730
    %v4732 = vlaneseq
    %v4733 = vshrl.u32 %v4732, 7
    %v4734 = vsub.s32 %v4731, %v4733
    %v4735 = vrot.slane %v4727, %v4734
    %v4737 = vunpack.c.l.s4 1966171168
    %v4738 = vunpack.c.0.s8 %v4737
    %v4739 = vlaneseq
    %v4740 = vshrl.u32 %v4739, 7
    %v4741 = vsub.s32 %v4738, %v4740
    %v4742 = vrot.slane %v4728, %v4741
    %v4743 = vcombine.low %v4735, %v4742
    %v4744 = vcombine.low %v2582, %v2586
    %v4745 = vcombine.low %v2590, %v2594
    %v4746 = vcombine.low %v2598, %v2602
    %v4747 = vcombine.low %v2606, %v2610
    %v4749 = vunpack.c.l.s4 1966171168
    %v4750 = vunpack.c.0.s8 %v4749
    %v4751 = vlaneseq
    %v4752 = vshrl.u32 %v4751, 7
    %v4753 = vsub.s32 %v4750, %v4752
    %v4754 = vrot.slane %v4744, %v4753
    %v4756 = vunpack.c.l.s4 1966171168
    %v4757 = vunpack.c.0.s8 %v4756
    %v4758 = vlaneseq
    %v4759 = vshrl.u32 %v4758, 7
    %v4760 = vsub.s32 %v4757, %v4759
    %v4761 = vrot.slane %v4745, %v4760
    %v4763 = vunpack.c.l.s4 1966171168
    %v4764 = vunpack.c.0.s8 %v4763
    %v4765 = vlaneseq
    %v4766 = vshrl.u32 %v4765, 7
    %v4767 = vsub.s32 %v4764, %v4766
    %v4768 = vrot.slane %v4746, %v4767
    %v4770 = vunpack.c.l.s4 1966171168
    %v4771 = vunpack.c.0.s8 %v4770
    %v4772 = vlaneseq
    %v4773 = vshrl.u32 %v4772, 7
    %v4774 = vsub.s32 %v4771, %v4773
    %v4775 = vrot.slane %v4747, %v4774
    %v4776 = vcombine.low %v4754, %v4761
    %v4777 = vcombine.low %v4768, %v4775
    %v4779 = vunpack.c.l.s4 1966171168
    %v4780 = vunpack.c.0.s8 %v4779
    %v4781 = vlaneseq
    %v4782 = vshrl.u32 %v4781, 7
    %v4783 = vsub.s32 %v4780, %v4782
    %v4784 = vrot.slane %v4776, %v4783
    %v4786 = vunpack.c.l.s4 1966171168
    %v4787 = vunpack.c.0.s8 %v4786
    %v4788 = vlaneseq
    %v4789 = vshrl.u32 %v4788, 7
    %v4790 = vsub.s32 %v4787, %v4789
    %v4791 = vrot.slane %v4777, %v4790
    %v4792 = vcombine.low %v4784, %v4791
    %v4793 = vcombine.low %v2614, %v2618
    %v4794 = vcombine.low %v2622, %v2626
    %v4795 = vcombine.low %v2630, %v2634
    %v4796 = vcombine.low %v2638, %v2642
    %v4798 = vunpack.c.l.s4 1966171168
    %v4799 = vunpack.c.0.s8 %v4798
    %v4800 = vlaneseq
    %v4801 = vshrl.u32 %v4800, 7
    %v4802 = vsub.s32 %v4799, %v4801
    %v4803 = vrot.slane %v4793, %v4802
    %v4805 = vunpack.c.l.s4 1966171168
    %v4806 = vunpack.c.0.s8 %v4805
    %v4807 = vlaneseq
    %v4808 = vshrl.u32 %v4807, 7
    %v4809 = vsub.s32 %v4806, %v4808
    %v4810 = vrot.slane %v4794, %v4809
    %v4812 = vunpack.c.l.s4 1966171168
    %v4813 = vunpack.c.0.s8 %v4812
    %v4814 = vlaneseq
    %v4815 = vshrl.u32 %v4814, 7
    %v4816 = vsub.s32 %v4813, %v4815
    %v4817 = vrot.slane %v4795, %v4816
    %v4819 = vunpack.c.l.s4 1966171168
    %v4820 = vunpack.c.0.s8 %v4819
    %v4821 = vlaneseq
    %v4822 = vshrl.u32 %v4821, 7
    %v4823 = vsub.s32 %v4820, %v4822
    %v4824 = vrot.slane %v4796, %v4823
    %v4825 = vcombine.low %v4803, %v4810
    %v4826 = vcombine.low %v4817, %v4824
    %v4828 = vunpack.c.l.s4 1966171168
    %v4829 = vunpack.c.0.s8 %v4828
    %v4830 = vlaneseq
    %v4831 = vshrl.u32 %v4830, 7
    %v4832 = vsub.s32 %v4829, %v4831
    %v4833 = vrot.slane %v4825, %v4832
    %v4835 = vunpack.c.l.s4 1966171168
    %v4836 = vunpack.c.0.s8 %v4835
    %v4837 = vlaneseq
    %v4838 = vshrl.u32 %v4837, 7
    %v4839 = vsub.s32 %v4836, %v4838
    %v4840 = vrot.slane %v4826, %v4839
    %v4841 = vcombine.low %v4833, %v4840
    %v4842 = vcombine.low %v2646, %v2650
    %v4843 = vcombine.low %v2654, %v2658
    %v4844 = vcombine.low %v2662, %v2666
    %v4845 = vcombine.low %v2670, %v2674
    %v4847 = vunpack.c.l.s4 1966171168
    %v4848 = vunpack.c.0.s8 %v4847
    %v4849 = vlaneseq
    %v4850 = vshrl.u32 %v4849, 7
    %v4851 = vsub.s32 %v4848, %v4850
    %v4852 = vrot.slane %v4842, %v4851
    %v4854 = vunpack.c.l.s4 1966171168
    %v4855 = vunpack.c.0.s8 %v4854
    %v4856 = vlaneseq
    %v4857 = vshrl.u32 %v4856, 7
    %v4858 = vsub.s32 %v4855, %v4857
    %v4859 = vrot.slane %v4843, %v4858
    %v4861 = vunpack.c.l.s4 1966171168
    %v4862 = vunpack.c.0.s8 %v4861
    %v4863 = vlaneseq
    %v4864 = vshrl.u32 %v4863, 7
    %v4865 = vsub.s32 %v4862, %v4864
    %v4866 = vrot.slane %v4844, %v4865
    %v4868 = vunpack.c.l.s4 1966171168
    %v4869 = vunpack.c.0.s8 %v4868
    %v4870 = vlaneseq
    %v4871 = vshrl.u32 %v4870, 7
    %v4872 = vsub.s32 %v4869, %v4871
    %v4873 = vrot.slane %v4845, %v4872
    %v4874 = vcombine.low %v4852, %v4859
    %v4875 = vcombine.low %v4866, %v4873
    %v4877 = vunpack.c.l.s4 1966171168
    %v4878 = vunpack.c.0.s8 %v4877
    %v4879 = vlaneseq
    %v4880 = vshrl.u32 %v4879, 7
    %v4881 = vsub.s32 %v4878, %v4880
    %v4882 = vrot.slane %v4874, %v4881
    %v4884 = vunpack.c.l.s4 1966171168
    %v4885 = vunpack.c.0.s8 %v4884
    %v4886 = vlaneseq
    %v4887 = vshrl.u32 %v4886, 7
    %v4888 = vsub.s32 %v4885, %v4887
    %v4889 = vrot.slane %v4875, %v4888
    %v4890 = vcombine.low %v4882, %v4889
    %v4891 = vcombine.low %v2678, %v2682
    %v4892 = vcombine.low %v2686, %v2690
    %v4893 = vcombine.low %v2694, %v2698
    %v4894 = vcombine.low %v2702, %v2706
    %v4896 = vunpack.c.l.s4 1966171168
    %v4897 = vunpack.c.0.s8 %v4896
    %v4898 = vlaneseq
    %v4899 = vshrl.u32 %v4898, 7
    %v4900 = vsub.s32 %v4897, %v4899
    %v4901 = vrot.slane %v4891, %v4900
    %v4903 = vunpack.c.l.s4 1966171168
    %v4904 = vunpack.c.0.s8 %v4903
    %v4905 = vlaneseq
    %v4906 = vshrl.u32 %v4905, 7
    %v4907 = vsub.s32 %v4904, %v4906
    %v4908 = vrot.slane %v4892, %v4907
    %v4910 = vunpack.c.l.s4 1966171168
    %v4911 = vunpack.c.0.s8 %v4910
    %v4912 = vlaneseq
    %v4913 = vshrl.u32 %v4912, 7
    %v4914 = vsub.s32 %v4911, %v4913
    %v4915 = vrot.slane %v4893, %v4914
    %v4917 = vunpack.c.l.s4 1966171168
    %v4918 = vunpack.c.0.s8 %v4917
    %v4919 = vlaneseq
    %v4920 = vshrl.u32 %v4919, 7
    %v4921 = vsub.s32 %v4918, %v4920
    %v4922 = vrot.slane %v4894, %v4921
    %v4923 = vcombine.low %v4901, %v4908
    %v4924 = vcombine.low %v4915, %v4922
    %v4926 = vunpack.c.l.s4 1966171168
    %v4927 = vunpack.c.0.s8 %v4926
    %v4928 = vlaneseq
    %v4929 = vshrl.u32 %v4928, 7
    %v4930 = vsub.s32 %v4927, %v4929
    %v4931 = vrot.slane %v4923, %v4930
    %v4933 = vunpack.c.l.s4 1966171168
    %v4934 = vunpack.c.0.s8 %v4933
    %v4935 = vlaneseq
    %v4936 = vshrl.u32 %v4935, 7
    %v4937 = vsub.s32 %v4934, %v4936
    %v4938 = vrot.slane %v4924, %v4937
    %v4939 = vcombine.low %v4931, %v4938
    %v4940 = vcombine.low %v2710, %v2714
    %v4941 = vcombine.low %v2718, %v2722
    %v4942 = vcombine.low %v2726, %v2730
    %v4943 = vcombine.low %v2734, %v2738
    %v4945 = vunpack.c.l.s4 1966171168
    %v4946 = vunpack.c.0.s8 %v4945
    %v4947 = vlaneseq
    %v4948 = vshrl.u32 %v4947, 7
    %v4949 = vsub.s32 %v4946, %v4948
    %v4950 = vrot.slane %v4940, %v4949
    %v4952 = vunpack.c.l.s4 1966171168
    %v4953 = vunpack.c.0.s8 %v4952
    %v4954 = vlaneseq
    %v4955 = vshrl.u32 %v4954, 7
    %v4956 = vsub.s32 %v4953, %v4955
    %v4957 = vrot.slane %v4941, %v4956
    %v4959 = vunpack.c.l.s4 1966171168
    %v4960 = vunpack.c.0.s8 %v4959
    %v4961 = vlaneseq
    %v4962 = vshrl.u32 %v4961, 7
    %v4963 = vsub.s32 %v4960, %v4962
    %v4964 = vrot.slane %v4942, %v4963
    %v4966 = vunpack.c.l.s4 1966171168
    %v4967 = vunpack.c.0.s8 %v4966
    %v4968 = vlaneseq
    %v4969 = vshrl.u32 %v4968, 7
    %v4970 = vsub.s32 %v4967, %v4969
    %v4971 = vrot.slane %v4943, %v4970
    %v4972 = vcombine.low %v4950, %v4957
    %v4973 = vcombine.low %v4964, %v4971
    %v4975 = vunpack.c.l.s4 1966171168
    %v4976 = vunpack.c.0.s8 %v4975
    %v4977 = vlaneseq
    %v4978 = vshrl.u32 %v4977, 7
    %v4979 = vsub.s32 %v4976, %v4978
    %v4980 = vrot.slane %v4972, %v4979
    %v4982 = vunpack.c.l.s4 1966171168
    %v4983 = vunpack.c.0.s8 %v4982
    %v4984 = vlaneseq
    %v4985 = vshrl.u32 %v4984, 7
    %v4986 = vsub.s32 %v4983, %v4985
    %v4987 = vrot.slane %v4973, %v4986
    %v4988 = vcombine.low %v4980, %v4987
    %v4989 = vcombine.low %v2742, %v2746
    %v4990 = vcombine.low %v2750, %v2754
    %v4991 = vcombine.low %v2758, %v2762
    %v4992 = vcombine.low %v2766, %v2770
    %v4994 = vunpack.c.l.s4 1966171168
    %v4995 = vunpack.c.0.s8 %v4994
    %v4996 = vlaneseq
    %v4997 = vshrl.u32 %v4996, 7
    %v4998 = vsub.s32 %v4995, %v4997
    %v4999 = vrot.slane %v4989, %v4998
    %v5001 = vunpack.c.l.s4 1966171168
    %v5002 = vunpack.c.0.s8 %v5001
    %v5003 = vlaneseq
    %v5004 = vshrl.u32 %v5003, 7
    %v5005 = vsub.s32 %v5002, %v5004
    %v5006 = vrot.slane %v4990, %v5005
    %v5008 = vunpack.c.l.s4 1966171168
    %v5009 = vunpack.c.0.s8 %v5008
    %v5010 = vlaneseq
    %v5011 = vshrl.u32 %v5010, 7
    %v5012 = vsub.s32 %v5009, %v5011
    %v5013 = vrot.slane %v4991, %v5012
    %v5015 = vunpack.c.l.s4 1966171168
    %v5016 = vunpack.c.0.s8 %v5015
    %v5017 = vlaneseq
    %v5018 = vshrl.u32 %v5017, 7
    %v5019 = vsub.s32 %v5016, %v5018
    %v5020 = vrot.slane %v4992, %v5019
    %v5021 = vcombine.low %v4999, %v5006
    %v5022 = vcombine.low %v5013, %v5020
    %v5024 = vunpack.c.l.s4 1966171168
    %v5025 = vunpack.c.0.s8 %v5024
    %v5026 = vlaneseq
    %v5027 = vshrl.u32 %v5026, 7
    %v5028 = vsub.s32 %v5025, %v5027
    %v5029 = vrot.slane %v5021, %v5028
    %v5031 = vunpack.c.l.s4 1966171168
    %v5032 = vunpack.c.0.s8 %v5031
    %v5033 = vlaneseq
    %v5034 = vshrl.u32 %v5033, 7
    %v5035 = vsub.s32 %v5032, %v5034
    %v5036 = vrot.slane %v5022, %v5035
    %v5037 = vcombine.low %v5029, %v5036
    %v5038 = vcombine.low %v2774, %v2778
    %v5039 = vcombine.low %v2782, %v2786
    %v5040 = vcombine.low %v2790, %v2794
    %v5041 = vcombine.low %v2798, %v2802
    %v5043 = vunpack.c.l.s4 1966171168
    %v5044 = vunpack.c.0.s8 %v5043
    %v5045 = vlaneseq
    %v5046 = vshrl.u32 %v5045, 7
    %v5047 = vsub.s32 %v5044, %v5046
    %v5048 = vrot.slane %v5038, %v5047
    %v5050 = vunpack.c.l.s4 1966171168
    %v5051 = vunpack.c.0.s8 %v5050
    %v5052 = vlaneseq
    %v5053 = vshrl.u32 %v5052, 7
    %v5054 = vsub.s32 %v5051, %v5053
    %v5055 = vrot.slane %v5039, %v5054
    %v5057 = vunpack.c.l.s4 1966171168
    %v5058 = vunpack.c.0.s8 %v5057
    %v5059 = vlaneseq
    %v5060 = vshrl.u32 %v5059, 7
    %v5061 = vsub.s32 %v5058, %v5060
    %v5062 = vrot.slane %v5040, %v5061
    %v5064 = vunpack.c.l.s4 1966171168
    %v5065 = vunpack.c.0.s8 %v5064
    %v5066 = vlaneseq
    %v5067 = vshrl.u32 %v5066, 7
    %v5068 = vsub.s32 %v5065, %v5067
    %v5069 = vrot.slane %v5041, %v5068
    %v5070 = vcombine.low %v5048, %v5055
    %v5071 = vcombine.low %v5062, %v5069
    %v5073 = vunpack.c.l.s4 1966171168
    %v5074 = vunpack.c.0.s8 %v5073
    %v5075 = vlaneseq
    %v5076 = vshrl.u32 %v5075, 7
    %v5077 = vsub.s32 %v5074, %v5076
    %v5078 = vrot.slane %v5070, %v5077
    %v5080 = vunpack.c.l.s4 1966171168
    %v5081 = vunpack.c.0.s8 %v5080
    %v5082 = vlaneseq
    %v5083 = vshrl.u32 %v5082, 7
    %v5084 = vsub.s32 %v5081, %v5083
    %v5085 = vrot.slane %v5071, %v5084
    %v5086 = vcombine.low %v5078, %v5085
    %v5087 = vcombine.low %v2806, %v2810
    %v5088 = vcombine.low %v2814, %v2818
    %v5089 = vcombine.low %v2822, %v2826
    %v5090 = vcombine.low %v2830, %v2834
    %v5092 = vunpack.c.l.s4 1966171168
    %v5093 = vunpack.c.0.s8 %v5092
    %v5094 = vlaneseq
    %v5095 = vshrl.u32 %v5094, 7
    %v5096 = vsub.s32 %v5093, %v5095
    %v5097 = vrot.slane %v5087, %v5096
    %v5099 = vunpack.c.l.s4 1966171168
    %v5100 = vunpack.c.0.s8 %v5099
    %v5101 = vlaneseq
    %v5102 = vshrl.u32 %v5101, 7
    %v5103 = vsub.s32 %v5100, %v5102
    %v5104 = vrot.slane %v5088, %v5103
    %v5106 = vunpack.c.l.s4 1966171168
    %v5107 = vunpack.c.0.s8 %v5106
    %v5108 = vlaneseq
    %v5109 = vshrl.u32 %v5108, 7
    %v5110 = vsub.s32 %v5107, %v5109
    %v5111 = vrot.slane %v5089, %v5110
    %v5113 = vunpack.c.l.s4 1966171168
    %v5114 = vunpack.c.0.s8 %v5113
    %v5115 = vlaneseq
    %v5116 = vshrl.u32 %v5115, 7
    %v5117 = vsub.s32 %v5114, %v5116
    %v5118 = vrot.slane %v5090, %v5117
    %v5119 = vcombine.low %v5097, %v5104
    %v5120 = vcombine.low %v5111, %v5118
    %v5122 = vunpack.c.l.s4 1966171168
    %v5123 = vunpack.c.0.s8 %v5122
    %v5124 = vlaneseq
    %v5125 = vshrl.u32 %v5124, 7
    %v5126 = vsub.s32 %v5123, %v5125
    %v5127 = vrot.slane %v5119, %v5126
    %v5129 = vunpack.c.l.s4 1966171168
    %v5130 = vunpack.c.0.s8 %v5129
    %v5131 = vlaneseq
    %v5132 = vshrl.u32 %v5131, 7
    %v5133 = vsub.s32 %v5130, %v5132
    %v5134 = vrot.slane %v5120, %v5133
    %v5135 = vcombine.low %v5127, %v5134
    %v5136 = vcombine.low %v2838, %v2842
    %v5137 = vcombine.low %v2846, %v2850
    %v5138 = vcombine.low %v2854, %v2858
    %v5139 = vcombine.low %v2862, %v2866
    %v5141 = vunpack.c.l.s4 1966171168
    %v5142 = vunpack.c.0.s8 %v5141
    %v5143 = vlaneseq
    %v5144 = vshrl.u32 %v5143, 7
    %v5145 = vsub.s32 %v5142, %v5144
    %v5146 = vrot.slane %v5136, %v5145
    %v5148 = vunpack.c.l.s4 1966171168
    %v5149 = vunpack.c.0.s8 %v5148
    %v5150 = vlaneseq
    %v5151 = vshrl.u32 %v5150, 7
    %v5152 = vsub.s32 %v5149, %v5151
    %v5153 = vrot.slane %v5137, %v5152
    %v5155 = vunpack.c.l.s4 1966171168
    %v5156 = vunpack.c.0.s8 %v5155
    %v5157 = vlaneseq
    %v5158 = vshrl.u32 %v5157, 7
    %v5159 = vsub.s32 %v5156, %v5158
    %v5160 = vrot.slane %v5138, %v5159
    %v5162 = vunpack.c.l.s4 1966171168
    %v5163 = vunpack.c.0.s8 %v5162
    %v5164 = vlaneseq
    %v5165 = vshrl.u32 %v5164, 7
    %v5166 = vsub.s32 %v5163, %v5165
    %v5167 = vrot.slane %v5139, %v5166
    %v5168 = vcombine.low %v5146, %v5153
    %v5169 = vcombine.low %v5160, %v5167
    %v5171 = vunpack.c.l.s4 1966171168
    %v5172 = vunpack.c.0.s8 %v5171
    %v5173 = vlaneseq
    %v5174 = vshrl.u32 %v5173, 7
    %v5175 = vsub.s32 %v5172, %v5174
    %v5176 = vrot.slane %v5168, %v5175
    %v5178 = vunpack.c.l.s4 1966171168
    %v5179 = vunpack.c.0.s8 %v5178
    %v5180 = vlaneseq
    %v5181 = vshrl.u32 %v5180, 7
    %v5182 = vsub.s32 %v5179, %v5181
    %v5183 = vrot.slane %v5169, %v5182
    %v5184 = vcombine.low %v5176, %v5183
    %v5185 = vcombine.low %v2870, %v2874
    %v5186 = vcombine.low %v2878, %v2882
    %v5187 = vcombine.low %v2886, %v2890
    %v5188 = vcombine.low %v2894, %v2898
    %v5190 = vunpack.c.l.s4 1966171168
    %v5191 = vunpack.c.0.s8 %v5190
    %v5192 = vlaneseq
    %v5193 = vshrl.u32 %v5192, 7
    %v5194 = vsub.s32 %v5191, %v5193
    %v5195 = vrot.slane %v5185, %v5194
    %v5197 = vunpack.c.l.s4 1966171168
    %v5198 = vunpack.c.0.s8 %v5197
    %v5199 = vlaneseq
    %v5200 = vshrl.u32 %v5199, 7
    %v5201 = vsub.s32 %v5198, %v5200
    %v5202 = vrot.slane %v5186, %v5201
    %v5204 = vunpack.c.l.s4 1966171168
    %v5205 = vunpack.c.0.s8 %v5204
    %v5206 = vlaneseq
    %v5207 = vshrl.u32 %v5206, 7
    %v5208 = vsub.s32 %v5205, %v5207
    %v5209 = vrot.slane %v5187, %v5208
    %v5211 = vunpack.c.l.s4 1966171168
    %v5212 = vunpack.c.0.s8 %v5211
    %v5213 = vlaneseq
    %v5214 = vshrl.u32 %v5213, 7
    %v5215 = vsub.s32 %v5212, %v5214
    %v5216 = vrot.slane %v5188, %v5215
    %v5217 = vcombine.low %v5195, %v5202
    %v5218 = vcombine.low %v5209, %v5216
    %v5220 = vunpack.c.l.s4 1966171168
    %v5221 = vunpack.c.0.s8 %v5220
    %v5222 = vlaneseq
    %v5223 = vshrl.u32 %v5222, 7
    %v5224 = vsub.s32 %v5221, %v5223
    %v5225 = vrot.slane %v5217, %v5224
    %v5227 = vunpack.c.l.s4 1966171168
    %v5228 = vunpack.c.0.s8 %v5227
    %v5229 = vlaneseq
    %v5230 = vshrl.u32 %v5229, 7
    %v5231 = vsub.s32 %v5228, %v5230
    %v5232 = vrot.slane %v5218, %v5231
    %v5233 = vcombine.low %v5225, %v5232
    %v5234 = vcombine.low %v2902, %v2906
    %v5235 = vcombine.low %v2910, %v2914
    %v5236 = vcombine.low %v2918, %v2922
    %v5237 = vcombine.low %v2926, %v2930
    %v5239 = vunpack.c.l.s4 1966171168
    %v5240 = vunpack.c.0.s8 %v5239
    %v5241 = vlaneseq
    %v5242 = vshrl.u32 %v5241, 7
    %v5243 = vsub.s32 %v5240, %v5242
    %v5244 = vrot.slane %v5234, %v5243
    %v5246 = vunpack.c.l.s4 1966171168
    %v5247 = vunpack.c.0.s8 %v5246
    %v5248 = vlaneseq
    %v5249 = vshrl.u32 %v5248, 7
    %v5250 = vsub.s32 %v5247, %v5249
    %v5251 = vrot.slane %v5235, %v5250
    %v5253 = vunpack.c.l.s4 1966171168
    %v5254 = vunpack.c.0.s8 %v5253
    %v5255 = vlaneseq
    %v5256 = vshrl.u32 %v5255, 7
    %v5257 = vsub.s32 %v5254, %v5256
    %v5258 = vrot.slane %v5236, %v5257
    %v5260 = vunpack.c.l.s4 1966171168
    %v5261 = vunpack.c.0.s8 %v5260
    %v5262 = vlaneseq
    %v5263 = vshrl.u32 %v5262, 7
    %v5264 = vsub.s32 %v5261, %v5263
    %v5265 = vrot.slane %v5237, %v5264
    %v5266 = vcombine.low %v5244, %v5251
    %v5267 = vcombine.low %v5258, %v5265
    %v5269 = vunpack.c.l.s4 1966171168
    %v5270 = vunpack.c.0.s8 %v5269
    %v5271 = vlaneseq
    %v5272 = vshrl.u32 %v5271, 7
    %v5273 = vsub.s32 %v5270, %v5272
    %v5274 = vrot.slane %v5266, %v5273
    %v5276 = vunpack.c.l.s4 1966171168
    %v5277 = vunpack.c.0.s8 %v5276
    %v5278 = vlaneseq
    %v5279 = vshrl.u32 %v5278, 7
    %v5280 = vsub.s32 %v5277, %v5279
    %v5281 = vrot.slane %v5267, %v5280
    %v5282 = vcombine.low %v5274, %v5281
    %5283 = vset.pattern.permute.xlu0 0
    %5284 = vperm.xlu0 %5283, %v2979
    %v5285 = vpop.permute.xlu0 %5284
    %5286 = vset.pattern.permute.xlu0 0
    %5287 = vperm.xlu0 %5286, %v3028
    %v5288 = vpop.permute.xlu0 %5287
    %5289 = vset.pattern.permute.xlu0 0
    %5290 = vperm.xlu0 %5289, %v3077
    %v5291 = vpop.permute.xlu0 %5290
    %5292 = vset.pattern.permute.xlu0 0
    %5293 = vperm.xlu0 %5292, %v3126
    %v5294 = vpop.permute.xlu0 %5293
    %5295 = vset.pattern.permute.xlu0 0
    %5296 = vperm.xlu0 %5295, %v3175
    %v5297 = vpop.permute.xlu0 %5296
    %5298 = vset.pattern.permute.xlu0 0
    %5299 = vperm.xlu0 %5298, %v3224
    %v5300 = vpop.permute.xlu0 %5299
    %5301 = vset.pattern.permute.xlu0 0
    %5302 = vperm.xlu0 %5301, %v3273
    %v5303 = vpop.permute.xlu0 %5302
    %5304 = vset.pattern.permute.xlu0 0
    %5305 = vperm.xlu0 %5304, %v3322
    %v5306 = vpop.permute.xlu0 %5305
    %5307 = vset.pattern.permute.xlu0 0
    %5308 = vperm.xlu0 %5307, %v3371
    %v5309 = vpop.permute.xlu0 %5308
    %5310 = vset.pattern.permute.xlu0 0
    %5311 = vperm.xlu0 %5310, %v3420
    %v5312 = vpop.permute.xlu0 %5311
    %5313 = vset.pattern.permute.xlu0 0
    %5314 = vperm.xlu0 %5313, %v3469
    %v5315 = vpop.permute.xlu0 %5314
    %5316 = vset.pattern.permute.xlu0 0
    %5317 = vperm.xlu0 %5316, %v3518
    %v5318 = vpop.permute.xlu0 %5317
    %5319 = vset.pattern.permute.xlu0 0
    %5320 = vperm.xlu0 %5319, %v3567
    %v5321 = vpop.permute.xlu0 %5320
    %5322 = vset.pattern.permute.xlu0 0
    %5323 = vperm.xlu0 %5322, %v3616
    %v5324 = vpop.permute.xlu0 %5323
    %5325 = vset.pattern.permute.xlu0 0
    %5326 = vperm.xlu0 %5325, %v3665
    %v5327 = vpop.permute.xlu0 %5326
    %5328 = vset.pattern.permute.xlu0 0
    %5329 = vperm.xlu0 %5328, %v3714
    %v5330 = vpop.permute.xlu0 %5329
    %5331 = vset.pattern.permute.xlu0 0
    %5332 = vperm.xlu0 %5331, %v3763
    %v5333 = vpop.permute.xlu0 %5332
    %5334 = vset.pattern.permute.xlu0 0
    %5335 = vperm.xlu0 %5334, %v3812
    %v5336 = vpop.permute.xlu0 %5335
    %5337 = vset.pattern.permute.xlu0 0
    %5338 = vperm.xlu0 %5337, %v3861
    %v5339 = vpop.permute.xlu0 %5338
    %5340 = vset.pattern.permute.xlu0 0
    %5341 = vperm.xlu0 %5340, %v3910
    %v5342 = vpop.permute.xlu0 %5341
    %5343 = vset.pattern.permute.xlu0 0
    %5344 = vperm.xlu0 %5343, %v3959
    %v5345 = vpop.permute.xlu0 %5344
    %5346 = vset.pattern.permute.xlu0 0
    %5347 = vperm.xlu0 %5346, %v4008
    %v5348 = vpop.permute.xlu0 %5347
    %5349 = vset.pattern.permute.xlu0 0
    %5350 = vperm.xlu0 %5349, %v4057
    %v5351 = vpop.permute.xlu0 %5350
    %5352 = vset.pattern.permute.xlu0 0
    %5353 = vperm.xlu0 %5352, %v4106
    %v5354 = vpop.permute.xlu0 %5353
    %5355 = vset.pattern.permute.xlu0 0
    %5356 = vperm.xlu0 %5355, %v4155
    %v5357 = vpop.permute.xlu0 %5356
    %5358 = vset.pattern.permute.xlu0 0
    %5359 = vperm.xlu0 %5358, %v4204
    %v5360 = vpop.permute.xlu0 %5359
    %5361 = vset.pattern.permute.xlu0 0
    %5362 = vperm.xlu0 %5361, %v4253
    %v5363 = vpop.permute.xlu0 %5362
    %5364 = vset.pattern.permute.xlu0 0
    %5365 = vperm.xlu0 %5364, %v4302
    %v5366 = vpop.permute.xlu0 %5365
    %5367 = vset.pattern.permute.xlu0 0
    %5368 = vperm.xlu0 %5367, %v4351
    %v5369 = vpop.permute.xlu0 %5368
    %5370 = vset.pattern.permute.xlu0 0
    %5371 = vperm.xlu0 %5370, %v4400
    %v5372 = vpop.permute.xlu0 %5371
    %5373 = vset.pattern.permute.xlu0 0
    %5374 = vperm.xlu0 %5373, %v4449
    %v5375 = vpop.permute.xlu0 %5374
    %5376 = vset.pattern.permute.xlu0 0
    %5377 = vperm.xlu0 %5376, %v4498
    %v5378 = vpop.permute.xlu0 %5377
    %5379 = vset.pattern.permute.xlu0 0
    %5380 = vperm.xlu0 %5379, %v4547
    %v5381 = vpop.permute.xlu0 %5380
    %5382 = vset.pattern.permute.xlu0 0
    %5383 = vperm.xlu0 %5382, %v4596
    %v5384 = vpop.permute.xlu0 %5383
    %5385 = vset.pattern.permute.xlu0 0
    %5386 = vperm.xlu0 %5385, %v4645
    %v5387 = vpop.permute.xlu0 %5386
    %5388 = vset.pattern.permute.xlu0 0
    %5389 = vperm.xlu0 %5388, %v4694
    %v5390 = vpop.permute.xlu0 %5389
    %5391 = vset.pattern.permute.xlu0 0
    %5392 = vperm.xlu0 %5391, %v4743
    %v5393 = vpop.permute.xlu0 %5392
    %5394 = vset.pattern.permute.xlu0 0
    %5395 = vperm.xlu0 %5394, %v4792
    %v5396 = vpop.permute.xlu0 %5395
    %5397 = vset.pattern.permute.xlu0 0
    %5398 = vperm.xlu0 %5397, %v4841
    %v5399 = vpop.permute.xlu0 %5398
    %5400 = vset.pattern.permute.xlu0 0
    %5401 = vperm.xlu0 %5400, %v4890
    %v5402 = vpop.permute.xlu0 %5401
    %5403 = vset.pattern.permute.xlu0 0
    %5404 = vperm.xlu0 %5403, %v4939
    %v5405 = vpop.permute.xlu0 %5404
    %5406 = vset.pattern.permute.xlu0 0
    %5407 = vperm.xlu0 %5406, %v4988
    %v5408 = vpop.permute.xlu0 %5407
    %5409 = vset.pattern.permute.xlu0 0
    %5410 = vperm.xlu0 %5409, %v5037
    %v5411 = vpop.permute.xlu0 %5410
    %5412 = vset.pattern.permute.xlu0 0
    %5413 = vperm.xlu0 %5412, %v5086
    %v5414 = vpop.permute.xlu0 %5413
    %5415 = vset.pattern.permute.xlu0 0
    %5416 = vperm.xlu0 %5415, %v5135
    %v5417 = vpop.permute.xlu0 %5416
    %5418 = vset.pattern.permute.xlu0 0
    %5419 = vperm.xlu0 %5418, %v5184
    %v5420 = vpop.permute.xlu0 %5419
    %5421 = vset.pattern.permute.xlu0 0
    %5422 = vperm.xlu0 %5421, %v5233
    %v5423 = vpop.permute.xlu0 %5422
    %5424 = vset.pattern.permute.xlu0 0
    %5425 = vperm.xlu0 %5424, %v5282
    %v5426 = vpop.permute.xlu0 %5425
    %v5427 = vlaneseq
    %v5428 = vand.u32 %v5427, 127
    %v5429 = vlaneseq
    %v5430 = vshrl.u32 %v5429, 7
    %v5431 = vsub.s32 %v5428, %v5430
    %v5432 = vrot.slane %v5285, %v5431
    %v5433 = vadd.s32 %v5428, 4294967288
    %v5434 = vlaneseq
    %v5435 = vshrl.u32 %v5434, 7
    %v5436 = vsub.s32 %v5433, %v5435
    %v5437 = vrot.slane %v5288, %v5436
    %vm5438 = vcmask 130112
    %v5439 = vsel %vm5438, %v5437, %v5432
    %v5440 = vadd.s32 %v5428, 4294967280
    %v5441 = vlaneseq
    %v5442 = vshrl.u32 %v5441, 7
    %v5443 = vsub.s32 %v5440, %v5442
    %v5444 = vrot.slane %v5291, %v5443
    %vm5445 = vcmask 195712
    %v5446 = vsel %vm5445, %v5444, %v5439
    %v5447 = vadd.s32 %v5428, 4294967272
    %v5448 = vlaneseq
    %v5449 = vshrl.u32 %v5448, 7
    %v5450 = vsub.s32 %v5447, %v5449
    %v5451 = vrot.slane %v5294, %v5450
    %vm5452 = vcmask 261312
    %v5453 = vsel %vm5452, %v5451, %v5446
    %v5454 = vadd.s32 %v5428, 4294967264
    %v5455 = vlaneseq
    %v5456 = vshrl.u32 %v5455, 7
    %v5457 = vsub.s32 %v5454, %v5456
    %v5458 = vrot.slane %v5297, %v5457
    %vm5459 = vcmask 326912
    %v5460 = vsel %vm5459, %v5458, %v5453
    %v5461 = vadd.s32 %v5428, 4294967256
    %v5462 = vlaneseq
    %v5463 = vshrl.u32 %v5462, 7
    %v5464 = vsub.s32 %v5461, %v5463
    %v5465 = vrot.slane %v5300, %v5464
    %vm5466 = vcmask 392512
    %v5467 = vsel %vm5466, %v5465, %v5460
    %v5468 = vadd.s32 %v5428, 4294967248
    %v5469 = vlaneseq
    %v5470 = vshrl.u32 %v5469, 7
    %v5471 = vsub.s32 %v5468, %v5470
    %v5472 = vrot.slane %v5303, %v5471
    %vm5473 = vcmask 458112
    %v5474 = vsel %vm5473, %v5472, %v5467
    %v5475 = vadd.s32 %v5428, 4294967240
    %v5476 = vlaneseq
    %v5477 = vshrl.u32 %v5476, 7
    %v5478 = vsub.s32 %v5475, %v5477
    %v5479 = vrot.slane %v5306, %v5478
    %vm5480 = vcmask 523712
    %v5481 = vsel %vm5480, %v5479, %v5474
    %v5482 = vadd.s32 %v5428, 4294967232
    %v5483 = vlaneseq
    %v5484 = vshrl.u32 %v5483, 7
    %v5485 = vsub.s32 %v5482, %v5484
    %v5486 = vrot.slane %v5309, %v5485
    %vm5487 = vcmask 589312
    %v5488 = vsel %vm5487, %v5486, %v5481
    %v5489 = vadd.s32 %v5428, 4294967224
    %v5490 = vlaneseq
    %v5491 = vshrl.u32 %v5490, 7
    %v5492 = vsub.s32 %v5489, %v5491
    %v5493 = vrot.slane %v5312, %v5492
    %vm5494 = vcmask 654912
    %v5495 = vsel %vm5494, %v5493, %v5488
    %v5496 = vadd.s32 %v5428, 4294967216
    %v5497 = vlaneseq
    %v5498 = vshrl.u32 %v5497, 7
    %v5499 = vsub.s32 %v5496, %v5498
    %v5500 = vrot.slane %v5315, %v5499
    %vm5501 = vcmask 720512
    %v5502 = vsel %vm5501, %v5500, %v5495
    %v5503 = vadd.s32 %v5428, 4294967208
    %v5504 = vlaneseq
    %v5505 = vshrl.u32 %v5504, 7
    %v5506 = vsub.s32 %v5503, %v5505
    %v5507 = vrot.slane %v5318, %v5506
    %vm5508 = vcmask 786112
    %v5509 = vsel %vm5508, %v5507, %v5502
    %v5510 = vadd.s32 %v5428, 4294967200
    %v5511 = vlaneseq
    %v5512 = vshrl.u32 %v5511, 7
    %v5513 = vsub.s32 %v5510, %v5512
    %v5514 = vrot.slane %v5321, %v5513
    %vm5515 = vcmask 851712
    %v5516 = vsel %vm5515, %v5514, %v5509
    %v5517 = vadd.s32 %v5428, 4294967192
    %v5518 = vlaneseq
    %v5519 = vshrl.u32 %v5518, 7
    %v5520 = vsub.s32 %v5517, %v5519
    %v5521 = vrot.slane %v5324, %v5520
    %vm5522 = vcmask 917312
    %v5523 = vsel %vm5522, %v5521, %v5516
    %v5524 = vadd.s32 %v5428, 4294967184
    %v5525 = vlaneseq
    %v5526 = vshrl.u32 %v5525, 7
    %v5527 = vsub.s32 %v5524, %v5526
    %v5528 = vrot.slane %v5327, %v5527
    %vm5529 = vcmask 982912
    %v5530 = vsel %vm5529, %v5528, %v5523
    %v5531 = vadd.s32 %v5428, 4294967176
    %v5532 = vlaneseq
    %v5533 = vshrl.u32 %v5532, 7
    %v5534 = vsub.s32 %v5531, %v5533
    %v5535 = vrot.slane %v5330, %v5534
    %vm5536 = vcmask 1048512
    %v5537 = vsel %vm5536, %v5535, %v5530
    %v5538 = vlaneseq
    %v5539 = vshrl.u32 %v5538, 7
    %v5540 = vsub.s32 %v5428, %v5539
    %v5541 = vrot.slane %v5333, %v5540
    %v5542 = vlaneseq
    %v5543 = vshrl.u32 %v5542, 7
    %v5544 = vsub.s32 %v5433, %v5543
    %v5545 = vrot.slane %v5336, %v5544
    %v5546 = vsel %vm5438, %v5545, %v5541
    %v5547 = vlaneseq
    %v5548 = vshrl.u32 %v5547, 7
    %v5549 = vsub.s32 %v5440, %v5548
    %v5550 = vrot.slane %v5339, %v5549
    %v5551 = vsel %vm5445, %v5550, %v5546
    %v5552 = vlaneseq
    %v5553 = vshrl.u32 %v5552, 7
    %v5554 = vsub.s32 %v5447, %v5553
    %v5555 = vrot.slane %v5342, %v5554
    %v5556 = vsel %vm5452, %v5555, %v5551
    %v5557 = vlaneseq
    %v5558 = vshrl.u32 %v5557, 7
    %v5559 = vsub.s32 %v5454, %v5558
    %v5560 = vrot.slane %v5345, %v5559
    %v5561 = vsel %vm5459, %v5560, %v5556
    %v5562 = vlaneseq
    %v5563 = vshrl.u32 %v5562, 7
    %v5564 = vsub.s32 %v5461, %v5563
    %v5565 = vrot.slane %v5348, %v5564
    %v5566 = vsel %vm5466, %v5565, %v5561
    %v5567 = vlaneseq
    %v5568 = vshrl.u32 %v5567, 7
    %v5569 = vsub.s32 %v5468, %v5568
    %v5570 = vrot.slane %v5351, %v5569
    %v5571 = vsel %vm5473, %v5570, %v5566
    %v5572 = vlaneseq
    %v5573 = vshrl.u32 %v5572, 7
    %v5574 = vsub.s32 %v5475, %v5573
    %v5575 = vrot.slane %v5354, %v5574
    %v5576 = vsel %vm5480, %v5575, %v5571
    %v5577 = vlaneseq
    %v5578 = vshrl.u32 %v5577, 7
    %v5579 = vsub.s32 %v5482, %v5578
    %v5580 = vrot.slane %v5357, %v5579
    %v5581 = vsel %vm5487, %v5580, %v5576
    %v5582 = vlaneseq
    %v5583 = vshrl.u32 %v5582, 7
    %v5584 = vsub.s32 %v5489, %v5583
    %v5585 = vrot.slane %v5360, %v5584
    %v5586 = vsel %vm5494, %v5585, %v5581
    %v5587 = vlaneseq
    %v5588 = vshrl.u32 %v5587, 7
    %v5589 = vsub.s32 %v5496, %v5588
    %v5590 = vrot.slane %v5363, %v5589
    %v5591 = vsel %vm5501, %v5590, %v5586
    %v5592 = vlaneseq
    %v5593 = vshrl.u32 %v5592, 7
    %v5594 = vsub.s32 %v5503, %v5593
    %v5595 = vrot.slane %v5366, %v5594
    %v5596 = vsel %vm5508, %v5595, %v5591
    %v5597 = vlaneseq
    %v5598 = vshrl.u32 %v5597, 7
    %v5599 = vsub.s32 %v5510, %v5598
    %v5600 = vrot.slane %v5369, %v5599
    %v5601 = vsel %vm5515, %v5600, %v5596
    %v5602 = vlaneseq
    %v5603 = vshrl.u32 %v5602, 7
    %v5604 = vsub.s32 %v5517, %v5603
    %v5605 = vrot.slane %v5372, %v5604
    %v5606 = vsel %vm5522, %v5605, %v5601
    %v5607 = vlaneseq
    %v5608 = vshrl.u32 %v5607, 7
    %v5609 = vsub.s32 %v5524, %v5608
    %v5610 = vrot.slane %v5375, %v5609
    %v5611 = vsel %vm5529, %v5610, %v5606
    %v5612 = vlaneseq
    %v5613 = vshrl.u32 %v5612, 7
    %v5614 = vsub.s32 %v5531, %v5613
    %v5615 = vrot.slane %v5378, %v5614
    %v5616 = vsel %vm5536, %v5615, %v5611
    %v5617 = vlaneseq
    %v5618 = vshrl.u32 %v5617, 7
    %v5619 = vsub.s32 %v5428, %v5618
    %v5620 = vrot.slane %v5381, %v5619
    %v5621 = vlaneseq
    %v5622 = vshrl.u32 %v5621, 7
    %v5623 = vsub.s32 %v5433, %v5622
    %v5624 = vrot.slane %v5384, %v5623
    %v5625 = vsel %vm5438, %v5624, %v5620
    %v5626 = vlaneseq
    %v5627 = vshrl.u32 %v5626, 7
    %v5628 = vsub.s32 %v5440, %v5627
    %v5629 = vrot.slane %v5387, %v5628
    %v5630 = vsel %vm5445, %v5629, %v5625
    %v5631 = vlaneseq
    %v5632 = vshrl.u32 %v5631, 7
    %v5633 = vsub.s32 %v5447, %v5632
    %v5634 = vrot.slane %v5390, %v5633
    %v5635 = vsel %vm5452, %v5634, %v5630
    %v5636 = vlaneseq
    %v5637 = vshrl.u32 %v5636, 7
    %v5638 = vsub.s32 %v5454, %v5637
    %v5639 = vrot.slane %v5393, %v5638
    %v5640 = vsel %vm5459, %v5639, %v5635
    %v5641 = vlaneseq
    %v5642 = vshrl.u32 %v5641, 7
    %v5643 = vsub.s32 %v5461, %v5642
    %v5644 = vrot.slane %v5396, %v5643
    %v5645 = vsel %vm5466, %v5644, %v5640
    %v5646 = vlaneseq
    %v5647 = vshrl.u32 %v5646, 7
    %v5648 = vsub.s32 %v5468, %v5647
    %v5649 = vrot.slane %v5399, %v5648
    %v5650 = vsel %vm5473, %v5649, %v5645
    %v5651 = vlaneseq
    %v5652 = vshrl.u32 %v5651, 7
    %v5653 = vsub.s32 %v5475, %v5652
    %v5654 = vrot.slane %v5402, %v5653
    %v5655 = vsel %vm5480, %v5654, %v5650
    %v5656 = vlaneseq
    %v5657 = vshrl.u32 %v5656, 7
    %v5658 = vsub.s32 %v5482, %v5657
    %v5659 = vrot.slane %v5405, %v5658
    %v5660 = vsel %vm5487, %v5659, %v5655
    %v5661 = vlaneseq
    %v5662 = vshrl.u32 %v5661, 7
    %v5663 = vsub.s32 %v5489, %v5662
    %v5664 = vrot.slane %v5408, %v5663
    %v5665 = vsel %vm5494, %v5664, %v5660
    %v5666 = vlaneseq
    %v5667 = vshrl.u32 %v5666, 7
    %v5668 = vsub.s32 %v5496, %v5667
    %v5669 = vrot.slane %v5411, %v5668
    %v5670 = vsel %vm5501, %v5669, %v5665
    %v5671 = vlaneseq
    %v5672 = vshrl.u32 %v5671, 7
    %v5673 = vsub.s32 %v5503, %v5672
    %v5674 = vrot.slane %v5414, %v5673
    %v5675 = vsel %vm5508, %v5674, %v5670
    %v5676 = vlaneseq
    %v5677 = vshrl.u32 %v5676, 7
    %v5678 = vsub.s32 %v5510, %v5677
    %v5679 = vrot.slane %v5417, %v5678
    %v5680 = vsel %vm5515, %v5679, %v5675
    %v5681 = vlaneseq
    %v5682 = vshrl.u32 %v5681, 7
    %v5683 = vsub.s32 %v5517, %v5682
    %v5684 = vrot.slane %v5420, %v5683
    %v5685 = vsel %vm5522, %v5684, %v5680
    %v5686 = vlaneseq
    %v5687 = vshrl.u32 %v5686, 7
    %v5688 = vsub.s32 %v5524, %v5687
    %v5689 = vrot.slane %v5423, %v5688
    %v5690 = vsel %vm5529, %v5689, %v5685
    %v5691 = vlaneseq
    %v5692 = vshrl.u32 %v5691, 7
    %v5693 = vsub.s32 %v5531, %v5692
    %v5694 = vrot.slane %v5426, %v5693
    %v5695 = vsel %vm5536, %v5694, %v5690
    %v5696 = vcombine.low %v5537, %v5616
    %v5698 = vunpack.c.l.s4 1966171168
    %v5699 = vunpack.c.0.s8 %v5698
    %v5700 = vlaneseq
    %v5701 = vshrl.u32 %v5700, 7
    %v5702 = vsub.s32 %v5699, %v5701
    %v5703 = vrot.slane %v5696, %v5702
    %v5705 = vunpack.c.l.s4 1966171168
    %v5706 = vunpack.c.0.s8 %v5705
    %v5707 = vlaneseq
    %v5708 = vshrl.u32 %v5707, 7
    %v5709 = vsub.s32 %v5706, %v5708
    %v5710 = vrot.slane %v5695, %v5709
    %v5711 = vcombine.low %v5703, %v5710
    %v5713 = vunpack.c.l.s4 1966171168
    %v5714 = vunpack.c.0.s8 %v5713
    %v5715 = vlaneseq
    %v5716 = vshrl.u32 %v5715, 7
    %v5717 = vsub.s32 %v5714, %v5716
    %v5718 = vrot.slane %v5711, %v5717
    %v5720 = vlaneseq
    %vm5721 = vcmp.ge.s32.totalorder %v5720, 0
    %vm5722 = vcmp.lt.s32.totalorder %v5720, 384
    %vm5723 = vmand %vm5721, %vm5722
    %5724 = vst.msk [vmem:[#allocation3] sm:$0x7] %vm5723, %v5718
    // Predicated region
    $region30: #{tpu_custom_call.1} parent=1 // pred_check
      _
    $region31: #{tpu_custom_call.1} parent=1 // pred_check_branch
      %5726 = sbr.rel (0) target = $region33
    $region32: #{tpu_custom_call.1} parent=1 // pred_region
      %s5728 = ssub.s32 48, 48
      %5729 = vsyncadd [#allocation4], %s5728
      %s5731 = sshll.u32 [#allocation3], 4
      %s5732 = int_to_ptr.vmem [resolvable:$true] %s5731
      %5734 = dma.vmem_to_hbm [thread:$0]  %s5732, 48, %s7, [#allocation4]
    $region33: #{tpu_custom_call.1} parent=1 // pred_fallthru
      _
    // Predicated region
    $region34: #{tpu_custom_call.1} parent=1 // pred_check
      _
    $region35: #{tpu_custom_call.1} parent=1 // pred_check_branch
      %5736 = sbr.rel (0) target = $region37
    $region36: #{tpu_custom_call.1} parent=1 // pred_region
      %5737 = dma.done [#allocation4], 48
    $region37: #{tpu_custom_call.1} parent=1 // pred_fallthru
      _
    %5738 = vsyncpa [#allocation4], 1

</llo_original>
